<compile_context>
chip_gen: v7x
topology: tpu7x:2x2x1
jax: 0.10.0
libtpu: 0.0.40
codegen_flags: <defaults>
</compile_context>

<pallas_src>
import functools
import math

import jax
import jax.numpy as jnp
from jax.experimental import pallas as pl
from jax.experimental.pallas import tpu as pltpu


# -----------------------------------------------------------------------------
# Pallas kernel 1: KPConv core for one tile of (sampled) query points.
# -----------------------------------------------------------------------------
def _kpconv_kernel(pos_ref, feat_ref, kpt_ref, kw_ref, out_ref, *,
                   extent, kp_influence, aggregation_mode, mxu_dtype):
    n_kp = kpt_ref.shape[0] // 3        # K
    nh = pos_ref.shape[0] // 3          # H
    tm = pos_ref.shape[1]               # tile_m (lanes)
    cin = feat_ref.shape[0] // nh       # Cin

    px = pos_ref[0 * nh:1 * nh, :]      # [H, TM] f32
    py = pos_ref[1 * nh:2 * nh, :]
    pz = pos_ref[2 * nh:3 * nh, :]

    def sq_dist(k):
        dx = px - kpt_ref[k]
        dy = py - kpt_ref[n_kp + k]
        dz = pz - kpt_ref[2 * n_kp + k]
        return dx * dx + dy * dy + dz * dz

    inv_extent = 1.0 / extent
    sigma = 0.3 * extent
    gauss_c = -1.0 / (2.0 * sigma * sigma)

    def influence(d2):
        if kp_influence == 'constant':
            return jnp.ones_like(d2)
        if kp_influence == 'linear':
            return jnp.maximum(1.0 - jnp.sqrt(d2) * inv_extent, 0.0)
        if kp_influence == 'gaussian':
            return jnp.exp(d2 * gauss_c)
        raise ValueError(kp_influence)

    if aggregation_mode not in ('closest', 'sum'):
        raise ValueError(aggregation_mode)

    closest = None
    if aggregation_mode == 'closest':
        # Running first-occurrence argmin over kernel points, purely elementwise (no XLU reduce).
        min_d = jnp.full((nh, tm), jnp.inf, dtype=jnp.float32)
        closest = jnp.zeros((nh, tm), dtype=jnp.int32)
        for k in range(n_kp):
            d2 = sq_dist(k)
            better = d2 < min_d
            closest = jnp.where(better, k, closest)
            min_d = jnp.where(better, d2, min_d)

    rows = []
    for k in range(n_kp):
        w = influence(sq_dist(k))                               # [H, TM] f32
        if closest is not None:
            w = jnp.where(closest == k, w, 0.0)
        # VPU multiply-accumulate over neighbours: g[c, m] = sum_h w[h, m] * feat[h*Cin + c, m]
        g = jnp.zeros((cin, tm), dtype=jnp.float32)
        for hh in range(nh):
            f_h = feat_ref[hh * cin:(hh + 1) * cin, :].astype(jnp.float32)   # [Cin, TM]
            g = g + w[hh:hh + 1, :] * f_h                       # sublane-broadcast FMA
        rows.append(g)

    # Stack per-kernel-point rows (sublane concat, no VMEM round trip / masked stores),
    # then ONE MXU matmul with deep contraction K*Cin and lane-dense [Cpad, TM] output.
    wf = jnp.concatenate(rows, axis=0).astype(mxu_dtype)        # [K*Cin, TM]
    out = jnp.dot(kw_ref[...], wf, preferred_element_type=jnp.float32)  # [Cpad, TM]
    out_ref[...] = out.astype(out_ref.dtype)


def kpconv_ops_partial(x, idx_neighbour, pos_centered_neighbour, idx_sampler,
                       kernel_points, kernel_weight, extent, kp_influence,
                       aggregation_mode, tile_m=128, use_bf16=True):
    """Returns (conv_T [Cpad, Mpad] f32 with columns >= m all zero, m)."""
    n, cin = x.shape
    h = idx_neighbour.shape[1]
    k_pts = kernel_points.shape[0]
    cout = kernel_weight.shape[-1]
    cdtype = jnp.bfloat16 if use_bf16 else jnp.float32

    # Strided sampling BEFORE the convolution: only the M sampled queries are computed.
    # TODO(synk): scalar-prefetch idx_sampler + in-kernel row selection would avoid these copies.
    if idx_sampler is not None:
        idx_nb = jnp.take(idx_neighbour, idx_sampler, axis=0)            # [M, H]
        pos_nb = jnp.take(pos_centered_neighbour, idx_sampler, axis=0)   # [M, H, 3]
    else:
        idx_nb = idx_neighbour
        pos_nb = pos_centered_neighbour
    m = idx_nb.shape[0]
    m_pad = max(pl.cdiv(m, tile_m), 1) * tile_m

    # Neighbour feature gather (shadow index == n -> zero row), delivered transposed & bf16.
    # TODO(synk): fold this gather into the Pallas kernel (x resident in VMEM, jnp.take on the
    # ref / DMA gather) to avoid materialising the H-expanded feature tensor in HBM.
    x_pad_t = jnp.concatenate([x, jnp.zeros((1, cin), x.dtype)], axis=0).astype(cdtype).T
    feat_t = jnp.take(x_pad_t, idx_nb, axis=1)                            # [Cin, M, H]
    feat_t = jnp.transpose(feat_t, (2, 0, 1)).reshape(h * cin, m)         # row = h*Cin + c
    feat_t = jnp.pad(feat_t, ((0, 0), (0, m_pad - m)))

    pos_t = jnp.transpose(pos_nb.astype(jnp.float32), (2, 1, 0)).reshape(3 * h, m)  # row = d*H + h
    pos_t = jnp.pad(pos_t, ((0, 0), (0, m_pad - m)))

    # Weights [Cpad, K*Cin] (col = k*Cin + c); Cout only needs padding to a multiple of 8 now
    # because it sits on the sublane dim of the output.
    c_pad = pl.cdiv(cout, 8) * 8
    kw_t = jnp.transpose(kernel_weight, (2, 0, 1)).reshape(cout, k_pts * cin)
    kw_t = jnp.pad(kw_t, ((0, c_pad - cout), (0, 0))).astype(cdtype)

    kpt_flat = kernel_points.astype(jnp.float32).T.reshape(-1)            # [3*K], index d*K + k

    kern = functools.partial(_kpconv_kernel, extent=float(extent),
                             kp_influence=kp_influence,
                             aggregation_mode=aggregation_mode,
                             mxu_dtype=cdtype)

    itemsize = jnp.dtype(cdtype).itemsize
    cost = pl.CostEstimate(
        flops=int(m_pad * k_pts * (12 * h + 2 * h * cin + 2 * cin * c_pad)),
        transcendentals=0 if kp_influence == 'constant' else int(m_pad * h * k_pts),
        bytes_accessed=int(3 * h * m_pad * 4 + h * cin * m_pad * itemsize
                           + c_pad * k_pts * cin * itemsize + c_pad * m_pad * 4),
    )

    conv_t = pl.pallas_call(
        kern,
        out_shape=jax.ShapeDtypeStruct((c_pad, m_pad), jnp.float32),
        grid=(m_pad // tile_m,),
        in_specs=[
            pl.BlockSpec((3 * h, tile_m), lambda i: (0, i)),
            pl.BlockSpec((h * cin, tile_m), lambda i: (0, i)),
            pl.BlockSpec(memory_space=pltpu.MemorySpace.SMEM),
            # TODO(synk): pipeline_mode=pl.Buffered(1) would single-buffer this constant slab.
            pl.BlockSpec((c_pad, k_pts * cin), lambda i: (0, 0)),
        ],
        out_specs=pl.BlockSpec((c_pad, tile_m), lambda i: (0, i)),
        compiler_params=pltpu.CompilerParams(
            dimension_semantics=("parallel",),
            vmem_limit_bytes=32 * 1024 * 1024),
        cost_estimate=cost,
    )(pos_t, feat_t, kpt_flat, kw_t)
    return conv_t, m


# -----------------------------------------------------------------------------
# Pallas kernel 2: BatchNorm1d (batch stats folded into scale/bias) + LeakyReLU.
# -----------------------------------------------------------------------------
def _bn_act_kernel(x_ref, scale_ref, bias_ref, out_ref, *, neg_slope):
    y = x_ref[...] * scale_ref[...] + bias_ref[...]          # one FMA / element
    out_ref[...] = jnp.where(y >= 0.0, y, neg_slope * y).astype(out_ref.dtype)


def bn_leakyrelu_t(x_t, scale, bias, neg_slope=0.01, tile_n=512):
    """x_t: [Cpad, Npad] f32 (points on lanes, Npad multiple of 128); scale/bias: [Cpad, 1]."""
    c_pad, n = x_t.shape
    tile_n = min(tile_n, n)
    while n % tile_n:
        tile_n -= 128
    cost = pl.CostEstimate(flops=3 * c_pad * n, transcendentals=0,
                           bytes_accessed=2 * c_pad * n * 4 + 2 * c_pad * 4)
    return pl.pallas_call(
        functools.partial(_bn_act_kernel, neg_slope=float(neg_slope)),
        out_shape=jax.ShapeDtypeStruct((c_pad, n), jnp.float32),
        grid=(n // tile_n,),
        in_specs=[
            pl.BlockSpec((c_pad, tile_n), lambda i: (0, i)),
            pl.BlockSpec((c_pad, 1), lambda i: (0, 0)),
            pl.BlockSpec((c_pad, 1), lambda i: (0, 0)),
        ],
        out_specs=pl.BlockSpec((c_pad, tile_n), lambda i: (0, i)),
        compiler_params=pltpu.CompilerParams(
            dimension_semantics=("parallel",),
            vmem_limit_bytes=32 * 1024 * 1024),
        cost_estimate=cost,
    )(x_t, scale, bias)


# -----------------------------------------------------------------------------
# Module wrapper (parameter setup + forward, mirroring the PyTorch module).
# -----------------------------------------------------------------------------
class PointKernelPartialDense:
    def __init__(self, num_points, in_features, out_features, radius=1.0,
                 kernel_dim=3, fixed='center', ratio=1, KP_influence='linear',
                 aggregation_mode='closest', is_strided=True,
                 shadow_features_fill=0.0, kp_extent=None, density_parameter=None,
                 key=None, use_bf16=True, tile_m=128):
        self.in_features = in_features
        self.out_features = out_features
        self.num_points = num_points
        self.radius = radius
        self.kernel_dim = kernel_dim
        self.fixed = fixed
        self.KP_influence = KP_influence
        self.aggregation_mode = aggregation_mode
        self.is_strided = is_strided
        self.shadow_features_fill = shadow_features_fill
        self.extent = kp_extent * radius / density_parameter
        self.K_radius = 1.5 * self.extent
        self.use_bf16 = use_bf16
        self.tile_m = tile_m

        key = jax.random.PRNGKey(0) if key is None else key
        k_w, k_dir, k_rad = jax.random.split(key, 3)

        # kaiming_uniform_(a=sqrt(5)) on a [K, Cin, Cout] tensor -> bound = 1/sqrt(Cin*Cout)
        bound = 1.0 / math.sqrt(in_features * out_features)
        self.kernel_weight = jax.random.uniform(
            k_w, (num_points, in_features, out_features), jnp.float32, -bound, bound)

        # TODO(synk): kernel_point_optimization_debug (iterative numpy repulsion placement) has
        # no Pallas equivalent; use deterministic points inside the K_radius ball with the first
        # point fixed at the center ('center' mode).
        dirs = jax.random.normal(k_dir, (num_points, kernel_dim), jnp.float32)
        dirs = dirs / jnp.linalg.norm(dirs, axis=-1, keepdims=True)
        radii = jax.random.uniform(k_rad, (num_points, 1), jnp.float32, 0.3, 1.0) * self.K_radius
        kp = dirs * radii
        kp = kp.at[0].set(0.0)
        self.kernel = kp                                   # [K, 3]

        # BatchNorm1d(out_features) default affine params + LeakyReLU default slope
        self.gamma = jnp.ones((out_features,), jnp.float32)
        self.beta = jnp.zeros((out_features,), jnp.float32)
        self.bn_eps = 1e-5
        self.neg_slope = 0.01

    def forward(self, x, idx_neighbour, pos_centered_neighbour, idx_sampler=None):
        if idx_sampler is None and self.is_strided:
            raise Exception('This convolution needs to be provided idx_sampler as it is '
                            'defined as strided')
        conv_t, m = kpconv_ops_partial(
            x, idx_neighbour, pos_centered_neighbour, idx_sampler,
            self.kernel, self.kernel_weight, self.extent,
            self.KP_influence, self.aggregation_mode,
            tile_m=self.tile_m, use_bf16=self.use_bf16)
        c_pad = conv_t.shape[0]

        if not self.is_strided:
            # PyTorch order: append the shadow row after the conv, before BN (included in stats).
            m_eff = m + 1
            if m_eff > conv_t.shape[1]:
                conv_t = jnp.pad(conv_t, ((0, 0), (0, self.tile_m)))
            conv_t = conv_t.at[:, m].set(self.shadow_features_fill)
        else:
            m_eff = m

        # Training-mode batch statistics (biased variance), folded into scale/bias host-side so
        # the Pallas BN kernel is one FMA per element.  Padded columns are all-zero and do not
        # perturb the sums.
        s = jnp.sum(conv_t, axis=1, keepdims=True)                     # [Cpad, 1]
        ss = jnp.sum(conv_t * conv_t, axis=1, keepdims=True)
        mean = s / m_eff
        var = jnp.maximum(ss / m_eff - mean * mean, 0.0)
        invstd = jax.lax.rsqrt(var + self.bn_eps)
        gamma = jnp.pad(self.gamma, (0, c_pad - self.out_features),
                        constant_values=1.0).reshape(c_pad, 1)
        beta = jnp.pad(self.beta, (0, c_pad - self.out_features)).reshape(c_pad, 1)
        scale = gamma * invstd
        bias = beta - mean * scale

        y_t = bn_leakyrelu_t(conv_t, scale, bias, neg_slope=self.neg_slope)
        return y_t[:self.out_features, :m_eff].T

    __call__ = forward


# -----------------------------------------------------------------------------
if __name__ == "__main__":
    N, H, K, CIN, COUT, M = 64, 16, 15, 8, 16, 32

    key = jax.random.PRNGKey(0)
    k_mod, k_x, k_pos, k_idx, k_smp = jax.random.split(key, 5)

    module = PointKernelPartialDense(
        num_points=K, in_features=CIN, out_features=COUT,
        radius=1.0, kernel_dim=3, KP_influence='linear',
        aggregation_mode='closest', is_strided=True,
        kp_extent=1.2, density_parameter=2.0, key=k_mod)

    x = jax.random.normal(k_x, (N, CIN), jnp.float32)
    pos_centered_neighbour = jax.random.uniform(
        k_pos, (N, H, 3), jnp.float32, -module.radius, module.radius)
    # neighbor indices in [0, N]; index N is the shadow (zero-feature) point
    idx_neighbour = jax.random.randint(k_idx, (N, H), 0, N + 1, dtype=jnp.int32)
    idx_sampler = jax.random.permutation(k_smp, N)[:M].astype(jnp.int32)

    out = module(x, idx_neighbour, pos_centered_neighbour, idx_sampler)
    out = jax.block_until_ready(out)
    assert out.shape == (M, COUT), out.shape
    assert jnp.all(jnp.isfinite(out))
    print("KERNEL_OK")
</pallas_src>

<mosaic_0001>
module attributes {stable_mosaic.version = 11 : i64} {
  func.func @_kpconv_kernel(%arg0: i32, %arg1: memref<48x128xf32, #tpu.memory_space<vmem>>, %arg2: memref<128x128xbf16, #tpu.memory_space<vmem>>, %arg3: memref<45xf32, #tpu.memory_space<smem>>, %arg4: memref<16x120xbf16, #tpu.memory_space<vmem>>, %arg5: memref<16x128xf32, #tpu.memory_space<vmem>>) attributes {dimension_semantics = [#tpu.dimension_semantics<parallel>], iteration_bounds = array<i64: 1>, scalar_prefetch = 0 : i64, scratch_operands = 0 : i64, tpu.core_type = #tpu.core_type<tc>, window_params = [{transform_indices = @transform_0, window_bounds = array<i64: 48, 128>}, {transform_indices = @transform_1, window_bounds = array<i64: 128, 128>}, {transform_indices = @transform_2, window_bounds = array<i64: 45>}, {pipeline_mode = #tpu.pipeline_mode<synchronous>, transform_indices = @transform_3, window_bounds = array<i64: 16, 120>}, {transform_indices = @transform_4, window_bounds = array<i64: 16, 128>}]} {
    %c0 = arith.constant 0 : index
    %c0_0 = arith.constant 0 : index
    %0 = vector.load %arg1[%c0, %c0_0] : memref<48x128xf32, #tpu.memory_space<vmem>>, vector<16x128xf32>
    %c16 = arith.constant 16 : index
    %c0_1 = arith.constant 0 : index
    %1 = vector.load %arg1[%c16, %c0_1] : memref<48x128xf32, #tpu.memory_space<vmem>>, vector<16x128xf32>
    %c32 = arith.constant 32 : index
    %c0_2 = arith.constant 0 : index
    %2 = vector.load %arg1[%c32, %c0_2] : memref<48x128xf32, #tpu.memory_space<vmem>>, vector<16x128xf32>
    %cst = arith.constant 0x7F800000 : f32
    %3 = vector.broadcast %cst : f32 to vector<16x128xf32>
    %c0_i32 = arith.constant 0 : i32
    %4 = vector.broadcast %c0_i32 : i32 to vector<16x128xi32>
    %c0_3 = arith.constant 0 : index
    %5 = memref.load %arg3[%c0_3] : memref<45xf32, #tpu.memory_space<smem>>
    %6 = vector.broadcast %5 : f32 to vector<16x128xf32>
    %7 = arith.subf %0, %6 : vector<16x128xf32>
    %c15 = arith.constant 15 : index
    %8 = memref.load %arg3[%c15] : memref<45xf32, #tpu.memory_space<smem>>
    %9 = vector.broadcast %8 : f32 to vector<16x128xf32>
    %10 = arith.subf %1, %9 : vector<16x128xf32>
    %c30 = arith.constant 30 : index
    %11 = memref.load %arg3[%c30] : memref<45xf32, #tpu.memory_space<smem>>
    %12 = vector.broadcast %11 : f32 to vector<16x128xf32>
    %13 = arith.subf %2, %12 : vector<16x128xf32>
    %14 = arith.mulf %7, %7 : vector<16x128xf32>
    %15 = arith.mulf %10, %10 : vector<16x128xf32>
    %16 = arith.addf %14, %15 : vector<16x128xf32>
    %17 = arith.mulf %13, %13 : vector<16x128xf32>
    %18 = arith.addf %16, %17 : vector<16x128xf32>
    %19 = arith.cmpf olt, %18, %3 : vector<16x128xf32>
    %c0_i32_4 = arith.constant 0 : i32
    %20 = vector.broadcast %c0_i32_4 : i32 to vector<16x128xi32>
    %21 = arith.select %19, %20, %4 : vector<16x128xi1>, vector<16x128xi32>
    %22 = arith.select %19, %18, %3 : vector<16x128xi1>, vector<16x128xf32>
    %c1 = arith.constant 1 : index
    %23 = memref.load %arg3[%c1] : memref<45xf32, #tpu.memory_space<smem>>
    %24 = vector.broadcast %23 : f32 to vector<16x128xf32>
    %25 = arith.subf %0, %24 : vector<16x128xf32>
    %c16_5 = arith.constant 16 : index
    %26 = memref.load %arg3[%c16_5] : memref<45xf32, #tpu.memory_space<smem>>
    %27 = vector.broadcast %26 : f32 to vector<16x128xf32>
    %28 = arith.subf %1, %27 : vector<16x128xf32>
    %c31 = arith.constant 31 : index
    %29 = memref.load %arg3[%c31] : memref<45xf32, #tpu.memory_space<smem>>
    %30 = vector.broadcast %29 : f32 to vector<16x128xf32>
    %31 = arith.subf %2, %30 : vector<16x128xf32>
    %32 = arith.mulf %25, %25 : vector<16x128xf32>
    %33 = arith.mulf %28, %28 : vector<16x128xf32>
    %34 = arith.addf %32, %33 : vector<16x128xf32>
    %35 = arith.mulf %31, %31 : vector<16x128xf32>
    %36 = arith.addf %34, %35 : vector<16x128xf32>
    %37 = arith.cmpf olt, %36, %22 : vector<16x128xf32>
    %c1_i32 = arith.constant 1 : i32
    %38 = vector.broadcast %c1_i32 : i32 to vector<16x128xi32>
    %39 = arith.select %37, %38, %21 : vector<16x128xi1>, vector<16x128xi32>
    %40 = arith.select %37, %36, %22 : vector<16x128xi1>, vector<16x128xf32>
    %c2 = arith.constant 2 : index
    %41 = memref.load %arg3[%c2] : memref<45xf32, #tpu.memory_space<smem>>
    %42 = vector.broadcast %41 : f32 to vector<16x128xf32>
    %43 = arith.subf %0, %42 : vector<16x128xf32>
    %c17 = arith.constant 17 : index
    %44 = memref.load %arg3[%c17] : memref<45xf32, #tpu.memory_space<smem>>
    %45 = vector.broadcast %44 : f32 to vector<16x128xf32>
    %46 = arith.subf %1, %45 : vector<16x128xf32>
    %c32_6 = arith.constant 32 : index
    %47 = memref.load %arg3[%c32_6] : memref<45xf32, #tpu.memory_space<smem>>
    %48 = vector.broadcast %47 : f32 to vector<16x128xf32>
    %49 = arith.subf %2, %48 : vector<16x128xf32>
    %50 = arith.mulf %43, %43 : vector<16x128xf32>
    %51 = arith.mulf %46, %46 : vector<16x128xf32>
    %52 = arith.addf %50, %51 : vector<16x128xf32>
    %53 = arith.mulf %49, %49 : vector<16x128xf32>
    %54 = arith.addf %52, %53 : vector<16x128xf32>
    %55 = arith.cmpf olt, %54, %40 : vector<16x128xf32>
    %c2_i32 = arith.constant 2 : i32
    %56 = vector.broadcast %c2_i32 : i32 to vector<16x128xi32>
    %57 = arith.select %55, %56, %39 : vector<16x128xi1>, vector<16x128xi32>
    %58 = arith.select %55, %54, %40 : vector<16x128xi1>, vector<16x128xf32>
    %c3 = arith.constant 3 : index
    %59 = memref.load %arg3[%c3] : memref<45xf32, #tpu.memory_space<smem>>
    %60 = vector.broadcast %59 : f32 to vector<16x128xf32>
    %61 = arith.subf %0, %60 : vector<16x128xf32>
    %c18 = arith.constant 18 : index
    %62 = memref.load %arg3[%c18] : memref<45xf32, #tpu.memory_space<smem>>
    %63 = vector.broadcast %62 : f32 to vector<16x128xf32>
    %64 = arith.subf %1, %63 : vector<16x128xf32>
    %c33 = arith.constant 33 : index
    %65 = memref.load %arg3[%c33] : memref<45xf32, #tpu.memory_space<smem>>
    %66 = vector.broadcast %65 : f32 to vector<16x128xf32>
    %67 = arith.subf %2, %66 : vector<16x128xf32>
    %68 = arith.mulf %61, %61 : vector<16x128xf32>
    %69 = arith.mulf %64, %64 : vector<16x128xf32>
    %70 = arith.addf %68, %69 : vector<16x128xf32>
    %71 = arith.mulf %67, %67 : vector<16x128xf32>
    %72 = arith.addf %70, %71 : vector<16x128xf32>
    %73 = arith.cmpf olt, %72, %58 : vector<16x128xf32>
    %c3_i32 = arith.constant 3 : i32
    %74 = vector.broadcast %c3_i32 : i32 to vector<16x128xi32>
    %75 = arith.select %73, %74, %57 : vector<16x128xi1>, vector<16x128xi32>
    %76 = arith.select %73, %72, %58 : vector<16x128xi1>, vector<16x128xf32>
    %c4 = arith.constant 4 : index
    %77 = memref.load %arg3[%c4] : memref<45xf32, #tpu.memory_space<smem>>
    %78 = vector.broadcast %77 : f32 to vector<16x128xf32>
    %79 = arith.subf %0, %78 : vector<16x128xf32>
    %c19 = arith.constant 19 : index
    %80 = memref.load %arg3[%c19] : memref<45xf32, #tpu.memory_space<smem>>
    %81 = vector.broadcast %80 : f32 to vector<16x128xf32>
    %82 = arith.subf %1, %81 : vector<16x128xf32>
    %c34 = arith.constant 34 : index
    %83 = memref.load %arg3[%c34] : memref<45xf32, #tpu.memory_space<smem>>
    %84 = vector.broadcast %83 : f32 to vector<16x128xf32>
    %85 = arith.subf %2, %84 : vector<16x128xf32>
    %86 = arith.mulf %79, %79 : vector<16x128xf32>
    %87 = arith.mulf %82, %82 : vector<16x128xf32>
    %88 = arith.addf %86, %87 : vector<16x128xf32>
    %89 = arith.mulf %85, %85 : vector<16x128xf32>
    %90 = arith.addf %88, %89 : vector<16x128xf32>
    %91 = arith.cmpf olt, %90, %76 : vector<16x128xf32>
    %c4_i32 = arith.constant 4 : i32
    %92 = vector.broadcast %c4_i32 : i32 to vector<16x128xi32>
    %93 = arith.select %91, %92, %75 : vector<16x128xi1>, vector<16x128xi32>
    %94 = arith.select %91, %90, %76 : vector<16x128xi1>, vector<16x128xf32>
    %c5 = arith.constant 5 : index
    %95 = memref.load %arg3[%c5] : memref<45xf32, #tpu.memory_space<smem>>
    %96 = vector.broadcast %95 : f32 to vector<16x128xf32>
    %97 = arith.subf %0, %96 : vector<16x128xf32>
    %c20 = arith.constant 20 : index
    %98 = memref.load %arg3[%c20] : memref<45xf32, #tpu.memory_space<smem>>
    %99 = vector.broadcast %98 : f32 to vector<16x128xf32>
    %100 = arith.subf %1, %99 : vector<16x128xf32>
    %c35 = arith.constant 35 : index
    %101 = memref.load %arg3[%c35] : memref<45xf32, #tpu.memory_space<smem>>
    %102 = vector.broadcast %101 : f32 to vector<16x128xf32>
    %103 = arith.subf %2, %102 : vector<16x128xf32>
    %104 = arith.mulf %97, %97 : vector<16x128xf32>
    %105 = arith.mulf %100, %100 : vector<16x128xf32>
    %106 = arith.addf %104, %105 : vector<16x128xf32>
    %107 = arith.mulf %103, %103 : vector<16x128xf32>
    %108 = arith.addf %106, %107 : vector<16x128xf32>
    %109 = arith.cmpf olt, %108, %94 : vector<16x128xf32>
    %c5_i32 = arith.constant 5 : i32
    %110 = vector.broadcast %c5_i32 : i32 to vector<16x128xi32>
    %111 = arith.select %109, %110, %93 : vector<16x128xi1>, vector<16x128xi32>
    %112 = arith.select %109, %108, %94 : vector<16x128xi1>, vector<16x128xf32>
    %c6 = arith.constant 6 : index
    %113 = memref.load %arg3[%c6] : memref<45xf32, #tpu.memory_space<smem>>
    %114 = vector.broadcast %113 : f32 to vector<16x128xf32>
    %115 = arith.subf %0, %114 : vector<16x128xf32>
    %c21 = arith.constant 21 : index
    %116 = memref.load %arg3[%c21] : memref<45xf32, #tpu.memory_space<smem>>
    %117 = vector.broadcast %116 : f32 to vector<16x128xf32>
    %118 = arith.subf %1, %117 : vector<16x128xf32>
    %c36 = arith.constant 36 : index
    %119 = memref.load %arg3[%c36] : memref<45xf32, #tpu.memory_space<smem>>
    %120 = vector.broadcast %119 : f32 to vector<16x128xf32>
    %121 = arith.subf %2, %120 : vector<16x128xf32>
    %122 = arith.mulf %115, %115 : vector<16x128xf32>
    %123 = arith.mulf %118, %118 : vector<16x128xf32>
    %124 = arith.addf %122, %123 : vector<16x128xf32>
    %125 = arith.mulf %121, %121 : vector<16x128xf32>
    %126 = arith.addf %124, %125 : vector<16x128xf32>
    %127 = arith.cmpf olt, %126, %112 : vector<16x128xf32>
    %c6_i32 = arith.constant 6 : i32
    %128 = vector.broadcast %c6_i32 : i32 to vector<16x128xi32>
    %129 = arith.select %127, %128, %111 : vector<16x128xi1>, vector<16x128xi32>
    %130 = arith.select %127, %126, %112 : vector<16x128xi1>, vector<16x128xf32>
    %c7 = arith.constant 7 : index
    %131 = memref.load %arg3[%c7] : memref<45xf32, #tpu.memory_space<smem>>
    %132 = vector.broadcast %131 : f32 to vector<16x128xf32>
    %133 = arith.subf %0, %132 : vector<16x128xf32>
    %c22 = arith.constant 22 : index
    %134 = memref.load %arg3[%c22] : memref<45xf32, #tpu.memory_space<smem>>
    %135 = vector.broadcast %134 : f32 to vector<16x128xf32>
    %136 = arith.subf %1, %135 : vector<16x128xf32>
    %c37 = arith.constant 37 : index
    %137 = memref.load %arg3[%c37] : memref<45xf32, #tpu.memory_space<smem>>
    %138 = vector.broadcast %137 : f32 to vector<16x128xf32>
    %139 = arith.subf %2, %138 : vector<16x128xf32>
    %140 = arith.mulf %133, %133 : vector<16x128xf32>
    %141 = arith.mulf %136, %136 : vector<16x128xf32>
    %142 = arith.addf %140, %141 : vector<16x128xf32>
    %143 = arith.mulf %139, %139 : vector<16x128xf32>
    %144 = arith.addf %142, %143 : vector<16x128xf32>
    %145 = arith.cmpf olt, %144, %130 : vector<16x128xf32>
    %c7_i32 = arith.constant 7 : i32
    %146 = vector.broadcast %c7_i32 : i32 to vector<16x128xi32>
    %147 = arith.select %145, %146, %129 : vector<16x128xi1>, vector<16x128xi32>
    %148 = arith.select %145, %144, %130 : vector<16x128xi1>, vector<16x128xf32>
    %c8 = arith.constant 8 : index
    %149 = memref.load %arg3[%c8] : memref<45xf32, #tpu.memory_space<smem>>
    %150 = vector.broadcast %149 : f32 to vector<16x128xf32>
    %151 = arith.subf %0, %150 : vector<16x128xf32>
    %c23 = arith.constant 23 : index
    %152 = memref.load %arg3[%c23] : memref<45xf32, #tpu.memory_space<smem>>
    %153 = vector.broadcast %152 : f32 to vector<16x128xf32>
    %154 = arith.subf %1, %153 : vector<16x128xf32>
    %c38 = arith.constant 38 : index
    %155 = memref.load %arg3[%c38] : memref<45xf32, #tpu.memory_space<smem>>
    %156 = vector.broadcast %155 : f32 to vector<16x128xf32>
    %157 = arith.subf %2, %156 : vector<16x128xf32>
    %158 = arith.mulf %151, %151 : vector<16x128xf32>
    %159 = arith.mulf %154, %154 : vector<16x128xf32>
    %160 = arith.addf %158, %159 : vector<16x128xf32>
    %161 = arith.mulf %157, %157 : vector<16x128xf32>
    %162 = arith.addf %160, %161 : vector<16x128xf32>
    %163 = arith.cmpf olt, %162, %148 : vector<16x128xf32>
    %c8_i32 = arith.constant 8 : i32
    %164 = vector.broadcast %c8_i32 : i32 to vector<16x128xi32>
    %165 = arith.select %163, %164, %147 : vector<16x128xi1>, vector<16x128xi32>
    %166 = arith.select %163, %162, %148 : vector<16x128xi1>, vector<16x128xf32>
    %c9 = arith.constant 9 : index
    %167 = memref.load %arg3[%c9] : memref<45xf32, #tpu.memory_space<smem>>
    %168 = vector.broadcast %167 : f32 to vector<16x128xf32>
    %169 = arith.subf %0, %168 : vector<16x128xf32>
    %c24 = arith.constant 24 : index
    %170 = memref.load %arg3[%c24] : memref<45xf32, #tpu.memory_space<smem>>
    %171 = vector.broadcast %170 : f32 to vector<16x128xf32>
    %172 = arith.subf %1, %171 : vector<16x128xf32>
    %c39 = arith.constant 39 : index
    %173 = memref.load %arg3[%c39] : memref<45xf32, #tpu.memory_space<smem>>
    %174 = vector.broadcast %173 : f32 to vector<16x128xf32>
    %175 = arith.subf %2, %174 : vector<16x128xf32>
    %176 = arith.mulf %169, %169 : vector<16x128xf32>
    %177 = arith.mulf %172, %172 : vector<16x128xf32>
    %178 = arith.addf %176, %177 : vector<16x128xf32>
    %179 = arith.mulf %175, %175 : vector<16x128xf32>
    %180 = arith.addf %178, %179 : vector<16x128xf32>
    %181 = arith.cmpf olt, %180, %166 : vector<16x128xf32>
    %c9_i32 = arith.constant 9 : i32
    %182 = vector.broadcast %c9_i32 : i32 to vector<16x128xi32>
    %183 = arith.select %181, %182, %165 : vector<16x128xi1>, vector<16x128xi32>
    %184 = arith.select %181, %180, %166 : vector<16x128xi1>, vector<16x128xf32>
    %c10 = arith.constant 10 : index
    %185 = memref.load %arg3[%c10] : memref<45xf32, #tpu.memory_space<smem>>
    %186 = vector.broadcast %185 : f32 to vector<16x128xf32>
    %187 = arith.subf %0, %186 : vector<16x128xf32>
    %c25 = arith.constant 25 : index
    %188 = memref.load %arg3[%c25] : memref<45xf32, #tpu.memory_space<smem>>
    %189 = vector.broadcast %188 : f32 to vector<16x128xf32>
    %190 = arith.subf %1, %189 : vector<16x128xf32>
    %c40 = arith.constant 40 : index
    %191 = memref.load %arg3[%c40] : memref<45xf32, #tpu.memory_space<smem>>
    %192 = vector.broadcast %191 : f32 to vector<16x128xf32>
    %193 = arith.subf %2, %192 : vector<16x128xf32>
    %194 = arith.mulf %187, %187 : vector<16x128xf32>
    %195 = arith.mulf %190, %190 : vector<16x128xf32>
    %196 = arith.addf %194, %195 : vector<16x128xf32>
    %197 = arith.mulf %193, %193 : vector<16x128xf32>
    %198 = arith.addf %196, %197 : vector<16x128xf32>
    %199 = arith.cmpf olt, %198, %184 : vector<16x128xf32>
    %c10_i32 = arith.constant 10 : i32
    %200 = vector.broadcast %c10_i32 : i32 to vector<16x128xi32>
    %201 = arith.select %199, %200, %183 : vector<16x128xi1>, vector<16x128xi32>
    %202 = arith.select %199, %198, %184 : vector<16x128xi1>, vector<16x128xf32>
    %c11 = arith.constant 11 : index
    %203 = memref.load %arg3[%c11] : memref<45xf32, #tpu.memory_space<smem>>
    %204 = vector.broadcast %203 : f32 to vector<16x128xf32>
    %205 = arith.subf %0, %204 : vector<16x128xf32>
    %c26 = arith.constant 26 : index
    %206 = memref.load %arg3[%c26] : memref<45xf32, #tpu.memory_space<smem>>
    %207 = vector.broadcast %206 : f32 to vector<16x128xf32>
    %208 = arith.subf %1, %207 : vector<16x128xf32>
    %c41 = arith.constant 41 : index
    %209 = memref.load %arg3[%c41] : memref<45xf32, #tpu.memory_space<smem>>
    %210 = vector.broadcast %209 : f32 to vector<16x128xf32>
    %211 = arith.subf %2, %210 : vector<16x128xf32>
    %212 = arith.mulf %205, %205 : vector<16x128xf32>
    %213 = arith.mulf %208, %208 : vector<16x128xf32>
    %214 = arith.addf %212, %213 : vector<16x128xf32>
    %215 = arith.mulf %211, %211 : vector<16x128xf32>
    %216 = arith.addf %214, %215 : vector<16x128xf32>
    %217 = arith.cmpf olt, %216, %202 : vector<16x128xf32>
    %c11_i32 = arith.constant 11 : i32
    %218 = vector.broadcast %c11_i32 : i32 to vector<16x128xi32>
    %219 = arith.select %217, %218, %201 : vector<16x128xi1>, vector<16x128xi32>
    %220 = arith.select %217, %216, %202 : vector<16x128xi1>, vector<16x128xf32>
    %c12 = arith.constant 12 : index
    %221 = memref.load %arg3[%c12] : memref<45xf32, #tpu.memory_space<smem>>
    %222 = vector.broadcast %221 : f32 to vector<16x128xf32>
    %223 = arith.subf %0, %222 : vector<16x128xf32>
    %c27 = arith.constant 27 : index
    %224 = memref.load %arg3[%c27] : memref<45xf32, #tpu.memory_space<smem>>
    %225 = vector.broadcast %224 : f32 to vector<16x128xf32>
    %226 = arith.subf %1, %225 : vector<16x128xf32>
    %c42 = arith.constant 42 : index
    %227 = memref.load %arg3[%c42] : memref<45xf32, #tpu.memory_space<smem>>
    %228 = vector.broadcast %227 : f32 to vector<16x128xf32>
    %229 = arith.subf %2, %228 : vector<16x128xf32>
    %230 = arith.mulf %223, %223 : vector<16x128xf32>
    %231 = arith.mulf %226, %226 : vector<16x128xf32>
    %232 = arith.addf %230, %231 : vector<16x128xf32>
    %233 = arith.mulf %229, %229 : vector<16x128xf32>
    %234 = arith.addf %232, %233 : vector<16x128xf32>
    %235 = arith.cmpf olt, %234, %220 : vector<16x128xf32>
    %c12_i32 = arith.constant 12 : i32
    %236 = vector.broadcast %c12_i32 : i32 to vector<16x128xi32>
    %237 = arith.select %235, %236, %219 : vector<16x128xi1>, vector<16x128xi32>
    %238 = arith.select %235, %234, %220 : vector<16x128xi1>, vector<16x128xf32>
    %c13 = arith.constant 13 : index
    %239 = memref.load %arg3[%c13] : memref<45xf32, #tpu.memory_space<smem>>
    %240 = vector.broadcast %239 : f32 to vector<16x128xf32>
    %241 = arith.subf %0, %240 : vector<16x128xf32>
    %c28 = arith.constant 28 : index
    %242 = memref.load %arg3[%c28] : memref<45xf32, #tpu.memory_space<smem>>
    %243 = vector.broadcast %242 : f32 to vector<16x128xf32>
    %244 = arith.subf %1, %243 : vector<16x128xf32>
    %c43 = arith.constant 43 : index
    %245 = memref.load %arg3[%c43] : memref<45xf32, #tpu.memory_space<smem>>
    %246 = vector.broadcast %245 : f32 to vector<16x128xf32>
    %247 = arith.subf %2, %246 : vector<16x128xf32>
    %248 = arith.mulf %241, %241 : vector<16x128xf32>
    %249 = arith.mulf %244, %244 : vector<16x128xf32>
    %250 = arith.addf %248, %249 : vector<16x128xf32>
    %251 = arith.mulf %247, %247 : vector<16x128xf32>
    %252 = arith.addf %250, %251 : vector<16x128xf32>
    %253 = arith.cmpf olt, %252, %238 : vector<16x128xf32>
    %c13_i32 = arith.constant 13 : i32
    %254 = vector.broadcast %c13_i32 : i32 to vector<16x128xi32>
    %255 = arith.select %253, %254, %237 : vector<16x128xi1>, vector<16x128xi32>
    %256 = arith.select %253, %252, %238 : vector<16x128xi1>, vector<16x128xf32>
    %c14 = arith.constant 14 : index
    %257 = memref.load %arg3[%c14] : memref<45xf32, #tpu.memory_space<smem>>
    %258 = vector.broadcast %257 : f32 to vector<16x128xf32>
    %259 = arith.subf %0, %258 : vector<16x128xf32>
    %c29 = arith.constant 29 : index
    %260 = memref.load %arg3[%c29] : memref<45xf32, #tpu.memory_space<smem>>
    %261 = vector.broadcast %260 : f32 to vector<16x128xf32>
    %262 = arith.subf %1, %261 : vector<16x128xf32>
    %c44 = arith.constant 44 : index
    %263 = memref.load %arg3[%c44] : memref<45xf32, #tpu.memory_space<smem>>
    %264 = vector.broadcast %263 : f32 to vector<16x128xf32>
    %265 = arith.subf %2, %264 : vector<16x128xf32>
    %266 = arith.mulf %259, %259 : vector<16x128xf32>
    %267 = arith.mulf %262, %262 : vector<16x128xf32>
    %268 = arith.addf %266, %267 : vector<16x128xf32>
    %269 = arith.mulf %265, %265 : vector<16x128xf32>
    %270 = arith.addf %268, %269 : vector<16x128xf32>
    %271 = arith.cmpf olt, %270, %256 : vector<16x128xf32>
    %c14_i32 = arith.constant 14 : i32
    %272 = vector.broadcast %c14_i32 : i32 to vector<16x128xi32>
    %273 = arith.select %271, %272, %255 : vector<16x128xi1>, vector<16x128xi32>
    %c0_7 = arith.constant 0 : index
    %274 = memref.load %arg3[%c0_7] : memref<45xf32, #tpu.memory_space<smem>>
    %275 = vector.broadcast %274 : f32 to vector<16x128xf32>
    %276 = arith.subf %0, %275 : vector<16x128xf32>
    %c15_8 = arith.constant 15 : index
    %277 = memref.load %arg3[%c15_8] : memref<45xf32, #tpu.memory_space<smem>>
    %278 = vector.broadcast %277 : f32 to vector<16x128xf32>
    %279 = arith.subf %1, %278 : vector<16x128xf32>
    %c30_9 = arith.constant 30 : index
    %280 = memref.load %arg3[%c30_9] : memref<45xf32, #tpu.memory_space<smem>>
    %281 = vector.broadcast %280 : f32 to vector<16x128xf32>
    %282 = arith.subf %2, %281 : vector<16x128xf32>
    %283 = arith.mulf %276, %276 : vector<16x128xf32>
    %284 = arith.mulf %279, %279 : vector<16x128xf32>
    %285 = arith.addf %283, %284 : vector<16x128xf32>
    %286 = arith.mulf %282, %282 : vector<16x128xf32>
    %287 = arith.addf %285, %286 : vector<16x128xf32>
    %288 = math.sqrt %287 : vector<16x128xf32>
    %cst_10 = arith.constant 1.66666663 : f32
    %289 = vector.broadcast %cst_10 : f32 to vector<16x128xf32>
    %290 = arith.mulf %288, %289 : vector<16x128xf32>
    %cst_11 = arith.constant 1.000000e+00 : f32
    %291 = vector.broadcast %cst_11 : f32 to vector<16x128xf32>
    %292 = arith.subf %291, %290 : vector<16x128xf32>
    %cst_12 = arith.constant 0.000000e+00 : f32
    %293 = vector.broadcast %cst_12 : f32 to vector<16x128xf32>
    %294 = arith.maximumf %292, %293 : vector<16x128xf32>
    %c0_i32_13 = arith.constant 0 : i32
    %295 = vector.broadcast %c0_i32_13 : i32 to vector<16x128xi32>
    %296 = arith.cmpi eq, %273, %295 : vector<16x128xi32>
    %cst_14 = arith.constant 0.000000e+00 : f32
    %297 = vector.broadcast %cst_14 : f32 to vector<16x128xf32>
    %298 = arith.select %296, %294, %297 : vector<16x128xi1>, vector<16x128xf32>
    %cst_15 = arith.constant 0.000000e+00 : f32
    %299 = vector.broadcast %cst_15 : f32 to vector<8x128xf32>
    %c0_16 = arith.constant 0 : index
    %c0_17 = arith.constant 0 : index
    %300 = vector.load %arg2[%c0_16, %c0_17] : memref<128x128xbf16, #tpu.memory_space<vmem>>, vector<8x128xbf16>
    %301 = arith.extf %300 : vector<8x128xbf16> to vector<8x128xf32>
    %302 = vector.extract_strided_slice %298 {offsets = [0, 0], sizes = [1, 128], strides = [1, 1]} : vector<16x128xf32> to vector<1x128xf32>
    %303 = vector.broadcast %302 : vector<1x128xf32> to vector<8x128xf32>
    %304 = arith.mulf %303, %301 : vector<8x128xf32>
    %305 = arith.addf %299, %304 : vector<8x128xf32>
    %c8_18 = arith.constant 8 : index
    %c0_19 = arith.constant 0 : index
    %306 = vector.load %arg2[%c8_18, %c0_19] : memref<128x128xbf16, #tpu.memory_space<vmem>>, vector<8x128xbf16>
    %307 = arith.extf %306 : vector<8x128xbf16> to vector<8x128xf32>
    %308 = vector.extract_strided_slice %298 {offsets = [1, 0], sizes = [1, 128], strides = [1, 1]} : vector<16x128xf32> to vector<1x128xf32>
    %309 = vector.broadcast %308 : vector<1x128xf32> to vector<8x128xf32>
    %310 = arith.mulf %309, %307 : vector<8x128xf32>
    %311 = arith.addf %305, %310 : vector<8x128xf32>
    %c16_20 = arith.constant 16 : index
    %c0_21 = arith.constant 0 : index
    %312 = vector.load %arg2[%c16_20, %c0_21] : memref<128x128xbf16, #tpu.memory_space<vmem>>, vector<8x128xbf16>
    %313 = arith.extf %312 : vector<8x128xbf16> to vector<8x128xf32>
    %314 = vector.extract_strided_slice %298 {offsets = [2, 0], sizes = [1, 128], strides = [1, 1]} : vector<16x128xf32> to vector<1x128xf32>
    %315 = vector.broadcast %314 : vector<1x128xf32> to vector<8x128xf32>
    %316 = arith.mulf %315, %313 : vector<8x128xf32>
    %317 = arith.addf %311, %316 : vector<8x128xf32>
    %c24_22 = arith.constant 24 : index
    %c0_23 = arith.constant 0 : index
    %318 = vector.load %arg2[%c24_22, %c0_23] : memref<128x128xbf16, #tpu.memory_space<vmem>>, vector<8x128xbf16>
    %319 = arith.extf %318 : vector<8x128xbf16> to vector<8x128xf32>
    %320 = vector.extract_strided_slice %298 {offsets = [3, 0], sizes = [1, 128], strides = [1, 1]} : vector<16x128xf32> to vector<1x128xf32>
    %321 = vector.broadcast %320 : vector<1x128xf32> to vector<8x128xf32>
    %322 = arith.mulf %321, %319 : vector<8x128xf32>
    %323 = arith.addf %317, %322 : vector<8x128xf32>
    %c32_24 = arith.constant 32 : index
    %c0_25 = arith.constant 0 : index
    %324 = vector.load %arg2[%c32_24, %c0_25] : memref<128x128xbf16, #tpu.memory_space<vmem>>, vector<8x128xbf16>
    %325 = arith.extf %324 : vector<8x128xbf16> to vector<8x128xf32>
    %326 = vector.extract_strided_slice %298 {offsets = [4, 0], sizes = [1, 128], strides = [1, 1]} : vector<16x128xf32> to vector<1x128xf32>
    %327 = vector.broadcast %326 : vector<1x128xf32> to vector<8x128xf32>
    %328 = arith.mulf %327, %325 : vector<8x128xf32>
    %329 = arith.addf %323, %328 : vector<8x128xf32>
    %c40_26 = arith.constant 40 : index
    %c0_27 = arith.constant 0 : index
    %330 = vector.load %arg2[%c40_26, %c0_27] : memref<128x128xbf16, #tpu.memory_space<vmem>>, vector<8x128xbf16>
    %331 = arith.extf %330 : vector<8x128xbf16> to vector<8x128xf32>
    %332 = vector.extract_strided_slice %298 {offsets = [5, 0], sizes = [1, 128], strides = [1, 1]} : vector<16x128xf32> to vector<1x128xf32>
    %333 = vector.broadcast %332 : vector<1x128xf32> to vector<8x128xf32>
    %334 = arith.mulf %333, %331 : vector<8x128xf32>
    %335 = arith.addf %329, %334 : vector<8x128xf32>
    %c48 = arith.constant 48 : index
    %c0_28 = arith.constant 0 : index
    %336 = vector.load %arg2[%c48, %c0_28] : memref<128x128xbf16, #tpu.memory_space<vmem>>, vector<8x128xbf16>
    %337 = arith.extf %336 : vector<8x128xbf16> to vector<8x128xf32>
    %338 = vector.extract_strided_slice %298 {offsets = [6, 0], sizes = [1, 128], strides = [1, 1]} : vector<16x128xf32> to vector<1x128xf32>
    %339 = vector.broadcast %338 : vector<1x128xf32> to vector<8x128xf32>
    %340 = arith.mulf %339, %337 : vector<8x128xf32>
    %341 = arith.addf %335, %340 : vector<8x128xf32>
    %c56 = arith.constant 56 : index
    %c0_29 = arith.constant 0 : index
    %342 = vector.load %arg2[%c56, %c0_29] : memref<128x128xbf16, #tpu.memory_space<vmem>>, vector<8x128xbf16>
    %343 = arith.extf %342 : vector<8x128xbf16> to vector<8x128xf32>
    %344 = vector.extract_strided_slice %298 {offsets = [7, 0], sizes = [1, 128], strides = [1, 1]} : vector<16x128xf32> to vector<1x128xf32>
    %345 = vector.broadcast %344 : vector<1x128xf32> to vector<8x128xf32>
    %346 = arith.mulf %345, %343 : vector<8x128xf32>
    %347 = arith.addf %341, %346 : vector<8x128xf32>
    %c64 = arith.constant 64 : index
    %c0_30 = arith.constant 0 : index
    %348 = vector.load %arg2[%c64, %c0_30] : memref<128x128xbf16, #tpu.memory_space<vmem>>, vector<8x128xbf16>
    %349 = arith.extf %348 : vector<8x128xbf16> to vector<8x128xf32>
    %350 = vector.extract_strided_slice %298 {offsets = [8, 0], sizes = [1, 128], strides = [1, 1]} : vector<16x128xf32> to vector<1x128xf32>
    %351 = vector.broadcast %350 : vector<1x128xf32> to vector<8x128xf32>
    %352 = arith.mulf %351, %349 : vector<8x128xf32>
    %353 = arith.addf %347, %352 : vector<8x128xf32>
    %c72 = arith.constant 72 : index
    %c0_31 = arith.constant 0 : index
    %354 = vector.load %arg2[%c72, %c0_31] : memref<128x128xbf16, #tpu.memory_space<vmem>>, vector<8x128xbf16>
    %355 = arith.extf %354 : vector<8x128xbf16> to vector<8x128xf32>
    %356 = vector.extract_strided_slice %298 {offsets = [9, 0], sizes = [1, 128], strides = [1, 1]} : vector<16x128xf32> to vector<1x128xf32>
    %357 = vector.broadcast %356 : vector<1x128xf32> to vector<8x128xf32>
    %358 = arith.mulf %357, %355 : vector<8x128xf32>
    %359 = arith.addf %353, %358 : vector<8x128xf32>
    %c80 = arith.constant 80 : index
    %c0_32 = arith.constant 0 : index
    %360 = vector.load %arg2[%c80, %c0_32] : memref<128x128xbf16, #tpu.memory_space<vmem>>, vector<8x128xbf16>
    %361 = arith.extf %360 : vector<8x128xbf16> to vector<8x128xf32>
    %362 = vector.extract_strided_slice %298 {offsets = [10, 0], sizes = [1, 128], strides = [1, 1]} : vector<16x128xf32> to vector<1x128xf32>
    %363 = vector.broadcast %362 : vector<1x128xf32> to vector<8x128xf32>
    %364 = arith.mulf %363, %361 : vector<8x128xf32>
    %365 = arith.addf %359, %364 : vector<8x128xf32>
    %c88 = arith.constant 88 : index
    %c0_33 = arith.constant 0 : index
    %366 = vector.load %arg2[%c88, %c0_33] : memref<128x128xbf16, #tpu.memory_space<vmem>>, vector<8x128xbf16>
    %367 = arith.extf %366 : vector<8x128xbf16> to vector<8x128xf32>
    %368 = vector.extract_strided_slice %298 {offsets = [11, 0], sizes = [1, 128], strides = [1, 1]} : vector<16x128xf32> to vector<1x128xf32>
    %369 = vector.broadcast %368 : vector<1x128xf32> to vector<8x128xf32>
    %370 = arith.mulf %369, %367 : vector<8x128xf32>
    %371 = arith.addf %365, %370 : vector<8x128xf32>
    %c96 = arith.constant 96 : index
    %c0_34 = arith.constant 0 : index
    %372 = vector.load %arg2[%c96, %c0_34] : memref<128x128xbf16, #tpu.memory_space<vmem>>, vector<8x128xbf16>
    %373 = arith.extf %372 : vector<8x128xbf16> to vector<8x128xf32>
    %374 = vector.extract_strided_slice %298 {offsets = [12, 0], sizes = [1, 128], strides = [1, 1]} : vector<16x128xf32> to vector<1x128xf32>
    %375 = vector.broadcast %374 : vector<1x128xf32> to vector<8x128xf32>
    %376 = arith.mulf %375, %373 : vector<8x128xf32>
    %377 = arith.addf %371, %376 : vector<8x128xf32>
    %c104 = arith.constant 104 : index
    %c0_35 = arith.constant 0 : index
    %378 = vector.load %arg2[%c104, %c0_35] : memref<128x128xbf16, #tpu.memory_space<vmem>>, vector<8x128xbf16>
    %379 = arith.extf %378 : vector<8x128xbf16> to vector<8x128xf32>
    %380 = vector.extract_strided_slice %298 {offsets = [13, 0], sizes = [1, 128], strides = [1, 1]} : vector<16x128xf32> to vector<1x128xf32>
    %381 = vector.broadcast %380 : vector<1x128xf32> to vector<8x128xf32>
    %382 = arith.mulf %381, %379 : vector<8x128xf32>
    %383 = arith.addf %377, %382 : vector<8x128xf32>
    %c112 = arith.constant 112 : index
    %c0_36 = arith.constant 0 : index
    %384 = vector.load %arg2[%c112, %c0_36] : memref<128x128xbf16, #tpu.memory_space<vmem>>, vector<8x128xbf16>
    %385 = arith.extf %384 : vector<8x128xbf16> to vector<8x128xf32>
    %386 = vector.extract_strided_slice %298 {offsets = [14, 0], sizes = [1, 128], strides = [1, 1]} : vector<16x128xf32> to vector<1x128xf32>
    %387 = vector.broadcast %386 : vector<1x128xf32> to vector<8x128xf32>
    %388 = arith.mulf %387, %385 : vector<8x128xf32>
    %389 = arith.addf %383, %388 : vector<8x128xf32>
    %c120 = arith.constant 120 : index
    %c0_37 = arith.constant 0 : index
    %390 = vector.load %arg2[%c120, %c0_37] : memref<128x128xbf16, #tpu.memory_space<vmem>>, vector<8x128xbf16>
    %391 = arith.extf %390 : vector<8x128xbf16> to vector<8x128xf32>
    %392 = vector.extract_strided_slice %298 {offsets = [15, 0], sizes = [1, 128], strides = [1, 1]} : vector<16x128xf32> to vector<1x128xf32>
    %393 = vector.broadcast %392 : vector<1x128xf32> to vector<8x128xf32>
    %394 = arith.mulf %393, %391 : vector<8x128xf32>
    %395 = arith.addf %389, %394 : vector<8x128xf32>
    %c1_38 = arith.constant 1 : index
    %396 = memref.load %arg3[%c1_38] : memref<45xf32, #tpu.memory_space<smem>>
    %397 = vector.broadcast %396 : f32 to vector<16x128xf32>
    %398 = arith.subf %0, %397 : vector<16x128xf32>
    %c16_39 = arith.constant 16 : index
    %399 = memref.load %arg3[%c16_39] : memref<45xf32, #tpu.memory_space<smem>>
    %400 = vector.broadcast %399 : f32 to vector<16x128xf32>
    %401 = arith.subf %1, %400 : vector<16x128xf32>
    %c31_40 = arith.constant 31 : index
    %402 = memref.load %arg3[%c31_40] : memref<45xf32, #tpu.memory_space<smem>>
    %403 = vector.broadcast %402 : f32 to vector<16x128xf32>
    %404 = arith.subf %2, %403 : vector<16x128xf32>
    %405 = arith.mulf %398, %398 : vector<16x128xf32>
    %406 = arith.mulf %401, %401 : vector<16x128xf32>
    %407 = arith.addf %405, %406 : vector<16x128xf32>
    %408 = arith.mulf %404, %404 : vector<16x128xf32>
    %409 = arith.addf %407, %408 : vector<16x128xf32>
    %410 = math.sqrt %409 : vector<16x128xf32>
    %cst_41 = arith.constant 1.66666663 : f32
    %411 = vector.broadcast %cst_41 : f32 to vector<16x128xf32>
    %412 = arith.mulf %410, %411 : vector<16x128xf32>
    %cst_42 = arith.constant 1.000000e+00 : f32
    %413 = vector.broadcast %cst_42 : f32 to vector<16x128xf32>
    %414 = arith.subf %413, %412 : vector<16x128xf32>
    %cst_43 = arith.constant 0.000000e+00 : f32
    %415 = vector.broadcast %cst_43 : f32 to vector<16x128xf32>
    %416 = arith.maximumf %414, %415 : vector<16x128xf32>
    %c1_i32_44 = arith.constant 1 : i32
    %417 = vector.broadcast %c1_i32_44 : i32 to vector<16x128xi32>
    %418 = arith.cmpi eq, %273, %417 : vector<16x128xi32>
    %cst_45 = arith.constant 0.000000e+00 : f32
    %419 = vector.broadcast %cst_45 : f32 to vector<16x128xf32>
    %420 = arith.select %418, %416, %419 : vector<16x128xi1>, vector<16x128xf32>
    %cst_46 = arith.constant 0.000000e+00 : f32
    %421 = vector.broadcast %cst_46 : f32 to vector<8x128xf32>
    %c0_47 = arith.constant 0 : index
    %c0_48 = arith.constant 0 : index
    %422 = vector.load %arg2[%c0_47, %c0_48] : memref<128x128xbf16, #tpu.memory_space<vmem>>, vector<8x128xbf16>
    %423 = arith.extf %422 : vector<8x128xbf16> to vector<8x128xf32>
    %424 = vector.extract_strided_slice %420 {offsets = [0, 0], sizes = [1, 128], strides = [1, 1]} : vector<16x128xf32> to vector<1x128xf32>
    %425 = vector.broadcast %424 : vector<1x128xf32> to vector<8x128xf32>
    %426 = arith.mulf %425, %423 : vector<8x128xf32>
    %427 = arith.addf %421, %426 : vector<8x128xf32>
    %c8_49 = arith.constant 8 : index
    %c0_50 = arith.constant 0 : index
    %428 = vector.load %arg2[%c8_49, %c0_50] : memref<128x128xbf16, #tpu.memory_space<vmem>>, vector<8x128xbf16>
    %429 = arith.extf %428 : vector<8x128xbf16> to vector<8x128xf32>
    %430 = vector.extract_strided_slice %420 {offsets = [1, 0], sizes = [1, 128], strides = [1, 1]} : vector<16x128xf32> to vector<1x128xf32>
    %431 = vector.broadcast %430 : vector<1x128xf32> to vector<8x128xf32>
    %432 = arith.mulf %431, %429 : vector<8x128xf32>
    %433 = arith.addf %427, %432 : vector<8x128xf32>
    %c16_51 = arith.constant 16 : index
    %c0_52 = arith.constant 0 : index
    %434 = vector.load %arg2[%c16_51, %c0_52] : memref<128x128xbf16, #tpu.memory_space<vmem>>, vector<8x128xbf16>
    %435 = arith.extf %434 : vector<8x128xbf16> to vector<8x128xf32>
    %436 = vector.extract_strided_slice %420 {offsets = [2, 0], sizes = [1, 128], strides = [1, 1]} : vector<16x128xf32> to vector<1x128xf32>
    %437 = vector.broadcast %436 : vector<1x128xf32> to vector<8x128xf32>
    %438 = arith.mulf %437, %435 : vector<8x128xf32>
    %439 = arith.addf %433, %438 : vector<8x128xf32>
    %c24_53 = arith.constant 24 : index
    %c0_54 = arith.constant 0 : index
    %440 = vector.load %arg2[%c24_53, %c0_54] : memref<128x128xbf16, #tpu.memory_space<vmem>>, vector<8x128xbf16>
    %441 = arith.extf %440 : vector<8x128xbf16> to vector<8x128xf32>
    %442 = vector.extract_strided_slice %420 {offsets = [3, 0], sizes = [1, 128], strides = [1, 1]} : vector<16x128xf32> to vector<1x128xf32>
    %443 = vector.broadcast %442 : vector<1x128xf32> to vector<8x128xf32>
    %444 = arith.mulf %443, %441 : vector<8x128xf32>
    %445 = arith.addf %439, %444 : vector<8x128xf32>
    %c32_55 = arith.constant 32 : index
    %c0_56 = arith.constant 0 : index
    %446 = vector.load %arg2[%c32_55, %c0_56] : memref<128x128xbf16, #tpu.memory_space<vmem>>, vector<8x128xbf16>
    %447 = arith.extf %446 : vector<8x128xbf16> to vector<8x128xf32>
    %448 = vector.extract_strided_slice %420 {offsets = [4, 0], sizes = [1, 128], strides = [1, 1]} : vector<16x128xf32> to vector<1x128xf32>
    %449 = vector.broadcast %448 : vector<1x128xf32> to vector<8x128xf32>
    %450 = arith.mulf %449, %447 : vector<8x128xf32>
    %451 = arith.addf %445, %450 : vector<8x128xf32>
    %c40_57 = arith.constant 40 : index
    %c0_58 = arith.constant 0 : index
    %452 = vector.load %arg2[%c40_57, %c0_58] : memref<128x128xbf16, #tpu.memory_space<vmem>>, vector<8x128xbf16>
    %453 = arith.extf %452 : vector<8x128xbf16> to vector<8x128xf32>
    %454 = vector.extract_strided_slice %420 {offsets = [5, 0], sizes = [1, 128], strides = [1, 1]} : vector<16x128xf32> to vector<1x128xf32>
    %455 = vector.broadcast %454 : vector<1x128xf32> to vector<8x128xf32>
    %456 = arith.mulf %455, %453 : vector<8x128xf32>
    %457 = arith.addf %451, %456 : vector<8x128xf32>
    %c48_59 = arith.constant 48 : index
    %c0_60 = arith.constant 0 : index
    %458 = vector.load %arg2[%c48_59, %c0_60] : memref<128x128xbf16, #tpu.memory_space<vmem>>, vector<8x128xbf16>
    %459 = arith.extf %458 : vector<8x128xbf16> to vector<8x128xf32>
    %460 = vector.extract_strided_slice %420 {offsets = [6, 0], sizes = [1, 128], strides = [1, 1]} : vector<16x128xf32> to vector<1x128xf32>
    %461 = vector.broadcast %460 : vector<1x128xf32> to vector<8x128xf32>
    %462 = arith.mulf %461, %459 : vector<8x128xf32>
    %463 = arith.addf %457, %462 : vector<8x128xf32>
    %c56_61 = arith.constant 56 : index
    %c0_62 = arith.constant 0 : index
    %464 = vector.load %arg2[%c56_61, %c0_62] : memref<128x128xbf16, #tpu.memory_space<vmem>>, vector<8x128xbf16>
    %465 = arith.extf %464 : vector<8x128xbf16> to vector<8x128xf32>
    %466 = vector.extract_strided_slice %420 {offsets = [7, 0], sizes = [1, 128], strides = [1, 1]} : vector<16x128xf32> to vector<1x128xf32>
    %467 = vector.broadcast %466 : vector<1x128xf32> to vector<8x128xf32>
    %468 = arith.mulf %467, %465 : vector<8x128xf32>
    %469 = arith.addf %463, %468 : vector<8x128xf32>
    %c64_63 = arith.constant 64 : index
    %c0_64 = arith.constant 0 : index
    %470 = vector.load %arg2[%c64_63, %c0_64] : memref<128x128xbf16, #tpu.memory_space<vmem>>, vector<8x128xbf16>
    %471 = arith.extf %470 : vector<8x128xbf16> to vector<8x128xf32>
    %472 = vector.extract_strided_slice %420 {offsets = [8, 0], sizes = [1, 128], strides = [1, 1]} : vector<16x128xf32> to vector<1x128xf32>
    %473 = vector.broadcast %472 : vector<1x128xf32> to vector<8x128xf32>
    %474 = arith.mulf %473, %471 : vector<8x128xf32>
    %475 = arith.addf %469, %474 : vector<8x128xf32>
    %c72_65 = arith.constant 72 : index
    %c0_66 = arith.constant 0 : index
    %476 = vector.load %arg2[%c72_65, %c0_66] : memref<128x128xbf16, #tpu.memory_space<vmem>>, vector<8x128xbf16>
    %477 = arith.extf %476 : vector<8x128xbf16> to vector<8x128xf32>
    %478 = vector.extract_strided_slice %420 {offsets = [9, 0], sizes = [1, 128], strides = [1, 1]} : vector<16x128xf32> to vector<1x128xf32>
    %479 = vector.broadcast %478 : vector<1x128xf32> to vector<8x128xf32>
    %480 = arith.mulf %479, %477 : vector<8x128xf32>
    %481 = arith.addf %475, %480 : vector<8x128xf32>
    %c80_67 = arith.constant 80 : index
    %c0_68 = arith.constant 0 : index
    %482 = vector.load %arg2[%c80_67, %c0_68] : memref<128x128xbf16, #tpu.memory_space<vmem>>, vector<8x128xbf16>
    %483 = arith.extf %482 : vector<8x128xbf16> to vector<8x128xf32>
    %484 = vector.extract_strided_slice %420 {offsets = [10, 0], sizes = [1, 128], strides = [1, 1]} : vector<16x128xf32> to vector<1x128xf32>
    %485 = vector.broadcast %484 : vector<1x128xf32> to vector<8x128xf32>
    %486 = arith.mulf %485, %483 : vector<8x128xf32>
    %487 = arith.addf %481, %486 : vector<8x128xf32>
    %c88_69 = arith.constant 88 : index
    %c0_70 = arith.constant 0 : index
    %488 = vector.load %arg2[%c88_69, %c0_70] : memref<128x128xbf16, #tpu.memory_space<vmem>>, vector<8x128xbf16>
    %489 = arith.extf %488 : vector<8x128xbf16> to vector<8x128xf32>
    %490 = vector.extract_strided_slice %420 {offsets = [11, 0], sizes = [1, 128], strides = [1, 1]} : vector<16x128xf32> to vector<1x128xf32>
    %491 = vector.broadcast %490 : vector<1x128xf32> to vector<8x128xf32>
    %492 = arith.mulf %491, %489 : vector<8x128xf32>
    %493 = arith.addf %487, %492 : vector<8x128xf32>
    %c96_71 = arith.constant 96 : index
    %c0_72 = arith.constant 0 : index
    %494 = vector.load %arg2[%c96_71, %c0_72] : memref<128x128xbf16, #tpu.memory_space<vmem>>, vector<8x128xbf16>
    %495 = arith.extf %494 : vector<8x128xbf16> to vector<8x128xf32>
    %496 = vector.extract_strided_slice %420 {offsets = [12, 0], sizes = [1, 128], strides = [1, 1]} : vector<16x128xf32> to vector<1x128xf32>
    %497 = vector.broadcast %496 : vector<1x128xf32> to vector<8x128xf32>
    %498 = arith.mulf %497, %495 : vector<8x128xf32>
    %499 = arith.addf %493, %498 : vector<8x128xf32>
    %c104_73 = arith.constant 104 : index
    %c0_74 = arith.constant 0 : index
    %500 = vector.load %arg2[%c104_73, %c0_74] : memref<128x128xbf16, #tpu.memory_space<vmem>>, vector<8x128xbf16>
    %501 = arith.extf %500 : vector<8x128xbf16> to vector<8x128xf32>
    %502 = vector.extract_strided_slice %420 {offsets = [13, 0], sizes = [1, 128], strides = [1, 1]} : vector<16x128xf32> to vector<1x128xf32>
    %503 = vector.broadcast %502 : vector<1x128xf32> to vector<8x128xf32>
    %504 = arith.mulf %503, %501 : vector<8x128xf32>
    %505 = arith.addf %499, %504 : vector<8x128xf32>
    %c112_75 = arith.constant 112 : index
    %c0_76 = arith.constant 0 : index
    %506 = vector.load %arg2[%c112_75, %c0_76] : memref<128x128xbf16, #tpu.memory_space<vmem>>, vector<8x128xbf16>
    %507 = arith.extf %506 : vector<8x128xbf16> to vector<8x128xf32>
    %508 = vector.extract_strided_slice %420 {offsets = [14, 0], sizes = [1, 128], strides = [1, 1]} : vector<16x128xf32> to vector<1x128xf32>
    %509 = vector.broadcast %508 : vector<1x128xf32> to vector<8x128xf32>
    %510 = arith.mulf %509, %507 : vector<8x128xf32>
    %511 = arith.addf %505, %510 : vector<8x128xf32>
    %c120_77 = arith.constant 120 : index
    %c0_78 = arith.constant 0 : index
    %512 = vector.load %arg2[%c120_77, %c0_78] : memref<128x128xbf16, #tpu.memory_space<vmem>>, vector<8x128xbf16>
    %513 = arith.extf %512 : vector<8x128xbf16> to vector<8x128xf32>
    %514 = vector.extract_strided_slice %420 {offsets = [15, 0], sizes = [1, 128], strides = [1, 1]} : vector<16x128xf32> to vector<1x128xf32>
    %515 = vector.broadcast %514 : vector<1x128xf32> to vector<8x128xf32>
    %516 = arith.mulf %515, %513 : vector<8x128xf32>
    %517 = arith.addf %511, %516 : vector<8x128xf32>
    %c2_79 = arith.constant 2 : index
    %518 = memref.load %arg3[%c2_79] : memref<45xf32, #tpu.memory_space<smem>>
    %519 = vector.broadcast %518 : f32 to vector<16x128xf32>
    %520 = arith.subf %0, %519 : vector<16x128xf32>
    %c17_80 = arith.constant 17 : index
    %521 = memref.load %arg3[%c17_80] : memref<45xf32, #tpu.memory_space<smem>>
    %522 = vector.broadcast %521 : f32 to vector<16x128xf32>
    %523 = arith.subf %1, %522 : vector<16x128xf32>
    %c32_81 = arith.constant 32 : index
    %524 = memref.load %arg3[%c32_81] : memref<45xf32, #tpu.memory_space<smem>>
    %525 = vector.broadcast %524 : f32 to vector<16x128xf32>
    %526 = arith.subf %2, %525 : vector<16x128xf32>
    %527 = arith.mulf %520, %520 : vector<16x128xf32>
    %528 = arith.mulf %523, %523 : vector<16x128xf32>
    %529 = arith.addf %527, %528 : vector<16x128xf32>
    %530 = arith.mulf %526, %526 : vector<16x128xf32>
    %531 = arith.addf %529, %530 : vector<16x128xf32>
    %532 = math.sqrt %531 : vector<16x128xf32>
    %cst_82 = arith.constant 1.66666663 : f32
    %533 = vector.broadcast %cst_82 : f32 to vector<16x128xf32>
    %534 = arith.mulf %532, %533 : vector<16x128xf32>
    %cst_83 = arith.constant 1.000000e+00 : f32
    %535 = vector.broadcast %cst_83 : f32 to vector<16x128xf32>
    %536 = arith.subf %535, %534 : vector<16x128xf32>
    %cst_84 = arith.constant 0.000000e+00 : f32
    %537 = vector.broadcast %cst_84 : f32 to vector<16x128xf32>
    %538 = arith.maximumf %536, %537 : vector<16x128xf32>
    %c2_i32_85 = arith.constant 2 : i32
    %539 = vector.broadcast %c2_i32_85 : i32 to vector<16x128xi32>
    %540 = arith.cmpi eq, %273, %539 : vector<16x128xi32>
    %cst_86 = arith.constant 0.000000e+00 : f32
    %541 = vector.broadcast %cst_86 : f32 to vector<16x128xf32>
    %542 = arith.select %540, %538, %541 : vector<16x128xi1>, vector<16x128xf32>
    %cst_87 = arith.constant 0.000000e+00 : f32
    %543 = vector.broadcast %cst_87 : f32 to vector<8x128xf32>
    %c0_88 = arith.constant 0 : index
    %c0_89 = arith.constant 0 : index
    %544 = vector.load %arg2[%c0_88, %c0_89] : memref<128x128xbf16, #tpu.memory_space<vmem>>, vector<8x128xbf16>
    %545 = arith.extf %544 : vector<8x128xbf16> to vector<8x128xf32>
    %546 = vector.extract_strided_slice %542 {offsets = [0, 0], sizes = [1, 128], strides = [1, 1]} : vector<16x128xf32> to vector<1x128xf32>
    %547 = vector.broadcast %546 : vector<1x128xf32> to vector<8x128xf32>
    %548 = arith.mulf %547, %545 : vector<8x128xf32>
    %549 = arith.addf %543, %548 : vector<8x128xf32>
    %c8_90 = arith.constant 8 : index
    %c0_91 = arith.constant 0 : index
    %550 = vector.load %arg2[%c8_90, %c0_91] : memref<128x128xbf16, #tpu.memory_space<vmem>>, vector<8x128xbf16>
    %551 = arith.extf %550 : vector<8x128xbf16> to vector<8x128xf32>
    %552 = vector.extract_strided_slice %542 {offsets = [1, 0], sizes = [1, 128], strides = [1, 1]} : vector<16x128xf32> to vector<1x128xf32>
    %553 = vector.broadcast %552 : vector<1x128xf32> to vector<8x128xf32>
    %554 = arith.mulf %553, %551 : vector<8x128xf32>
    %555 = arith.addf %549, %554 : vector<8x128xf32>
    %c16_92 = arith.constant 16 : index
    %c0_93 = arith.constant 0 : index
    %556 = vector.load %arg2[%c16_92, %c0_93] : memref<128x128xbf16, #tpu.memory_space<vmem>>, vector<8x128xbf16>
    %557 = arith.extf %556 : vector<8x128xbf16> to vector<8x128xf32>
    %558 = vector.extract_strided_slice %542 {offsets = [2, 0], sizes = [1, 128], strides = [1, 1]} : vector<16x128xf32> to vector<1x128xf32>
    %559 = vector.broadcast %558 : vector<1x128xf32> to vector<8x128xf32>
    %560 = arith.mulf %559, %557 : vector<8x128xf32>
    %561 = arith.addf %555, %560 : vector<8x128xf32>
    %c24_94 = arith.constant 24 : index
    %c0_95 = arith.constant 0 : index
    %562 = vector.load %arg2[%c24_94, %c0_95] : memref<128x128xbf16, #tpu.memory_space<vmem>>, vector<8x128xbf16>
    %563 = arith.extf %562 : vector<8x128xbf16> to vector<8x128xf32>
    %564 = vector.extract_strided_slice %542 {offsets = [3, 0], sizes = [1, 128], strides = [1, 1]} : vector<16x128xf32> to vector<1x128xf32>
    %565 = vector.broadcast %564 : vector<1x128xf32> to vector<8x128xf32>
    %566 = arith.mulf %565, %563 : vector<8x128xf32>
    %567 = arith.addf %561, %566 : vector<8x128xf32>
    %c32_96 = arith.constant 32 : index
    %c0_97 = arith.constant 0 : index
    %568 = vector.load %arg2[%c32_96, %c0_97] : memref<128x128xbf16, #tpu.memory_space<vmem>>, vector<8x128xbf16>
    %569 = arith.extf %568 : vector<8x128xbf16> to vector<8x128xf32>
    %570 = vector.extract_strided_slice %542 {offsets = [4, 0], sizes = [1, 128], strides = [1, 1]} : vector<16x128xf32> to vector<1x128xf32>
    %571 = vector.broadcast %570 : vector<1x128xf32> to vector<8x128xf32>
    %572 = arith.mulf %571, %569 : vector<8x128xf32>
    %573 = arith.addf %567, %572 : vector<8x128xf32>
    %c40_98 = arith.constant 40 : index
    %c0_99 = arith.constant 0 : index
    %574 = vector.load %arg2[%c40_98, %c0_99] : memref<128x128xbf16, #tpu.memory_space<vmem>>, vector<8x128xbf16>
    %575 = arith.extf %574 : vector<8x128xbf16> to vector<8x128xf32>
    %576 = vector.extract_strided_slice %542 {offsets = [5, 0], sizes = [1, 128], strides = [1, 1]} : vector<16x128xf32> to vector<1x128xf32>
    %577 = vector.broadcast %576 : vector<1x128xf32> to vector<8x128xf32>
    %578 = arith.mulf %577, %575 : vector<8x128xf32>
    %579 = arith.addf %573, %578 : vector<8x128xf32>
    %c48_100 = arith.constant 48 : index
    %c0_101 = arith.constant 0 : index
    %580 = vector.load %arg2[%c48_100, %c0_101] : memref<128x128xbf16, #tpu.memory_space<vmem>>, vector<8x128xbf16>
    %581 = arith.extf %580 : vector<8x128xbf16> to vector<8x128xf32>
    %582 = vector.extract_strided_slice %542 {offsets = [6, 0], sizes = [1, 128], strides = [1, 1]} : vector<16x128xf32> to vector<1x128xf32>
    %583 = vector.broadcast %582 : vector<1x128xf32> to vector<8x128xf32>
    %584 = arith.mulf %583, %581 : vector<8x128xf32>
    %585 = arith.addf %579, %584 : vector<8x128xf32>
    %c56_102 = arith.constant 56 : index
    %c0_103 = arith.constant 0 : index
    %586 = vector.load %arg2[%c56_102, %c0_103] : memref<128x128xbf16, #tpu.memory_space<vmem>>, vector<8x128xbf16>
    %587 = arith.extf %586 : vector<8x128xbf16> to vector<8x128xf32>
    %588 = vector.extract_strided_slice %542 {offsets = [7, 0], sizes = [1, 128], strides = [1, 1]} : vector<16x128xf32> to vector<1x128xf32>
    %589 = vector.broadcast %588 : vector<1x128xf32> to vector<8x128xf32>
    %590 = arith.mulf %589, %587 : vector<8x128xf32>
    %591 = arith.addf %585, %590 : vector<8x128xf32>
    %c64_104 = arith.constant 64 : index
    %c0_105 = arith.constant 0 : index
    %592 = vector.load %arg2[%c64_104, %c0_105] : memref<128x128xbf16, #tpu.memory_space<vmem>>, vector<8x128xbf16>
    %593 = arith.extf %592 : vector<8x128xbf16> to vector<8x128xf32>
    %594 = vector.extract_strided_slice %542 {offsets = [8, 0], sizes = [1, 128], strides = [1, 1]} : vector<16x128xf32> to vector<1x128xf32>
    %595 = vector.broadcast %594 : vector<1x128xf32> to vector<8x128xf32>
    %596 = arith.mulf %595, %593 : vector<8x128xf32>
    %597 = arith.addf %591, %596 : vector<8x128xf32>
    %c72_106 = arith.constant 72 : index
    %c0_107 = arith.constant 0 : index
    %598 = vector.load %arg2[%c72_106, %c0_107] : memref<128x128xbf16, #tpu.memory_space<vmem>>, vector<8x128xbf16>
    %599 = arith.extf %598 : vector<8x128xbf16> to vector<8x128xf32>
    %600 = vector.extract_strided_slice %542 {offsets = [9, 0], sizes = [1, 128], strides = [1, 1]} : vector<16x128xf32> to vector<1x128xf32>
    %601 = vector.broadcast %600 : vector<1x128xf32> to vector<8x128xf32>
    %602 = arith.mulf %601, %599 : vector<8x128xf32>
    %603 = arith.addf %597, %602 : vector<8x128xf32>
    %c80_108 = arith.constant 80 : index
    %c0_109 = arith.constant 0 : index
    %604 = vector.load %arg2[%c80_108, %c0_109] : memref<128x128xbf16, #tpu.memory_space<vmem>>, vector<8x128xbf16>
    %605 = arith.extf %604 : vector<8x128xbf16> to vector<8x128xf32>
    %606 = vector.extract_strided_slice %542 {offsets = [10, 0], sizes = [1, 128], strides = [1, 1]} : vector<16x128xf32> to vector<1x128xf32>
    %607 = vector.broadcast %606 : vector<1x128xf32> to vector<8x128xf32>
    %608 = arith.mulf %607, %605 : vector<8x128xf32>
    %609 = arith.addf %603, %608 : vector<8x128xf32>
    %c88_110 = arith.constant 88 : index
    %c0_111 = arith.constant 0 : index
    %610 = vector.load %arg2[%c88_110, %c0_111] : memref<128x128xbf16, #tpu.memory_space<vmem>>, vector<8x128xbf16>
    %611 = arith.extf %610 : vector<8x128xbf16> to vector<8x128xf32>
    %612 = vector.extract_strided_slice %542 {offsets = [11, 0], sizes = [1, 128], strides = [1, 1]} : vector<16x128xf32> to vector<1x128xf32>
    %613 = vector.broadcast %612 : vector<1x128xf32> to vector<8x128xf32>
    %614 = arith.mulf %613, %611 : vector<8x128xf32>
    %615 = arith.addf %609, %614 : vector<8x128xf32>
    %c96_112 = arith.constant 96 : index
    %c0_113 = arith.constant 0 : index
    %616 = vector.load %arg2[%c96_112, %c0_113] : memref<128x128xbf16, #tpu.memory_space<vmem>>, vector<8x128xbf16>
    %617 = arith.extf %616 : vector<8x128xbf16> to vector<8x128xf32>
    %618 = vector.extract_strided_slice %542 {offsets = [12, 0], sizes = [1, 128], strides = [1, 1]} : vector<16x128xf32> to vector<1x128xf32>
    %619 = vector.broadcast %618 : vector<1x128xf32> to vector<8x128xf32>
    %620 = arith.mulf %619, %617 : vector<8x128xf32>
    %621 = arith.addf %615, %620 : vector<8x128xf32>
    %c104_114 = arith.constant 104 : index
    %c0_115 = arith.constant 0 : index
    %622 = vector.load %arg2[%c104_114, %c0_115] : memref<128x128xbf16, #tpu.memory_space<vmem>>, vector<8x128xbf16>
    %623 = arith.extf %622 : vector<8x128xbf16> to vector<8x128xf32>
    %624 = vector.extract_strided_slice %542 {offsets = [13, 0], sizes = [1, 128], strides = [1, 1]} : vector<16x128xf32> to vector<1x128xf32>
    %625 = vector.broadcast %624 : vector<1x128xf32> to vector<8x128xf32>
    %626 = arith.mulf %625, %623 : vector<8x128xf32>
    %627 = arith.addf %621, %626 : vector<8x128xf32>
    %c112_116 = arith.constant 112 : index
    %c0_117 = arith.constant 0 : index
    %628 = vector.load %arg2[%c112_116, %c0_117] : memref<128x128xbf16, #tpu.memory_space<vmem>>, vector<8x128xbf16>
    %629 = arith.extf %628 : vector<8x128xbf16> to vector<8x128xf32>
    %630 = vector.extract_strided_slice %542 {offsets = [14, 0], sizes = [1, 128], strides = [1, 1]} : vector<16x128xf32> to vector<1x128xf32>
    %631 = vector.broadcast %630 : vector<1x128xf32> to vector<8x128xf32>
    %632 = arith.mulf %631, %629 : vector<8x128xf32>
    %633 = arith.addf %627, %632 : vector<8x128xf32>
    %c120_118 = arith.constant 120 : index
    %c0_119 = arith.constant 0 : index
    %634 = vector.load %arg2[%c120_118, %c0_119] : memref<128x128xbf16, #tpu.memory_space<vmem>>, vector<8x128xbf16>
    %635 = arith.extf %634 : vector<8x128xbf16> to vector<8x128xf32>
    %636 = vector.extract_strided_slice %542 {offsets = [15, 0], sizes = [1, 128], strides = [1, 1]} : vector<16x128xf32> to vector<1x128xf32>
    %637 = vector.broadcast %636 : vector<1x128xf32> to vector<8x128xf32>
    %638 = arith.mulf %637, %635 : vector<8x128xf32>
    %639 = arith.addf %633, %638 : vector<8x128xf32>
    %c3_120 = arith.constant 3 : index
    %640 = memref.load %arg3[%c3_120] : memref<45xf32, #tpu.memory_space<smem>>
    %641 = vector.broadcast %640 : f32 to vector<16x128xf32>
    %642 = arith.subf %0, %641 : vector<16x128xf32>
    %c18_121 = arith.constant 18 : index
    %643 = memref.load %arg3[%c18_121] : memref<45xf32, #tpu.memory_space<smem>>
    %644 = vector.broadcast %643 : f32 to vector<16x128xf32>
    %645 = arith.subf %1, %644 : vector<16x128xf32>
    %c33_122 = arith.constant 33 : index
    %646 = memref.load %arg3[%c33_122] : memref<45xf32, #tpu.memory_space<smem>>
    %647 = vector.broadcast %646 : f32 to vector<16x128xf32>
    %648 = arith.subf %2, %647 : vector<16x128xf32>
    %649 = arith.mulf %642, %642 : vector<16x128xf32>
    %650 = arith.mulf %645, %645 : vector<16x128xf32>
    %651 = arith.addf %649, %650 : vector<16x128xf32>
    %652 = arith.mulf %648, %648 : vector<16x128xf32>
    %653 = arith.addf %651, %652 : vector<16x128xf32>
    %654 = math.sqrt %653 : vector<16x128xf32>
    %cst_123 = arith.constant 1.66666663 : f32
    %655 = vector.broadcast %cst_123 : f32 to vector<16x128xf32>
    %656 = arith.mulf %654, %655 : vector<16x128xf32>
    %cst_124 = arith.constant 1.000000e+00 : f32
    %657 = vector.broadcast %cst_124 : f32 to vector<16x128xf32>
    %658 = arith.subf %657, %656 : vector<16x128xf32>
    %cst_125 = arith.constant 0.000000e+00 : f32
    %659 = vector.broadcast %cst_125 : f32 to vector<16x128xf32>
    %660 = arith.maximumf %658, %659 : vector<16x128xf32>
    %c3_i32_126 = arith.constant 3 : i32
    %661 = vector.broadcast %c3_i32_126 : i32 to vector<16x128xi32>
    %662 = arith.cmpi eq, %273, %661 : vector<16x128xi32>
    %cst_127 = arith.constant 0.000000e+00 : f32
    %663 = vector.broadcast %cst_127 : f32 to vector<16x128xf32>
    %664 = arith.select %662, %660, %663 : vector<16x128xi1>, vector<16x128xf32>
    %cst_128 = arith.constant 0.000000e+00 : f32
    %665 = vector.broadcast %cst_128 : f32 to vector<8x128xf32>
    %c0_129 = arith.constant 0 : index
    %c0_130 = arith.constant 0 : index
    %666 = vector.load %arg2[%c0_129, %c0_130] : memref<128x128xbf16, #tpu.memory_space<vmem>>, vector<8x128xbf16>
    %667 = arith.extf %666 : vector<8x128xbf16> to vector<8x128xf32>
    %668 = vector.extract_strided_slice %664 {offsets = [0, 0], sizes = [1, 128], strides = [1, 1]} : vector<16x128xf32> to vector<1x128xf32>
    %669 = vector.broadcast %668 : vector<1x128xf32> to vector<8x128xf32>
    %670 = arith.mulf %669, %667 : vector<8x128xf32>
    %671 = arith.addf %665, %670 : vector<8x128xf32>
    %c8_131 = arith.constant 8 : index
    %c0_132 = arith.constant 0 : index
    %672 = vector.load %arg2[%c8_131, %c0_132] : memref<128x128xbf16, #tpu.memory_space<vmem>>, vector<8x128xbf16>
    %673 = arith.extf %672 : vector<8x128xbf16> to vector<8x128xf32>
    %674 = vector.extract_strided_slice %664 {offsets = [1, 0], sizes = [1, 128], strides = [1, 1]} : vector<16x128xf32> to vector<1x128xf32>
    %675 = vector.broadcast %674 : vector<1x128xf32> to vector<8x128xf32>
    %676 = arith.mulf %675, %673 : vector<8x128xf32>
    %677 = arith.addf %671, %676 : vector<8x128xf32>
    %c16_133 = arith.constant 16 : index
    %c0_134 = arith.constant 0 : index
    %678 = vector.load %arg2[%c16_133, %c0_134] : memref<128x128xbf16, #tpu.memory_space<vmem>>, vector<8x128xbf16>
    %679 = arith.extf %678 : vector<8x128xbf16> to vector<8x128xf32>
    %680 = vector.extract_strided_slice %664 {offsets = [2, 0], sizes = [1, 128], strides = [1, 1]} : vector<16x128xf32> to vector<1x128xf32>
    %681 = vector.broadcast %680 : vector<1x128xf32> to vector<8x128xf32>
    %682 = arith.mulf %681, %679 : vector<8x128xf32>
    %683 = arith.addf %677, %682 : vector<8x128xf32>
    %c24_135 = arith.constant 24 : index
    %c0_136 = arith.constant 0 : index
    %684 = vector.load %arg2[%c24_135, %c0_136] : memref<128x128xbf16, #tpu.memory_space<vmem>>, vector<8x128xbf16>
    %685 = arith.extf %684 : vector<8x128xbf16> to vector<8x128xf32>
    %686 = vector.extract_strided_slice %664 {offsets = [3, 0], sizes = [1, 128], strides = [1, 1]} : vector<16x128xf32> to vector<1x128xf32>
    %687 = vector.broadcast %686 : vector<1x128xf32> to vector<8x128xf32>
    %688 = arith.mulf %687, %685 : vector<8x128xf32>
    %689 = arith.addf %683, %688 : vector<8x128xf32>
    %c32_137 = arith.constant 32 : index
    %c0_138 = arith.constant 0 : index
    %690 = vector.load %arg2[%c32_137, %c0_138] : memref<128x128xbf16, #tpu.memory_space<vmem>>, vector<8x128xbf16>
    %691 = arith.extf %690 : vector<8x128xbf16> to vector<8x128xf32>
    %692 = vector.extract_strided_slice %664 {offsets = [4, 0], sizes = [1, 128], strides = [1, 1]} : vector<16x128xf32> to vector<1x128xf32>
    %693 = vector.broadcast %692 : vector<1x128xf32> to vector<8x128xf32>
    %694 = arith.mulf %693, %691 : vector<8x128xf32>
    %695 = arith.addf %689, %694 : vector<8x128xf32>
    %c40_139 = arith.constant 40 : index
    %c0_140 = arith.constant 0 : index
    %696 = vector.load %arg2[%c40_139, %c0_140] : memref<128x128xbf16, #tpu.memory_space<vmem>>, vector<8x128xbf16>
    %697 = arith.extf %696 : vector<8x128xbf16> to vector<8x128xf32>
    %698 = vector.extract_strided_slice %664 {offsets = [5, 0], sizes = [1, 128], strides = [1, 1]} : vector<16x128xf32> to vector<1x128xf32>
    %699 = vector.broadcast %698 : vector<1x128xf32> to vector<8x128xf32>
    %700 = arith.mulf %699, %697 : vector<8x128xf32>
    %701 = arith.addf %695, %700 : vector<8x128xf32>
    %c48_141 = arith.constant 48 : index
    %c0_142 = arith.constant 0 : index
    %702 = vector.load %arg2[%c48_141, %c0_142] : memref<128x128xbf16, #tpu.memory_space<vmem>>, vector<8x128xbf16>
    %703 = arith.extf %702 : vector<8x128xbf16> to vector<8x128xf32>
    %704 = vector.extract_strided_slice %664 {offsets = [6, 0], sizes = [1, 128], strides = [1, 1]} : vector<16x128xf32> to vector<1x128xf32>
    %705 = vector.broadcast %704 : vector<1x128xf32> to vector<8x128xf32>
    %706 = arith.mulf %705, %703 : vector<8x128xf32>
    %707 = arith.addf %701, %706 : vector<8x128xf32>
    %c56_143 = arith.constant 56 : index
    %c0_144 = arith.constant 0 : index
    %708 = vector.load %arg2[%c56_143, %c0_144] : memref<128x128xbf16, #tpu.memory_space<vmem>>, vector<8x128xbf16>
    %709 = arith.extf %708 : vector<8x128xbf16> to vector<8x128xf32>
    %710 = vector.extract_strided_slice %664 {offsets = [7, 0], sizes = [1, 128], strides = [1, 1]} : vector<16x128xf32> to vector<1x128xf32>
    %711 = vector.broadcast %710 : vector<1x128xf32> to vector<8x128xf32>
    %712 = arith.mulf %711, %709 : vector<8x128xf32>
    %713 = arith.addf %707, %712 : vector<8x128xf32>
    %c64_145 = arith.constant 64 : index
    %c0_146 = arith.constant 0 : index
    %714 = vector.load %arg2[%c64_145, %c0_146] : memref<128x128xbf16, #tpu.memory_space<vmem>>, vector<8x128xbf16>
    %715 = arith.extf %714 : vector<8x128xbf16> to vector<8x128xf32>
    %716 = vector.extract_strided_slice %664 {offsets = [8, 0], sizes = [1, 128], strides = [1, 1]} : vector<16x128xf32> to vector<1x128xf32>
    %717 = vector.broadcast %716 : vector<1x128xf32> to vector<8x128xf32>
    %718 = arith.mulf %717, %715 : vector<8x128xf32>
    %719 = arith.addf %713, %718 : vector<8x128xf32>
    %c72_147 = arith.constant 72 : index
    %c0_148 = arith.constant 0 : index
    %720 = vector.load %arg2[%c72_147, %c0_148] : memref<128x128xbf16, #tpu.memory_space<vmem>>, vector<8x128xbf16>
    %721 = arith.extf %720 : vector<8x128xbf16> to vector<8x128xf32>
    %722 = vector.extract_strided_slice %664 {offsets = [9, 0], sizes = [1, 128], strides = [1, 1]} : vector<16x128xf32> to vector<1x128xf32>
    %723 = vector.broadcast %722 : vector<1x128xf32> to vector<8x128xf32>
    %724 = arith.mulf %723, %721 : vector<8x128xf32>
    %725 = arith.addf %719, %724 : vector<8x128xf32>
    %c80_149 = arith.constant 80 : index
    %c0_150 = arith.constant 0 : index
    %726 = vector.load %arg2[%c80_149, %c0_150] : memref<128x128xbf16, #tpu.memory_space<vmem>>, vector<8x128xbf16>
    %727 = arith.extf %726 : vector<8x128xbf16> to vector<8x128xf32>
    %728 = vector.extract_strided_slice %664 {offsets = [10, 0], sizes = [1, 128], strides = [1, 1]} : vector<16x128xf32> to vector<1x128xf32>
    %729 = vector.broadcast %728 : vector<1x128xf32> to vector<8x128xf32>
    %730 = arith.mulf %729, %727 : vector<8x128xf32>
    %731 = arith.addf %725, %730 : vector<8x128xf32>
    %c88_151 = arith.constant 88 : index
    %c0_152 = arith.constant 0 : index
    %732 = vector.load %arg2[%c88_151, %c0_152] : memref<128x128xbf16, #tpu.memory_space<vmem>>, vector<8x128xbf16>
    %733 = arith.extf %732 : vector<8x128xbf16> to vector<8x128xf32>
    %734 = vector.extract_strided_slice %664 {offsets = [11, 0], sizes = [1, 128], strides = [1, 1]} : vector<16x128xf32> to vector<1x128xf32>
    %735 = vector.broadcast %734 : vector<1x128xf32> to vector<8x128xf32>
    %736 = arith.mulf %735, %733 : vector<8x128xf32>
    %737 = arith.addf %731, %736 : vector<8x128xf32>
    %c96_153 = arith.constant 96 : index
    %c0_154 = arith.constant 0 : index
    %738 = vector.load %arg2[%c96_153, %c0_154] : memref<128x128xbf16, #tpu.memory_space<vmem>>, vector<8x128xbf16>
    %739 = arith.extf %738 : vector<8x128xbf16> to vector<8x128xf32>
    %740 = vector.extract_strided_slice %664 {offsets = [12, 0], sizes = [1, 128], strides = [1, 1]} : vector<16x128xf32> to vector<1x128xf32>
    %741 = vector.broadcast %740 : vector<1x128xf32> to vector<8x128xf32>
    %742 = arith.mulf %741, %739 : vector<8x128xf32>
    %743 = arith.addf %737, %742 : vector<8x128xf32>
    %c104_155 = arith.constant 104 : index
    %c0_156 = arith.constant 0 : index
    %744 = vector.load %arg2[%c104_155, %c0_156] : memref<128x128xbf16, #tpu.memory_space<vmem>>, vector<8x128xbf16>
    %745 = arith.extf %744 : vector<8x128xbf16> to vector<8x128xf32>
    %746 = vector.extract_strided_slice %664 {offsets = [13, 0], sizes = [1, 128], strides = [1, 1]} : vector<16x128xf32> to vector<1x128xf32>
    %747 = vector.broadcast %746 : vector<1x128xf32> to vector<8x128xf32>
    %748 = arith.mulf %747, %745 : vector<8x128xf32>
    %749 = arith.addf %743, %748 : vector<8x128xf32>
    %c112_157 = arith.constant 112 : index
    %c0_158 = arith.constant 0 : index
    %750 = vector.load %arg2[%c112_157, %c0_158] : memref<128x128xbf16, #tpu.memory_space<vmem>>, vector<8x128xbf16>
    %751 = arith.extf %750 : vector<8x128xbf16> to vector<8x128xf32>
    %752 = vector.extract_strided_slice %664 {offsets = [14, 0], sizes = [1, 128], strides = [1, 1]} : vector<16x128xf32> to vector<1x128xf32>
    %753 = vector.broadcast %752 : vector<1x128xf32> to vector<8x128xf32>
    %754 = arith.mulf %753, %751 : vector<8x128xf32>
    %755 = arith.addf %749, %754 : vector<8x128xf32>
    %c120_159 = arith.constant 120 : index
    %c0_160 = arith.constant 0 : index
    %756 = vector.load %arg2[%c120_159, %c0_160] : memref<128x128xbf16, #tpu.memory_space<vmem>>, vector<8x128xbf16>
    %757 = arith.extf %756 : vector<8x128xbf16> to vector<8x128xf32>
    %758 = vector.extract_strided_slice %664 {offsets = [15, 0], sizes = [1, 128], strides = [1, 1]} : vector<16x128xf32> to vector<1x128xf32>
    %759 = vector.broadcast %758 : vector<1x128xf32> to vector<8x128xf32>
    %760 = arith.mulf %759, %757 : vector<8x128xf32>
    %761 = arith.addf %755, %760 : vector<8x128xf32>
    %c4_161 = arith.constant 4 : index
    %762 = memref.load %arg3[%c4_161] : memref<45xf32, #tpu.memory_space<smem>>
    %763 = vector.broadcast %762 : f32 to vector<16x128xf32>
    %764 = arith.subf %0, %763 : vector<16x128xf32>
    %c19_162 = arith.constant 19 : index
    %765 = memref.load %arg3[%c19_162] : memref<45xf32, #tpu.memory_space<smem>>
    %766 = vector.broadcast %765 : f32 to vector<16x128xf32>
    %767 = arith.subf %1, %766 : vector<16x128xf32>
    %c34_163 = arith.constant 34 : index
    %768 = memref.load %arg3[%c34_163] : memref<45xf32, #tpu.memory_space<smem>>
    %769 = vector.broadcast %768 : f32 to vector<16x128xf32>
    %770 = arith.subf %2, %769 : vector<16x128xf32>
    %771 = arith.mulf %764, %764 : vector<16x128xf32>
    %772 = arith.mulf %767, %767 : vector<16x128xf32>
    %773 = arith.addf %771, %772 : vector<16x128xf32>
    %774 = arith.mulf %770, %770 : vector<16x128xf32>
    %775 = arith.addf %773, %774 : vector<16x128xf32>
    %776 = math.sqrt %775 : vector<16x128xf32>
    %cst_164 = arith.constant 1.66666663 : f32
    %777 = vector.broadcast %cst_164 : f32 to vector<16x128xf32>
    %778 = arith.mulf %776, %777 : vector<16x128xf32>
    %cst_165 = arith.constant 1.000000e+00 : f32
    %779 = vector.broadcast %cst_165 : f32 to vector<16x128xf32>
    %780 = arith.subf %779, %778 : vector<16x128xf32>
    %cst_166 = arith.constant 0.000000e+00 : f32
    %781 = vector.broadcast %cst_166 : f32 to vector<16x128xf32>
    %782 = arith.maximumf %780, %781 : vector<16x128xf32>
    %c4_i32_167 = arith.constant 4 : i32
    %783 = vector.broadcast %c4_i32_167 : i32 to vector<16x128xi32>
    %784 = arith.cmpi eq, %273, %783 : vector<16x128xi32>
    %cst_168 = arith.constant 0.000000e+00 : f32
    %785 = vector.broadcast %cst_168 : f32 to vector<16x128xf32>
    %786 = arith.select %784, %782, %785 : vector<16x128xi1>, vector<16x128xf32>
    %cst_169 = arith.constant 0.000000e+00 : f32
    %787 = vector.broadcast %cst_169 : f32 to vector<8x128xf32>
    %c0_170 = arith.constant 0 : index
    %c0_171 = arith.constant 0 : index
    %788 = vector.load %arg2[%c0_170, %c0_171] : memref<128x128xbf16, #tpu.memory_space<vmem>>, vector<8x128xbf16>
    %789 = arith.extf %788 : vector<8x128xbf16> to vector<8x128xf32>
    %790 = vector.extract_strided_slice %786 {offsets = [0, 0], sizes = [1, 128], strides = [1, 1]} : vector<16x128xf32> to vector<1x128xf32>
    %791 = vector.broadcast %790 : vector<1x128xf32> to vector<8x128xf32>
    %792 = arith.mulf %791, %789 : vector<8x128xf32>
    %793 = arith.addf %787, %792 : vector<8x128xf32>
    %c8_172 = arith.constant 8 : index
    %c0_173 = arith.constant 0 : index
    %794 = vector.load %arg2[%c8_172, %c0_173] : memref<128x128xbf16, #tpu.memory_space<vmem>>, vector<8x128xbf16>
    %795 = arith.extf %794 : vector<8x128xbf16> to vector<8x128xf32>
    %796 = vector.extract_strided_slice %786 {offsets = [1, 0], sizes = [1, 128], strides = [1, 1]} : vector<16x128xf32> to vector<1x128xf32>
    %797 = vector.broadcast %796 : vector<1x128xf32> to vector<8x128xf32>
    %798 = arith.mulf %797, %795 : vector<8x128xf32>
    %799 = arith.addf %793, %798 : vector<8x128xf32>
    %c16_174 = arith.constant 16 : index
    %c0_175 = arith.constant 0 : index
    %800 = vector.load %arg2[%c16_174, %c0_175] : memref<128x128xbf16, #tpu.memory_space<vmem>>, vector<8x128xbf16>
    %801 = arith.extf %800 : vector<8x128xbf16> to vector<8x128xf32>
    %802 = vector.extract_strided_slice %786 {offsets = [2, 0], sizes = [1, 128], strides = [1, 1]} : vector<16x128xf32> to vector<1x128xf32>
    %803 = vector.broadcast %802 : vector<1x128xf32> to vector<8x128xf32>
    %804 = arith.mulf %803, %801 : vector<8x128xf32>
    %805 = arith.addf %799, %804 : vector<8x128xf32>
    %c24_176 = arith.constant 24 : index
    %c0_177 = arith.constant 0 : index
    %806 = vector.load %arg2[%c24_176, %c0_177] : memref<128x128xbf16, #tpu.memory_space<vmem>>, vector<8x128xbf16>
    %807 = arith.extf %806 : vector<8x128xbf16> to vector<8x128xf32>
    %808 = vector.extract_strided_slice %786 {offsets = [3, 0], sizes = [1, 128], strides = [1, 1]} : vector<16x128xf32> to vector<1x128xf32>
    %809 = vector.broadcast %808 : vector<1x128xf32> to vector<8x128xf32>
    %810 = arith.mulf %809, %807 : vector<8x128xf32>
    %811 = arith.addf %805, %810 : vector<8x128xf32>
    %c32_178 = arith.constant 32 : index
    %c0_179 = arith.constant 0 : index
    %812 = vector.load %arg2[%c32_178, %c0_179] : memref<128x128xbf16, #tpu.memory_space<vmem>>, vector<8x128xbf16>
    %813 = arith.extf %812 : vector<8x128xbf16> to vector<8x128xf32>
    %814 = vector.extract_strided_slice %786 {offsets = [4, 0], sizes = [1, 128], strides = [1, 1]} : vector<16x128xf32> to vector<1x128xf32>
    %815 = vector.broadcast %814 : vector<1x128xf32> to vector<8x128xf32>
    %816 = arith.mulf %815, %813 : vector<8x128xf32>
    %817 = arith.addf %811, %816 : vector<8x128xf32>
    %c40_180 = arith.constant 40 : index
    %c0_181 = arith.constant 0 : index
    %818 = vector.load %arg2[%c40_180, %c0_181] : memref<128x128xbf16, #tpu.memory_space<vmem>>, vector<8x128xbf16>
    %819 = arith.extf %818 : vector<8x128xbf16> to vector<8x128xf32>
    %820 = vector.extract_strided_slice %786 {offsets = [5, 0], sizes = [1, 128], strides = [1, 1]} : vector<16x128xf32> to vector<1x128xf32>
    %821 = vector.broadcast %820 : vector<1x128xf32> to vector<8x128xf32>
    %822 = arith.mulf %821, %819 : vector<8x128xf32>
    %823 = arith.addf %817, %822 : vector<8x128xf32>
    %c48_182 = arith.constant 48 : index
    %c0_183 = arith.constant 0 : index
    %824 = vector.load %arg2[%c48_182, %c0_183] : memref<128x128xbf16, #tpu.memory_space<vmem>>, vector<8x128xbf16>
    %825 = arith.extf %824 : vector<8x128xbf16> to vector<8x128xf32>
    %826 = vector.extract_strided_slice %786 {offsets = [6, 0], sizes = [1, 128], strides = [1, 1]} : vector<16x128xf32> to vector<1x128xf32>
    %827 = vector.broadcast %826 : vector<1x128xf32> to vector<8x128xf32>
    %828 = arith.mulf %827, %825 : vector<8x128xf32>
    %829 = arith.addf %823, %828 : vector<8x128xf32>
    %c56_184 = arith.constant 56 : index
    %c0_185 = arith.constant 0 : index
    %830 = vector.load %arg2[%c56_184, %c0_185] : memref<128x128xbf16, #tpu.memory_space<vmem>>, vector<8x128xbf16>
    %831 = arith.extf %830 : vector<8x128xbf16> to vector<8x128xf32>
    %832 = vector.extract_strided_slice %786 {offsets = [7, 0], sizes = [1, 128], strides = [1, 1]} : vector<16x128xf32> to vector<1x128xf32>
    %833 = vector.broadcast %832 : vector<1x128xf32> to vector<8x128xf32>
    %834 = arith.mulf %833, %831 : vector<8x128xf32>
    %835 = arith.addf %829, %834 : vector<8x128xf32>
    %c64_186 = arith.constant 64 : index
    %c0_187 = arith.constant 0 : index
    %836 = vector.load %arg2[%c64_186, %c0_187] : memref<128x128xbf16, #tpu.memory_space<vmem>>, vector<8x128xbf16>
    %837 = arith.extf %836 : vector<8x128xbf16> to vector<8x128xf32>
    %838 = vector.extract_strided_slice %786 {offsets = [8, 0], sizes = [1, 128], strides = [1, 1]} : vector<16x128xf32> to vector<1x128xf32>
    %839 = vector.broadcast %838 : vector<1x128xf32> to vector<8x128xf32>
    %840 = arith.mulf %839, %837 : vector<8x128xf32>
    %841 = arith.addf %835, %840 : vector<8x128xf32>
    %c72_188 = arith.constant 72 : index
    %c0_189 = arith.constant 0 : index
    %842 = vector.load %arg2[%c72_188, %c0_189] : memref<128x128xbf16, #tpu.memory_space<vmem>>, vector<8x128xbf16>
    %843 = arith.extf %842 : vector<8x128xbf16> to vector<8x128xf32>
    %844 = vector.extract_strided_slice %786 {offsets = [9, 0], sizes = [1, 128], strides = [1, 1]} : vector<16x128xf32> to vector<1x128xf32>
    %845 = vector.broadcast %844 : vector<1x128xf32> to vector<8x128xf32>
    %846 = arith.mulf %845, %843 : vector<8x128xf32>
    %847 = arith.addf %841, %846 : vector<8x128xf32>
    %c80_190 = arith.constant 80 : index
    %c0_191 = arith.constant 0 : index
    %848 = vector.load %arg2[%c80_190, %c0_191] : memref<128x128xbf16, #tpu.memory_space<vmem>>, vector<8x128xbf16>
    %849 = arith.extf %848 : vector<8x128xbf16> to vector<8x128xf32>
    %850 = vector.extract_strided_slice %786 {offsets = [10, 0], sizes = [1, 128], strides = [1, 1]} : vector<16x128xf32> to vector<1x128xf32>
    %851 = vector.broadcast %850 : vector<1x128xf32> to vector<8x128xf32>
    %852 = arith.mulf %851, %849 : vector<8x128xf32>
    %853 = arith.addf %847, %852 : vector<8x128xf32>
    %c88_192 = arith.constant 88 : index
    %c0_193 = arith.constant 0 : index
    %854 = vector.load %arg2[%c88_192, %c0_193] : memref<128x128xbf16, #tpu.memory_space<vmem>>, vector<8x128xbf16>
    %855 = arith.extf %854 : vector<8x128xbf16> to vector<8x128xf32>
    %856 = vector.extract_strided_slice %786 {offsets = [11, 0], sizes = [1, 128], strides = [1, 1]} : vector<16x128xf32> to vector<1x128xf32>
    %857 = vector.broadcast %856 : vector<1x128xf32> to vector<8x128xf32>
    %858 = arith.mulf %857, %855 : vector<8x128xf32>
    %859 = arith.addf %853, %858 : vector<8x128xf32>
    %c96_194 = arith.constant 96 : index
    %c0_195 = arith.constant 0 : index
    %860 = vector.load %arg2[%c96_194, %c0_195] : memref<128x128xbf16, #tpu.memory_space<vmem>>, vector<8x128xbf16>
    %861 = arith.extf %860 : vector<8x128xbf16> to vector<8x128xf32>
    %862 = vector.extract_strided_slice %786 {offsets = [12, 0], sizes = [1, 128], strides = [1, 1]} : vector<16x128xf32> to vector<1x128xf32>
    %863 = vector.broadcast %862 : vector<1x128xf32> to vector<8x128xf32>
    %864 = arith.mulf %863, %861 : vector<8x128xf32>
    %865 = arith.addf %859, %864 : vector<8x128xf32>
    %c104_196 = arith.constant 104 : index
    %c0_197 = arith.constant 0 : index
    %866 = vector.load %arg2[%c104_196, %c0_197] : memref<128x128xbf16, #tpu.memory_space<vmem>>, vector<8x128xbf16>
    %867 = arith.extf %866 : vector<8x128xbf16> to vector<8x128xf32>
    %868 = vector.extract_strided_slice %786 {offsets = [13, 0], sizes = [1, 128], strides = [1, 1]} : vector<16x128xf32> to vector<1x128xf32>
    %869 = vector.broadcast %868 : vector<1x128xf32> to vector<8x128xf32>
    %870 = arith.mulf %869, %867 : vector<8x128xf32>
    %871 = arith.addf %865, %870 : vector<8x128xf32>
    %c112_198 = arith.constant 112 : index
    %c0_199 = arith.constant 0 : index
    %872 = vector.load %arg2[%c112_198, %c0_199] : memref<128x128xbf16, #tpu.memory_space<vmem>>, vector<8x128xbf16>
    %873 = arith.extf %872 : vector<8x128xbf16> to vector<8x128xf32>
    %874 = vector.extract_strided_slice %786 {offsets = [14, 0], sizes = [1, 128], strides = [1, 1]} : vector<16x128xf32> to vector<1x128xf32>
    %875 = vector.broadcast %874 : vector<1x128xf32> to vector<8x128xf32>
    %876 = arith.mulf %875, %873 : vector<8x128xf32>
    %877 = arith.addf %871, %876 : vector<8x128xf32>
    %c120_200 = arith.constant 120 : index
    %c0_201 = arith.constant 0 : index
    %878 = vector.load %arg2[%c120_200, %c0_201] : memref<128x128xbf16, #tpu.memory_space<vmem>>, vector<8x128xbf16>
    %879 = arith.extf %878 : vector<8x128xbf16> to vector<8x128xf32>
    %880 = vector.extract_strided_slice %786 {offsets = [15, 0], sizes = [1, 128], strides = [1, 1]} : vector<16x128xf32> to vector<1x128xf32>
    %881 = vector.broadcast %880 : vector<1x128xf32> to vector<8x128xf32>
    %882 = arith.mulf %881, %879 : vector<8x128xf32>
    %883 = arith.addf %877, %882 : vector<8x128xf32>
    %c5_202 = arith.constant 5 : index
    %884 = memref.load %arg3[%c5_202] : memref<45xf32, #tpu.memory_space<smem>>
    %885 = vector.broadcast %884 : f32 to vector<16x128xf32>
    %886 = arith.subf %0, %885 : vector<16x128xf32>
    %c20_203 = arith.constant 20 : index
    %887 = memref.load %arg3[%c20_203] : memref<45xf32, #tpu.memory_space<smem>>
    %888 = vector.broadcast %887 : f32 to vector<16x128xf32>
    %889 = arith.subf %1, %888 : vector<16x128xf32>
    %c35_204 = arith.constant 35 : index
    %890 = memref.load %arg3[%c35_204] : memref<45xf32, #tpu.memory_space<smem>>
    %891 = vector.broadcast %890 : f32 to vector<16x128xf32>
    %892 = arith.subf %2, %891 : vector<16x128xf32>
    %893 = arith.mulf %886, %886 : vector<16x128xf32>
    %894 = arith.mulf %889, %889 : vector<16x128xf32>
    %895 = arith.addf %893, %894 : vector<16x128xf32>
    %896 = arith.mulf %892, %892 : vector<16x128xf32>
    %897 = arith.addf %895, %896 : vector<16x128xf32>
    %898 = math.sqrt %897 : vector<16x128xf32>
    %cst_205 = arith.constant 1.66666663 : f32
    %899 = vector.broadcast %cst_205 : f32 to vector<16x128xf32>
    %900 = arith.mulf %898, %899 : vector<16x128xf32>
    %cst_206 = arith.constant 1.000000e+00 : f32
    %901 = vector.broadcast %cst_206 : f32 to vector<16x128xf32>
    %902 = arith.subf %901, %900 : vector<16x128xf32>
    %cst_207 = arith.constant 0.000000e+00 : f32
    %903 = vector.broadcast %cst_207 : f32 to vector<16x128xf32>
    %904 = arith.maximumf %902, %903 : vector<16x128xf32>
    %c5_i32_208 = arith.constant 5 : i32
    %905 = vector.broadcast %c5_i32_208 : i32 to vector<16x128xi32>
    %906 = arith.cmpi eq, %273, %905 : vector<16x128xi32>
    %cst_209 = arith.constant 0.000000e+00 : f32
    %907 = vector.broadcast %cst_209 : f32 to vector<16x128xf32>
    %908 = arith.select %906, %904, %907 : vector<16x128xi1>, vector<16x128xf32>
    %cst_210 = arith.constant 0.000000e+00 : f32
    %909 = vector.broadcast %cst_210 : f32 to vector<8x128xf32>
    %c0_211 = arith.constant 0 : index
    %c0_212 = arith.constant 0 : index
    %910 = vector.load %arg2[%c0_211, %c0_212] : memref<128x128xbf16, #tpu.memory_space<vmem>>, vector<8x128xbf16>
    %911 = arith.extf %910 : vector<8x128xbf16> to vector<8x128xf32>
    %912 = vector.extract_strided_slice %908 {offsets = [0, 0], sizes = [1, 128], strides = [1, 1]} : vector<16x128xf32> to vector<1x128xf32>
    %913 = vector.broadcast %912 : vector<1x128xf32> to vector<8x128xf32>
    %914 = arith.mulf %913, %911 : vector<8x128xf32>
    %915 = arith.addf %909, %914 : vector<8x128xf32>
    %c8_213 = arith.constant 8 : index
    %c0_214 = arith.constant 0 : index
    %916 = vector.load %arg2[%c8_213, %c0_214] : memref<128x128xbf16, #tpu.memory_space<vmem>>, vector<8x128xbf16>
    %917 = arith.extf %916 : vector<8x128xbf16> to vector<8x128xf32>
    %918 = vector.extract_strided_slice %908 {offsets = [1, 0], sizes = [1, 128], strides = [1, 1]} : vector<16x128xf32> to vector<1x128xf32>
    %919 = vector.broadcast %918 : vector<1x128xf32> to vector<8x128xf32>
    %920 = arith.mulf %919, %917 : vector<8x128xf32>
    %921 = arith.addf %915, %920 : vector<8x128xf32>
    %c16_215 = arith.constant 16 : index
    %c0_216 = arith.constant 0 : index
    %922 = vector.load %arg2[%c16_215, %c0_216] : memref<128x128xbf16, #tpu.memory_space<vmem>>, vector<8x128xbf16>
    %923 = arith.extf %922 : vector<8x128xbf16> to vector<8x128xf32>
    %924 = vector.extract_strided_slice %908 {offsets = [2, 0], sizes = [1, 128], strides = [1, 1]} : vector<16x128xf32> to vector<1x128xf32>
    %925 = vector.broadcast %924 : vector<1x128xf32> to vector<8x128xf32>
    %926 = arith.mulf %925, %923 : vector<8x128xf32>
    %927 = arith.addf %921, %926 : vector<8x128xf32>
    %c24_217 = arith.constant 24 : index
    %c0_218 = arith.constant 0 : index
    %928 = vector.load %arg2[%c24_217, %c0_218] : memref<128x128xbf16, #tpu.memory_space<vmem>>, vector<8x128xbf16>
    %929 = arith.extf %928 : vector<8x128xbf16> to vector<8x128xf32>
    %930 = vector.extract_strided_slice %908 {offsets = [3, 0], sizes = [1, 128], strides = [1, 1]} : vector<16x128xf32> to vector<1x128xf32>
    %931 = vector.broadcast %930 : vector<1x128xf32> to vector<8x128xf32>
    %932 = arith.mulf %931, %929 : vector<8x128xf32>
    %933 = arith.addf %927, %932 : vector<8x128xf32>
    %c32_219 = arith.constant 32 : index
    %c0_220 = arith.constant 0 : index
    %934 = vector.load %arg2[%c32_219, %c0_220] : memref<128x128xbf16, #tpu.memory_space<vmem>>, vector<8x128xbf16>
    %935 = arith.extf %934 : vector<8x128xbf16> to vector<8x128xf32>
    %936 = vector.extract_strided_slice %908 {offsets = [4, 0], sizes = [1, 128], strides = [1, 1]} : vector<16x128xf32> to vector<1x128xf32>
    %937 = vector.broadcast %936 : vector<1x128xf32> to vector<8x128xf32>
    %938 = arith.mulf %937, %935 : vector<8x128xf32>
    %939 = arith.addf %933, %938 : vector<8x128xf32>
    %c40_221 = arith.constant 40 : index
    %c0_222 = arith.constant 0 : index
    %940 = vector.load %arg2[%c40_221, %c0_222] : memref<128x128xbf16, #tpu.memory_space<vmem>>, vector<8x128xbf16>
    %941 = arith.extf %940 : vector<8x128xbf16> to vector<8x128xf32>
    %942 = vector.extract_strided_slice %908 {offsets = [5, 0], sizes = [1, 128], strides = [1, 1]} : vector<16x128xf32> to vector<1x128xf32>
    %943 = vector.broadcast %942 : vector<1x128xf32> to vector<8x128xf32>
    %944 = arith.mulf %943, %941 : vector<8x128xf32>
    %945 = arith.addf %939, %944 : vector<8x128xf32>
    %c48_223 = arith.constant 48 : index
    %c0_224 = arith.constant 0 : index
    %946 = vector.load %arg2[%c48_223, %c0_224] : memref<128x128xbf16, #tpu.memory_space<vmem>>, vector<8x128xbf16>
    %947 = arith.extf %946 : vector<8x128xbf16> to vector<8x128xf32>
    %948 = vector.extract_strided_slice %908 {offsets = [6, 0], sizes = [1, 128], strides = [1, 1]} : vector<16x128xf32> to vector<1x128xf32>
    %949 = vector.broadcast %948 : vector<1x128xf32> to vector<8x128xf32>
    %950 = arith.mulf %949, %947 : vector<8x128xf32>
    %951 = arith.addf %945, %950 : vector<8x128xf32>
    %c56_225 = arith.constant 56 : index
    %c0_226 = arith.constant 0 : index
    %952 = vector.load %arg2[%c56_225, %c0_226] : memref<128x128xbf16, #tpu.memory_space<vmem>>, vector<8x128xbf16>
    %953 = arith.extf %952 : vector<8x128xbf16> to vector<8x128xf32>
    %954 = vector.extract_strided_slice %908 {offsets = [7, 0], sizes = [1, 128], strides = [1, 1]} : vector<16x128xf32> to vector<1x128xf32>
    %955 = vector.broadcast %954 : vector<1x128xf32> to vector<8x128xf32>
    %956 = arith.mulf %955, %953 : vector<8x128xf32>
    %957 = arith.addf %951, %956 : vector<8x128xf32>
    %c64_227 = arith.constant 64 : index
    %c0_228 = arith.constant 0 : index
    %958 = vector.load %arg2[%c64_227, %c0_228] : memref<128x128xbf16, #tpu.memory_space<vmem>>, vector<8x128xbf16>
    %959 = arith.extf %958 : vector<8x128xbf16> to vector<8x128xf32>
    %960 = vector.extract_strided_slice %908 {offsets = [8, 0], sizes = [1, 128], strides = [1, 1]} : vector<16x128xf32> to vector<1x128xf32>
    %961 = vector.broadcast %960 : vector<1x128xf32> to vector<8x128xf32>
    %962 = arith.mulf %961, %959 : vector<8x128xf32>
    %963 = arith.addf %957, %962 : vector<8x128xf32>
    %c72_229 = arith.constant 72 : index
    %c0_230 = arith.constant 0 : index
    %964 = vector.load %arg2[%c72_229, %c0_230] : memref<128x128xbf16, #tpu.memory_space<vmem>>, vector<8x128xbf16>
    %965 = arith.extf %964 : vector<8x128xbf16> to vector<8x128xf32>
    %966 = vector.extract_strided_slice %908 {offsets = [9, 0], sizes = [1, 128], strides = [1, 1]} : vector<16x128xf32> to vector<1x128xf32>
    %967 = vector.broadcast %966 : vector<1x128xf32> to vector<8x128xf32>
    %968 = arith.mulf %967, %965 : vector<8x128xf32>
    %969 = arith.addf %963, %968 : vector<8x128xf32>
    %c80_231 = arith.constant 80 : index
    %c0_232 = arith.constant 0 : index
    %970 = vector.load %arg2[%c80_231, %c0_232] : memref<128x128xbf16, #tpu.memory_space<vmem>>, vector<8x128xbf16>
    %971 = arith.extf %970 : vector<8x128xbf16> to vector<8x128xf32>
    %972 = vector.extract_strided_slice %908 {offsets = [10, 0], sizes = [1, 128], strides = [1, 1]} : vector<16x128xf32> to vector<1x128xf32>
    %973 = vector.broadcast %972 : vector<1x128xf32> to vector<8x128xf32>
    %974 = arith.mulf %973, %971 : vector<8x128xf32>
    %975 = arith.addf %969, %974 : vector<8x128xf32>
    %c88_233 = arith.constant 88 : index
    %c0_234 = arith.constant 0 : index
    %976 = vector.load %arg2[%c88_233, %c0_234] : memref<128x128xbf16, #tpu.memory_space<vmem>>, vector<8x128xbf16>
    %977 = arith.extf %976 : vector<8x128xbf16> to vector<8x128xf32>
    %978 = vector.extract_strided_slice %908 {offsets = [11, 0], sizes = [1, 128], strides = [1, 1]} : vector<16x128xf32> to vector<1x128xf32>
    %979 = vector.broadcast %978 : vector<1x128xf32> to vector<8x128xf32>
    %980 = arith.mulf %979, %977 : vector<8x128xf32>
    %981 = arith.addf %975, %980 : vector<8x128xf32>
    %c96_235 = arith.constant 96 : index
    %c0_236 = arith.constant 0 : index
    %982 = vector.load %arg2[%c96_235, %c0_236] : memref<128x128xbf16, #tpu.memory_space<vmem>>, vector<8x128xbf16>
    %983 = arith.extf %982 : vector<8x128xbf16> to vector<8x128xf32>
    %984 = vector.extract_strided_slice %908 {offsets = [12, 0], sizes = [1, 128], strides = [1, 1]} : vector<16x128xf32> to vector<1x128xf32>
    %985 = vector.broadcast %984 : vector<1x128xf32> to vector<8x128xf32>
    %986 = arith.mulf %985, %983 : vector<8x128xf32>
    %987 = arith.addf %981, %986 : vector<8x128xf32>
    %c104_237 = arith.constant 104 : index
    %c0_238 = arith.constant 0 : index
    %988 = vector.load %arg2[%c104_237, %c0_238] : memref<128x128xbf16, #tpu.memory_space<vmem>>, vector<8x128xbf16>
    %989 = arith.extf %988 : vector<8x128xbf16> to vector<8x128xf32>
    %990 = vector.extract_strided_slice %908 {offsets = [13, 0], sizes = [1, 128], strides = [1, 1]} : vector<16x128xf32> to vector<1x128xf32>
    %991 = vector.broadcast %990 : vector<1x128xf32> to vector<8x128xf32>
    %992 = arith.mulf %991, %989 : vector<8x128xf32>
    %993 = arith.addf %987, %992 : vector<8x128xf32>
    %c112_239 = arith.constant 112 : index
    %c0_240 = arith.constant 0 : index
    %994 = vector.load %arg2[%c112_239, %c0_240] : memref<128x128xbf16, #tpu.memory_space<vmem>>, vector<8x128xbf16>
    %995 = arith.extf %994 : vector<8x128xbf16> to vector<8x128xf32>
    %996 = vector.extract_strided_slice %908 {offsets = [14, 0], sizes = [1, 128], strides = [1, 1]} : vector<16x128xf32> to vector<1x128xf32>
    %997 = vector.broadcast %996 : vector<1x128xf32> to vector<8x128xf32>
    %998 = arith.mulf %997, %995 : vector<8x128xf32>
    %999 = arith.addf %993, %998 : vector<8x128xf32>
    %c120_241 = arith.constant 120 : index
    %c0_242 = arith.constant 0 : index
    %1000 = vector.load %arg2[%c120_241, %c0_242] : memref<128x128xbf16, #tpu.memory_space<vmem>>, vector<8x128xbf16>
    %1001 = arith.extf %1000 : vector<8x128xbf16> to vector<8x128xf32>
    %1002 = vector.extract_strided_slice %908 {offsets = [15, 0], sizes = [1, 128], strides = [1, 1]} : vector<16x128xf32> to vector<1x128xf32>
    %1003 = vector.broadcast %1002 : vector<1x128xf32> to vector<8x128xf32>
    %1004 = arith.mulf %1003, %1001 : vector<8x128xf32>
    %1005 = arith.addf %999, %1004 : vector<8x128xf32>
    %c6_243 = arith.constant 6 : index
    %1006 = memref.load %arg3[%c6_243] : memref<45xf32, #tpu.memory_space<smem>>
    %1007 = vector.broadcast %1006 : f32 to vector<16x128xf32>
    %1008 = arith.subf %0, %1007 : vector<16x128xf32>
    %c21_244 = arith.constant 21 : index
    %1009 = memref.load %arg3[%c21_244] : memref<45xf32, #tpu.memory_space<smem>>
    %1010 = vector.broadcast %1009 : f32 to vector<16x128xf32>
    %1011 = arith.subf %1, %1010 : vector<16x128xf32>
    %c36_245 = arith.constant 36 : index
    %1012 = memref.load %arg3[%c36_245] : memref<45xf32, #tpu.memory_space<smem>>
    %1013 = vector.broadcast %1012 : f32 to vector<16x128xf32>
    %1014 = arith.subf %2, %1013 : vector<16x128xf32>
    %1015 = arith.mulf %1008, %1008 : vector<16x128xf32>
    %1016 = arith.mulf %1011, %1011 : vector<16x128xf32>
    %1017 = arith.addf %1015, %1016 : vector<16x128xf32>
    %1018 = arith.mulf %1014, %1014 : vector<16x128xf32>
    %1019 = arith.addf %1017, %1018 : vector<16x128xf32>
    %1020 = math.sqrt %1019 : vector<16x128xf32>
    %cst_246 = arith.constant 1.66666663 : f32
    %1021 = vector.broadcast %cst_246 : f32 to vector<16x128xf32>
    %1022 = arith.mulf %1020, %1021 : vector<16x128xf32>
    %cst_247 = arith.constant 1.000000e+00 : f32
    %1023 = vector.broadcast %cst_247 : f32 to vector<16x128xf32>
    %1024 = arith.subf %1023, %1022 : vector<16x128xf32>
    %cst_248 = arith.constant 0.000000e+00 : f32
    %1025 = vector.broadcast %cst_248 : f32 to vector<16x128xf32>
    %1026 = arith.maximumf %1024, %1025 : vector<16x128xf32>
    %c6_i32_249 = arith.constant 6 : i32
    %1027 = vector.broadcast %c6_i32_249 : i32 to vector<16x128xi32>
    %1028 = arith.cmpi eq, %273, %1027 : vector<16x128xi32>
    %cst_250 = arith.constant 0.000000e+00 : f32
    %1029 = vector.broadcast %cst_250 : f32 to vector<16x128xf32>
    %1030 = arith.select %1028, %1026, %1029 : vector<16x128xi1>, vector<16x128xf32>
    %cst_251 = arith.constant 0.000000e+00 : f32
    %1031 = vector.broadcast %cst_251 : f32 to vector<8x128xf32>
    %c0_252 = arith.constant 0 : index
    %c0_253 = arith.constant 0 : index
    %1032 = vector.load %arg2[%c0_252, %c0_253] : memref<128x128xbf16, #tpu.memory_space<vmem>>, vector<8x128xbf16>
    %1033 = arith.extf %1032 : vector<8x128xbf16> to vector<8x128xf32>
    %1034 = vector.extract_strided_slice %1030 {offsets = [0, 0], sizes = [1, 128], strides = [1, 1]} : vector<16x128xf32> to vector<1x128xf32>
    %1035 = vector.broadcast %1034 : vector<1x128xf32> to vector<8x128xf32>
    %1036 = arith.mulf %1035, %1033 : vector<8x128xf32>
    %1037 = arith.addf %1031, %1036 : vector<8x128xf32>
    %c8_254 = arith.constant 8 : index
    %c0_255 = arith.constant 0 : index
    %1038 = vector.load %arg2[%c8_254, %c0_255] : memref<128x128xbf16, #tpu.memory_space<vmem>>, vector<8x128xbf16>
    %1039 = arith.extf %1038 : vector<8x128xbf16> to vector<8x128xf32>
    %1040 = vector.extract_strided_slice %1030 {offsets = [1, 0], sizes = [1, 128], strides = [1, 1]} : vector<16x128xf32> to vector<1x128xf32>
    %1041 = vector.broadcast %1040 : vector<1x128xf32> to vector<8x128xf32>
    %1042 = arith.mulf %1041, %1039 : vector<8x128xf32>
    %1043 = arith.addf %1037, %1042 : vector<8x128xf32>
    %c16_256 = arith.constant 16 : index
    %c0_257 = arith.constant 0 : index
    %1044 = vector.load %arg2[%c16_256, %c0_257] : memref<128x128xbf16, #tpu.memory_space<vmem>>, vector<8x128xbf16>
    %1045 = arith.extf %1044 : vector<8x128xbf16> to vector<8x128xf32>
    %1046 = vector.extract_strided_slice %1030 {offsets = [2, 0], sizes = [1, 128], strides = [1, 1]} : vector<16x128xf32> to vector<1x128xf32>
    %1047 = vector.broadcast %1046 : vector<1x128xf32> to vector<8x128xf32>
    %1048 = arith.mulf %1047, %1045 : vector<8x128xf32>
    %1049 = arith.addf %1043, %1048 : vector<8x128xf32>
    %c24_258 = arith.constant 24 : index
    %c0_259 = arith.constant 0 : index
    %1050 = vector.load %arg2[%c24_258, %c0_259] : memref<128x128xbf16, #tpu.memory_space<vmem>>, vector<8x128xbf16>
    %1051 = arith.extf %1050 : vector<8x128xbf16> to vector<8x128xf32>
    %1052 = vector.extract_strided_slice %1030 {offsets = [3, 0], sizes = [1, 128], strides = [1, 1]} : vector<16x128xf32> to vector<1x128xf32>
    %1053 = vector.broadcast %1052 : vector<1x128xf32> to vector<8x128xf32>
    %1054 = arith.mulf %1053, %1051 : vector<8x128xf32>
    %1055 = arith.addf %1049, %1054 : vector<8x128xf32>
    %c32_260 = arith.constant 32 : index
    %c0_261 = arith.constant 0 : index
    %1056 = vector.load %arg2[%c32_260, %c0_261] : memref<128x128xbf16, #tpu.memory_space<vmem>>, vector<8x128xbf16>
    %1057 = arith.extf %1056 : vector<8x128xbf16> to vector<8x128xf32>
    %1058 = vector.extract_strided_slice %1030 {offsets = [4, 0], sizes = [1, 128], strides = [1, 1]} : vector<16x128xf32> to vector<1x128xf32>
    %1059 = vector.broadcast %1058 : vector<1x128xf32> to vector<8x128xf32>
    %1060 = arith.mulf %1059, %1057 : vector<8x128xf32>
    %1061 = arith.addf %1055, %1060 : vector<8x128xf32>
    %c40_262 = arith.constant 40 : index
    %c0_263 = arith.constant 0 : index
    %1062 = vector.load %arg2[%c40_262, %c0_263] : memref<128x128xbf16, #tpu.memory_space<vmem>>, vector<8x128xbf16>
    %1063 = arith.extf %1062 : vector<8x128xbf16> to vector<8x128xf32>
    %1064 = vector.extract_strided_slice %1030 {offsets = [5, 0], sizes = [1, 128], strides = [1, 1]} : vector<16x128xf32> to vector<1x128xf32>
    %1065 = vector.broadcast %1064 : vector<1x128xf32> to vector<8x128xf32>
    %1066 = arith.mulf %1065, %1063 : vector<8x128xf32>
    %1067 = arith.addf %1061, %1066 : vector<8x128xf32>
    %c48_264 = arith.constant 48 : index
    %c0_265 = arith.constant 0 : index
    %1068 = vector.load %arg2[%c48_264, %c0_265] : memref<128x128xbf16, #tpu.memory_space<vmem>>, vector<8x128xbf16>
    %1069 = arith.extf %1068 : vector<8x128xbf16> to vector<8x128xf32>
    %1070 = vector.extract_strided_slice %1030 {offsets = [6, 0], sizes = [1, 128], strides = [1, 1]} : vector<16x128xf32> to vector<1x128xf32>
    %1071 = vector.broadcast %1070 : vector<1x128xf32> to vector<8x128xf32>
    %1072 = arith.mulf %1071, %1069 : vector<8x128xf32>
    %1073 = arith.addf %1067, %1072 : vector<8x128xf32>
    %c56_266 = arith.constant 56 : index
    %c0_267 = arith.constant 0 : index
    %1074 = vector.load %arg2[%c56_266, %c0_267] : memref<128x128xbf16, #tpu.memory_space<vmem>>, vector<8x128xbf16>
    %1075 = arith.extf %1074 : vector<8x128xbf16> to vector<8x128xf32>
    %1076 = vector.extract_strided_slice %1030 {offsets = [7, 0], sizes = [1, 128], strides = [1, 1]} : vector<16x128xf32> to vector<1x128xf32>
    %1077 = vector.broadcast %1076 : vector<1x128xf32> to vector<8x128xf32>
    %1078 = arith.mulf %1077, %1075 : vector<8x128xf32>
    %1079 = arith.addf %1073, %1078 : vector<8x128xf32>
    %c64_268 = arith.constant 64 : index
    %c0_269 = arith.constant 0 : index
    %1080 = vector.load %arg2[%c64_268, %c0_269] : memref<128x128xbf16, #tpu.memory_space<vmem>>, vector<8x128xbf16>
    %1081 = arith.extf %1080 : vector<8x128xbf16> to vector<8x128xf32>
    %1082 = vector.extract_strided_slice %1030 {offsets = [8, 0], sizes = [1, 128], strides = [1, 1]} : vector<16x128xf32> to vector<1x128xf32>
    %1083 = vector.broadcast %1082 : vector<1x128xf32> to vector<8x128xf32>
    %1084 = arith.mulf %1083, %1081 : vector<8x128xf32>
    %1085 = arith.addf %1079, %1084 : vector<8x128xf32>
    %c72_270 = arith.constant 72 : index
    %c0_271 = arith.constant 0 : index
    %1086 = vector.load %arg2[%c72_270, %c0_271] : memref<128x128xbf16, #tpu.memory_space<vmem>>, vector<8x128xbf16>
    %1087 = arith.extf %1086 : vector<8x128xbf16> to vector<8x128xf32>
    %1088 = vector.extract_strided_slice %1030 {offsets = [9, 0], sizes = [1, 128], strides = [1, 1]} : vector<16x128xf32> to vector<1x128xf32>
    %1089 = vector.broadcast %1088 : vector<1x128xf32> to vector<8x128xf32>
    %1090 = arith.mulf %1089, %1087 : vector<8x128xf32>
    %1091 = arith.addf %1085, %1090 : vector<8x128xf32>
    %c80_272 = arith.constant 80 : index
    %c0_273 = arith.constant 0 : index
    %1092 = vector.load %arg2[%c80_272, %c0_273] : memref<128x128xbf16, #tpu.memory_space<vmem>>, vector<8x128xbf16>
    %1093 = arith.extf %1092 : vector<8x128xbf16> to vector<8x128xf32>
    %1094 = vector.extract_strided_slice %1030 {offsets = [10, 0], sizes = [1, 128], strides = [1, 1]} : vector<16x128xf32> to vector<1x128xf32>
    %1095 = vector.broadcast %1094 : vector<1x128xf32> to vector<8x128xf32>
    %1096 = arith.mulf %1095, %1093 : vector<8x128xf32>
    %1097 = arith.addf %1091, %1096 : vector<8x128xf32>
    %c88_274 = arith.constant 88 : index
    %c0_275 = arith.constant 0 : index
    %1098 = vector.load %arg2[%c88_274, %c0_275] : memref<128x128xbf16, #tpu.memory_space<vmem>>, vector<8x128xbf16>
    %1099 = arith.extf %1098 : vector<8x128xbf16> to vector<8x128xf32>
    %1100 = vector.extract_strided_slice %1030 {offsets = [11, 0], sizes = [1, 128], strides = [1, 1]} : vector<16x128xf32> to vector<1x128xf32>
    %1101 = vector.broadcast %1100 : vector<1x128xf32> to vector<8x128xf32>
    %1102 = arith.mulf %1101, %1099 : vector<8x128xf32>
    %1103 = arith.addf %1097, %1102 : vector<8x128xf32>
    %c96_276 = arith.constant 96 : index
    %c0_277 = arith.constant 0 : index
    %1104 = vector.load %arg2[%c96_276, %c0_277] : memref<128x128xbf16, #tpu.memory_space<vmem>>, vector<8x128xbf16>
    %1105 = arith.extf %1104 : vector<8x128xbf16> to vector<8x128xf32>
    %1106 = vector.extract_strided_slice %1030 {offsets = [12, 0], sizes = [1, 128], strides = [1, 1]} : vector<16x128xf32> to vector<1x128xf32>
    %1107 = vector.broadcast %1106 : vector<1x128xf32> to vector<8x128xf32>
    %1108 = arith.mulf %1107, %1105 : vector<8x128xf32>
    %1109 = arith.addf %1103, %1108 : vector<8x128xf32>
    %c104_278 = arith.constant 104 : index
    %c0_279 = arith.constant 0 : index
    %1110 = vector.load %arg2[%c104_278, %c0_279] : memref<128x128xbf16, #tpu.memory_space<vmem>>, vector<8x128xbf16>
    %1111 = arith.extf %1110 : vector<8x128xbf16> to vector<8x128xf32>
    %1112 = vector.extract_strided_slice %1030 {offsets = [13, 0], sizes = [1, 128], strides = [1, 1]} : vector<16x128xf32> to vector<1x128xf32>
    %1113 = vector.broadcast %1112 : vector<1x128xf32> to vector<8x128xf32>
    %1114 = arith.mulf %1113, %1111 : vector<8x128xf32>
    %1115 = arith.addf %1109, %1114 : vector<8x128xf32>
    %c112_280 = arith.constant 112 : index
    %c0_281 = arith.constant 0 : index
    %1116 = vector.load %arg2[%c112_280, %c0_281] : memref<128x128xbf16, #tpu.memory_space<vmem>>, vector<8x128xbf16>
    %1117 = arith.extf %1116 : vector<8x128xbf16> to vector<8x128xf32>
    %1118 = vector.extract_strided_slice %1030 {offsets = [14, 0], sizes = [1, 128], strides = [1, 1]} : vector<16x128xf32> to vector<1x128xf32>
    %1119 = vector.broadcast %1118 : vector<1x128xf32> to vector<8x128xf32>
    %1120 = arith.mulf %1119, %1117 : vector<8x128xf32>
    %1121 = arith.addf %1115, %1120 : vector<8x128xf32>
    %c120_282 = arith.constant 120 : index
    %c0_283 = arith.constant 0 : index
    %1122 = vector.load %arg2[%c120_282, %c0_283] : memref<128x128xbf16, #tpu.memory_space<vmem>>, vector<8x128xbf16>
    %1123 = arith.extf %1122 : vector<8x128xbf16> to vector<8x128xf32>
    %1124 = vector.extract_strided_slice %1030 {offsets = [15, 0], sizes = [1, 128], strides = [1, 1]} : vector<16x128xf32> to vector<1x128xf32>
    %1125 = vector.broadcast %1124 : vector<1x128xf32> to vector<8x128xf32>
    %1126 = arith.mulf %1125, %1123 : vector<8x128xf32>
    %1127 = arith.addf %1121, %1126 : vector<8x128xf32>
    %c7_284 = arith.constant 7 : index
    %1128 = memref.load %arg3[%c7_284] : memref<45xf32, #tpu.memory_space<smem>>
    %1129 = vector.broadcast %1128 : f32 to vector<16x128xf32>
    %1130 = arith.subf %0, %1129 : vector<16x128xf32>
    %c22_285 = arith.constant 22 : index
    %1131 = memref.load %arg3[%c22_285] : memref<45xf32, #tpu.memory_space<smem>>
    %1132 = vector.broadcast %1131 : f32 to vector<16x128xf32>
    %1133 = arith.subf %1, %1132 : vector<16x128xf32>
    %c37_286 = arith.constant 37 : index
    %1134 = memref.load %arg3[%c37_286] : memref<45xf32, #tpu.memory_space<smem>>
    %1135 = vector.broadcast %1134 : f32 to vector<16x128xf32>
    %1136 = arith.subf %2, %1135 : vector<16x128xf32>
    %1137 = arith.mulf %1130, %1130 : vector<16x128xf32>
    %1138 = arith.mulf %1133, %1133 : vector<16x128xf32>
    %1139 = arith.addf %1137, %1138 : vector<16x128xf32>
    %1140 = arith.mulf %1136, %1136 : vector<16x128xf32>
    %1141 = arith.addf %1139, %1140 : vector<16x128xf32>
    %1142 = math.sqrt %1141 : vector<16x128xf32>
    %cst_287 = arith.constant 1.66666663 : f32
    %1143 = vector.broadcast %cst_287 : f32 to vector<16x128xf32>
    %1144 = arith.mulf %1142, %1143 : vector<16x128xf32>
    %cst_288 = arith.constant 1.000000e+00 : f32
    %1145 = vector.broadcast %cst_288 : f32 to vector<16x128xf32>
    %1146 = arith.subf %1145, %1144 : vector<16x128xf32>
    %cst_289 = arith.constant 0.000000e+00 : f32
    %1147 = vector.broadcast %cst_289 : f32 to vector<16x128xf32>
    %1148 = arith.maximumf %1146, %1147 : vector<16x128xf32>
    %c7_i32_290 = arith.constant 7 : i32
    %1149 = vector.broadcast %c7_i32_290 : i32 to vector<16x128xi32>
    %1150 = arith.cmpi eq, %273, %1149 : vector<16x128xi32>
    %cst_291 = arith.constant 0.000000e+00 : f32
    %1151 = vector.broadcast %cst_291 : f32 to vector<16x128xf32>
    %1152 = arith.select %1150, %1148, %1151 : vector<16x128xi1>, vector<16x128xf32>
    %cst_292 = arith.constant 0.000000e+00 : f32
    %1153 = vector.broadcast %cst_292 : f32 to vector<8x128xf32>
    %c0_293 = arith.constant 0 : index
    %c0_294 = arith.constant 0 : index
    %1154 = vector.load %arg2[%c0_293, %c0_294] : memref<128x128xbf16, #tpu.memory_space<vmem>>, vector<8x128xbf16>
    %1155 = arith.extf %1154 : vector<8x128xbf16> to vector<8x128xf32>
    %1156 = vector.extract_strided_slice %1152 {offsets = [0, 0], sizes = [1, 128], strides = [1, 1]} : vector<16x128xf32> to vector<1x128xf32>
    %1157 = vector.broadcast %1156 : vector<1x128xf32> to vector<8x128xf32>
    %1158 = arith.mulf %1157, %1155 : vector<8x128xf32>
    %1159 = arith.addf %1153, %1158 : vector<8x128xf32>
    %c8_295 = arith.constant 8 : index
    %c0_296 = arith.constant 0 : index
    %1160 = vector.load %arg2[%c8_295, %c0_296] : memref<128x128xbf16, #tpu.memory_space<vmem>>, vector<8x128xbf16>
    %1161 = arith.extf %1160 : vector<8x128xbf16> to vector<8x128xf32>
    %1162 = vector.extract_strided_slice %1152 {offsets = [1, 0], sizes = [1, 128], strides = [1, 1]} : vector<16x128xf32> to vector<1x128xf32>
    %1163 = vector.broadcast %1162 : vector<1x128xf32> to vector<8x128xf32>
    %1164 = arith.mulf %1163, %1161 : vector<8x128xf32>
    %1165 = arith.addf %1159, %1164 : vector<8x128xf32>
    %c16_297 = arith.constant 16 : index
    %c0_298 = arith.constant 0 : index
    %1166 = vector.load %arg2[%c16_297, %c0_298] : memref<128x128xbf16, #tpu.memory_space<vmem>>, vector<8x128xbf16>
    %1167 = arith.extf %1166 : vector<8x128xbf16> to vector<8x128xf32>
    %1168 = vector.extract_strided_slice %1152 {offsets = [2, 0], sizes = [1, 128], strides = [1, 1]} : vector<16x128xf32> to vector<1x128xf32>
    %1169 = vector.broadcast %1168 : vector<1x128xf32> to vector<8x128xf32>
    %1170 = arith.mulf %1169, %1167 : vector<8x128xf32>
    %1171 = arith.addf %1165, %1170 : vector<8x128xf32>
    %c24_299 = arith.constant 24 : index
    %c0_300 = arith.constant 0 : index
    %1172 = vector.load %arg2[%c24_299, %c0_300] : memref<128x128xbf16, #tpu.memory_space<vmem>>, vector<8x128xbf16>
    %1173 = arith.extf %1172 : vector<8x128xbf16> to vector<8x128xf32>
    %1174 = vector.extract_strided_slice %1152 {offsets = [3, 0], sizes = [1, 128], strides = [1, 1]} : vector<16x128xf32> to vector<1x128xf32>
    %1175 = vector.broadcast %1174 : vector<1x128xf32> to vector<8x128xf32>
    %1176 = arith.mulf %1175, %1173 : vector<8x128xf32>
    %1177 = arith.addf %1171, %1176 : vector<8x128xf32>
    %c32_301 = arith.constant 32 : index
    %c0_302 = arith.constant 0 : index
    %1178 = vector.load %arg2[%c32_301, %c0_302] : memref<128x128xbf16, #tpu.memory_space<vmem>>, vector<8x128xbf16>
    %1179 = arith.extf %1178 : vector<8x128xbf16> to vector<8x128xf32>
    %1180 = vector.extract_strided_slice %1152 {offsets = [4, 0], sizes = [1, 128], strides = [1, 1]} : vector<16x128xf32> to vector<1x128xf32>
    %1181 = vector.broadcast %1180 : vector<1x128xf32> to vector<8x128xf32>
    %1182 = arith.mulf %1181, %1179 : vector<8x128xf32>
    %1183 = arith.addf %1177, %1182 : vector<8x128xf32>
    %c40_303 = arith.constant 40 : index
    %c0_304 = arith.constant 0 : index
    %1184 = vector.load %arg2[%c40_303, %c0_304] : memref<128x128xbf16, #tpu.memory_space<vmem>>, vector<8x128xbf16>
    %1185 = arith.extf %1184 : vector<8x128xbf16> to vector<8x128xf32>
    %1186 = vector.extract_strided_slice %1152 {offsets = [5, 0], sizes = [1, 128], strides = [1, 1]} : vector<16x128xf32> to vector<1x128xf32>
    %1187 = vector.broadcast %1186 : vector<1x128xf32> to vector<8x128xf32>
    %1188 = arith.mulf %1187, %1185 : vector<8x128xf32>
    %1189 = arith.addf %1183, %1188 : vector<8x128xf32>
    %c48_305 = arith.constant 48 : index
    %c0_306 = arith.constant 0 : index
    %1190 = vector.load %arg2[%c48_305, %c0_306] : memref<128x128xbf16, #tpu.memory_space<vmem>>, vector<8x128xbf16>
    %1191 = arith.extf %1190 : vector<8x128xbf16> to vector<8x128xf32>
    %1192 = vector.extract_strided_slice %1152 {offsets = [6, 0], sizes = [1, 128], strides = [1, 1]} : vector<16x128xf32> to vector<1x128xf32>
    %1193 = vector.broadcast %1192 : vector<1x128xf32> to vector<8x128xf32>
    %1194 = arith.mulf %1193, %1191 : vector<8x128xf32>
    %1195 = arith.addf %1189, %1194 : vector<8x128xf32>
    %c56_307 = arith.constant 56 : index
    %c0_308 = arith.constant 0 : index
    %1196 = vector.load %arg2[%c56_307, %c0_308] : memref<128x128xbf16, #tpu.memory_space<vmem>>, vector<8x128xbf16>
    %1197 = arith.extf %1196 : vector<8x128xbf16> to vector<8x128xf32>
    %1198 = vector.extract_strided_slice %1152 {offsets = [7, 0], sizes = [1, 128], strides = [1, 1]} : vector<16x128xf32> to vector<1x128xf32>
    %1199 = vector.broadcast %1198 : vector<1x128xf32> to vector<8x128xf32>
    %1200 = arith.mulf %1199, %1197 : vector<8x128xf32>
    %1201 = arith.addf %1195, %1200 : vector<8x128xf32>
    %c64_309 = arith.constant 64 : index
    %c0_310 = arith.constant 0 : index
    %1202 = vector.load %arg2[%c64_309, %c0_310] : memref<128x128xbf16, #tpu.memory_space<vmem>>, vector<8x128xbf16>
    %1203 = arith.extf %1202 : vector<8x128xbf16> to vector<8x128xf32>
    %1204 = vector.extract_strided_slice %1152 {offsets = [8, 0], sizes = [1, 128], strides = [1, 1]} : vector<16x128xf32> to vector<1x128xf32>
    %1205 = vector.broadcast %1204 : vector<1x128xf32> to vector<8x128xf32>
    %1206 = arith.mulf %1205, %1203 : vector<8x128xf32>
    %1207 = arith.addf %1201, %1206 : vector<8x128xf32>
    %c72_311 = arith.constant 72 : index
    %c0_312 = arith.constant 0 : index
    %1208 = vector.load %arg2[%c72_311, %c0_312] : memref<128x128xbf16, #tpu.memory_space<vmem>>, vector<8x128xbf16>
    %1209 = arith.extf %1208 : vector<8x128xbf16> to vector<8x128xf32>
    %1210 = vector.extract_strided_slice %1152 {offsets = [9, 0], sizes = [1, 128], strides = [1, 1]} : vector<16x128xf32> to vector<1x128xf32>
    %1211 = vector.broadcast %1210 : vector<1x128xf32> to vector<8x128xf32>
    %1212 = arith.mulf %1211, %1209 : vector<8x128xf32>
    %1213 = arith.addf %1207, %1212 : vector<8x128xf32>
    %c80_313 = arith.constant 80 : index
    %c0_314 = arith.constant 0 : index
    %1214 = vector.load %arg2[%c80_313, %c0_314] : memref<128x128xbf16, #tpu.memory_space<vmem>>, vector<8x128xbf16>
    %1215 = arith.extf %1214 : vector<8x128xbf16> to vector<8x128xf32>
    %1216 = vector.extract_strided_slice %1152 {offsets = [10, 0], sizes = [1, 128], strides = [1, 1]} : vector<16x128xf32> to vector<1x128xf32>
    %1217 = vector.broadcast %1216 : vector<1x128xf32> to vector<8x128xf32>
    %1218 = arith.mulf %1217, %1215 : vector<8x128xf32>
    %1219 = arith.addf %1213, %1218 : vector<8x128xf32>
    %c88_315 = arith.constant 88 : index
    %c0_316 = arith.constant 0 : index
    %1220 = vector.load %arg2[%c88_315, %c0_316] : memref<128x128xbf16, #tpu.memory_space<vmem>>, vector<8x128xbf16>
    %1221 = arith.extf %1220 : vector<8x128xbf16> to vector<8x128xf32>
    %1222 = vector.extract_strided_slice %1152 {offsets = [11, 0], sizes = [1, 128], strides = [1, 1]} : vector<16x128xf32> to vector<1x128xf32>
    %1223 = vector.broadcast %1222 : vector<1x128xf32> to vector<8x128xf32>
    %1224 = arith.mulf %1223, %1221 : vector<8x128xf32>
    %1225 = arith.addf %1219, %1224 : vector<8x128xf32>
    %c96_317 = arith.constant 96 : index
    %c0_318 = arith.constant 0 : index
    %1226 = vector.load %arg2[%c96_317, %c0_318] : memref<128x128xbf16, #tpu.memory_space<vmem>>, vector<8x128xbf16>
    %1227 = arith.extf %1226 : vector<8x128xbf16> to vector<8x128xf32>
    %1228 = vector.extract_strided_slice %1152 {offsets = [12, 0], sizes = [1, 128], strides = [1, 1]} : vector<16x128xf32> to vector<1x128xf32>
    %1229 = vector.broadcast %1228 : vector<1x128xf32> to vector<8x128xf32>
    %1230 = arith.mulf %1229, %1227 : vector<8x128xf32>
    %1231 = arith.addf %1225, %1230 : vector<8x128xf32>
    %c104_319 = arith.constant 104 : index
    %c0_320 = arith.constant 0 : index
    %1232 = vector.load %arg2[%c104_319, %c0_320] : memref<128x128xbf16, #tpu.memory_space<vmem>>, vector<8x128xbf16>
    %1233 = arith.extf %1232 : vector<8x128xbf16> to vector<8x128xf32>
    %1234 = vector.extract_strided_slice %1152 {offsets = [13, 0], sizes = [1, 128], strides = [1, 1]} : vector<16x128xf32> to vector<1x128xf32>
    %1235 = vector.broadcast %1234 : vector<1x128xf32> to vector<8x128xf32>
    %1236 = arith.mulf %1235, %1233 : vector<8x128xf32>
    %1237 = arith.addf %1231, %1236 : vector<8x128xf32>
    %c112_321 = arith.constant 112 : index
    %c0_322 = arith.constant 0 : index
    %1238 = vector.load %arg2[%c112_321, %c0_322] : memref<128x128xbf16, #tpu.memory_space<vmem>>, vector<8x128xbf16>
    %1239 = arith.extf %1238 : vector<8x128xbf16> to vector<8x128xf32>
    %1240 = vector.extract_strided_slice %1152 {offsets = [14, 0], sizes = [1, 128], strides = [1, 1]} : vector<16x128xf32> to vector<1x128xf32>
    %1241 = vector.broadcast %1240 : vector<1x128xf32> to vector<8x128xf32>
    %1242 = arith.mulf %1241, %1239 : vector<8x128xf32>
    %1243 = arith.addf %1237, %1242 : vector<8x128xf32>
    %c120_323 = arith.constant 120 : index
    %c0_324 = arith.constant 0 : index
    %1244 = vector.load %arg2[%c120_323, %c0_324] : memref<128x128xbf16, #tpu.memory_space<vmem>>, vector<8x128xbf16>
    %1245 = arith.extf %1244 : vector<8x128xbf16> to vector<8x128xf32>
    %1246 = vector.extract_strided_slice %1152 {offsets = [15, 0], sizes = [1, 128], strides = [1, 1]} : vector<16x128xf32> to vector<1x128xf32>
    %1247 = vector.broadcast %1246 : vector<1x128xf32> to vector<8x128xf32>
    %1248 = arith.mulf %1247, %1245 : vector<8x128xf32>
    %1249 = arith.addf %1243, %1248 : vector<8x128xf32>
    %c8_325 = arith.constant 8 : index
    %1250 = memref.load %arg3[%c8_325] : memref<45xf32, #tpu.memory_space<smem>>
    %1251 = vector.broadcast %1250 : f32 to vector<16x128xf32>
    %1252 = arith.subf %0, %1251 : vector<16x128xf32>
    %c23_326 = arith.constant 23 : index
    %1253 = memref.load %arg3[%c23_326] : memref<45xf32, #tpu.memory_space<smem>>
    %1254 = vector.broadcast %1253 : f32 to vector<16x128xf32>
    %1255 = arith.subf %1, %1254 : vector<16x128xf32>
    %c38_327 = arith.constant 38 : index
    %1256 = memref.load %arg3[%c38_327] : memref<45xf32, #tpu.memory_space<smem>>
    %1257 = vector.broadcast %1256 : f32 to vector<16x128xf32>
    %1258 = arith.subf %2, %1257 : vector<16x128xf32>
    %1259 = arith.mulf %1252, %1252 : vector<16x128xf32>
    %1260 = arith.mulf %1255, %1255 : vector<16x128xf32>
    %1261 = arith.addf %1259, %1260 : vector<16x128xf32>
    %1262 = arith.mulf %1258, %1258 : vector<16x128xf32>
    %1263 = arith.addf %1261, %1262 : vector<16x128xf32>
    %1264 = math.sqrt %1263 : vector<16x128xf32>
    %cst_328 = arith.constant 1.66666663 : f32
    %1265 = vector.broadcast %cst_328 : f32 to vector<16x128xf32>
    %1266 = arith.mulf %1264, %1265 : vector<16x128xf32>
    %cst_329 = arith.constant 1.000000e+00 : f32
    %1267 = vector.broadcast %cst_329 : f32 to vector<16x128xf32>
    %1268 = arith.subf %1267, %1266 : vector<16x128xf32>
    %cst_330 = arith.constant 0.000000e+00 : f32
    %1269 = vector.broadcast %cst_330 : f32 to vector<16x128xf32>
    %1270 = arith.maximumf %1268, %1269 : vector<16x128xf32>
    %c8_i32_331 = arith.constant 8 : i32
    %1271 = vector.broadcast %c8_i32_331 : i32 to vector<16x128xi32>
    %1272 = arith.cmpi eq, %273, %1271 : vector<16x128xi32>
    %cst_332 = arith.constant 0.000000e+00 : f32
    %1273 = vector.broadcast %cst_332 : f32 to vector<16x128xf32>
    %1274 = arith.select %1272, %1270, %1273 : vector<16x128xi1>, vector<16x128xf32>
    %cst_333 = arith.constant 0.000000e+00 : f32
    %1275 = vector.broadcast %cst_333 : f32 to vector<8x128xf32>
    %c0_334 = arith.constant 0 : index
    %c0_335 = arith.constant 0 : index
    %1276 = vector.load %arg2[%c0_334, %c0_335] : memref<128x128xbf16, #tpu.memory_space<vmem>>, vector<8x128xbf16>
    %1277 = arith.extf %1276 : vector<8x128xbf16> to vector<8x128xf32>
    %1278 = vector.extract_strided_slice %1274 {offsets = [0, 0], sizes = [1, 128], strides = [1, 1]} : vector<16x128xf32> to vector<1x128xf32>
    %1279 = vector.broadcast %1278 : vector<1x128xf32> to vector<8x128xf32>
    %1280 = arith.mulf %1279, %1277 : vector<8x128xf32>
    %1281 = arith.addf %1275, %1280 : vector<8x128xf32>
    %c8_336 = arith.constant 8 : index
    %c0_337 = arith.constant 0 : index
    %1282 = vector.load %arg2[%c8_336, %c0_337] : memref<128x128xbf16, #tpu.memory_space<vmem>>, vector<8x128xbf16>
    %1283 = arith.extf %1282 : vector<8x128xbf16> to vector<8x128xf32>
    %1284 = vector.extract_strided_slice %1274 {offsets = [1, 0], sizes = [1, 128], strides = [1, 1]} : vector<16x128xf32> to vector<1x128xf32>
    %1285 = vector.broadcast %1284 : vector<1x128xf32> to vector<8x128xf32>
    %1286 = arith.mulf %1285, %1283 : vector<8x128xf32>
    %1287 = arith.addf %1281, %1286 : vector<8x128xf32>
    %c16_338 = arith.constant 16 : index
    %c0_339 = arith.constant 0 : index
    %1288 = vector.load %arg2[%c16_338, %c0_339] : memref<128x128xbf16, #tpu.memory_space<vmem>>, vector<8x128xbf16>
    %1289 = arith.extf %1288 : vector<8x128xbf16> to vector<8x128xf32>
    %1290 = vector.extract_strided_slice %1274 {offsets = [2, 0], sizes = [1, 128], strides = [1, 1]} : vector<16x128xf32> to vector<1x128xf32>
    %1291 = vector.broadcast %1290 : vector<1x128xf32> to vector<8x128xf32>
    %1292 = arith.mulf %1291, %1289 : vector<8x128xf32>
    %1293 = arith.addf %1287, %1292 : vector<8x128xf32>
    %c24_340 = arith.constant 24 : index
    %c0_341 = arith.constant 0 : index
    %1294 = vector.load %arg2[%c24_340, %c0_341] : memref<128x128xbf16, #tpu.memory_space<vmem>>, vector<8x128xbf16>
    %1295 = arith.extf %1294 : vector<8x128xbf16> to vector<8x128xf32>
    %1296 = vector.extract_strided_slice %1274 {offsets = [3, 0], sizes = [1, 128], strides = [1, 1]} : vector<16x128xf32> to vector<1x128xf32>
    %1297 = vector.broadcast %1296 : vector<1x128xf32> to vector<8x128xf32>
    %1298 = arith.mulf %1297, %1295 : vector<8x128xf32>
    %1299 = arith.addf %1293, %1298 : vector<8x128xf32>
    %c32_342 = arith.constant 32 : index
    %c0_343 = arith.constant 0 : index
    %1300 = vector.load %arg2[%c32_342, %c0_343] : memref<128x128xbf16, #tpu.memory_space<vmem>>, vector<8x128xbf16>
    %1301 = arith.extf %1300 : vector<8x128xbf16> to vector<8x128xf32>
    %1302 = vector.extract_strided_slice %1274 {offsets = [4, 0], sizes = [1, 128], strides = [1, 1]} : vector<16x128xf32> to vector<1x128xf32>
    %1303 = vector.broadcast %1302 : vector<1x128xf32> to vector<8x128xf32>
    %1304 = arith.mulf %1303, %1301 : vector<8x128xf32>
    %1305 = arith.addf %1299, %1304 : vector<8x128xf32>
    %c40_344 = arith.constant 40 : index
    %c0_345 = arith.constant 0 : index
    %1306 = vector.load %arg2[%c40_344, %c0_345] : memref<128x128xbf16, #tpu.memory_space<vmem>>, vector<8x128xbf16>
    %1307 = arith.extf %1306 : vector<8x128xbf16> to vector<8x128xf32>
    %1308 = vector.extract_strided_slice %1274 {offsets = [5, 0], sizes = [1, 128], strides = [1, 1]} : vector<16x128xf32> to vector<1x128xf32>
    %1309 = vector.broadcast %1308 : vector<1x128xf32> to vector<8x128xf32>
    %1310 = arith.mulf %1309, %1307 : vector<8x128xf32>
    %1311 = arith.addf %1305, %1310 : vector<8x128xf32>
    %c48_346 = arith.constant 48 : index
    %c0_347 = arith.constant 0 : index
    %1312 = vector.load %arg2[%c48_346, %c0_347] : memref<128x128xbf16, #tpu.memory_space<vmem>>, vector<8x128xbf16>
    %1313 = arith.extf %1312 : vector<8x128xbf16> to vector<8x128xf32>
    %1314 = vector.extract_strided_slice %1274 {offsets = [6, 0], sizes = [1, 128], strides = [1, 1]} : vector<16x128xf32> to vector<1x128xf32>
    %1315 = vector.broadcast %1314 : vector<1x128xf32> to vector<8x128xf32>
    %1316 = arith.mulf %1315, %1313 : vector<8x128xf32>
    %1317 = arith.addf %1311, %1316 : vector<8x128xf32>
    %c56_348 = arith.constant 56 : index
    %c0_349 = arith.constant 0 : index
    %1318 = vector.load %arg2[%c56_348, %c0_349] : memref<128x128xbf16, #tpu.memory_space<vmem>>, vector<8x128xbf16>
    %1319 = arith.extf %1318 : vector<8x128xbf16> to vector<8x128xf32>
    %1320 = vector.extract_strided_slice %1274 {offsets = [7, 0], sizes = [1, 128], strides = [1, 1]} : vector<16x128xf32> to vector<1x128xf32>
    %1321 = vector.broadcast %1320 : vector<1x128xf32> to vector<8x128xf32>
    %1322 = arith.mulf %1321, %1319 : vector<8x128xf32>
    %1323 = arith.addf %1317, %1322 : vector<8x128xf32>
    %c64_350 = arith.constant 64 : index
    %c0_351 = arith.constant 0 : index
    %1324 = vector.load %arg2[%c64_350, %c0_351] : memref<128x128xbf16, #tpu.memory_space<vmem>>, vector<8x128xbf16>
    %1325 = arith.extf %1324 : vector<8x128xbf16> to vector<8x128xf32>
    %1326 = vector.extract_strided_slice %1274 {offsets = [8, 0], sizes = [1, 128], strides = [1, 1]} : vector<16x128xf32> to vector<1x128xf32>
    %1327 = vector.broadcast %1326 : vector<1x128xf32> to vector<8x128xf32>
    %1328 = arith.mulf %1327, %1325 : vector<8x128xf32>
    %1329 = arith.addf %1323, %1328 : vector<8x128xf32>
    %c72_352 = arith.constant 72 : index
    %c0_353 = arith.constant 0 : index
    %1330 = vector.load %arg2[%c72_352, %c0_353] : memref<128x128xbf16, #tpu.memory_space<vmem>>, vector<8x128xbf16>
    %1331 = arith.extf %1330 : vector<8x128xbf16> to vector<8x128xf32>
    %1332 = vector.extract_strided_slice %1274 {offsets = [9, 0], sizes = [1, 128], strides = [1, 1]} : vector<16x128xf32> to vector<1x128xf32>
    %1333 = vector.broadcast %1332 : vector<1x128xf32> to vector<8x128xf32>
    %1334 = arith.mulf %1333, %1331 : vector<8x128xf32>
    %1335 = arith.addf %1329, %1334 : vector<8x128xf32>
    %c80_354 = arith.constant 80 : index
    %c0_355 = arith.constant 0 : index
    %1336 = vector.load %arg2[%c80_354, %c0_355] : memref<128x128xbf16, #tpu.memory_space<vmem>>, vector<8x128xbf16>
    %1337 = arith.extf %1336 : vector<8x128xbf16> to vector<8x128xf32>
    %1338 = vector.extract_strided_slice %1274 {offsets = [10, 0], sizes = [1, 128], strides = [1, 1]} : vector<16x128xf32> to vector<1x128xf32>
    %1339 = vector.broadcast %1338 : vector<1x128xf32> to vector<8x128xf32>
    %1340 = arith.mulf %1339, %1337 : vector<8x128xf32>
    %1341 = arith.addf %1335, %1340 : vector<8x128xf32>
    %c88_356 = arith.constant 88 : index
    %c0_357 = arith.constant 0 : index
    %1342 = vector.load %arg2[%c88_356, %c0_357] : memref<128x128xbf16, #tpu.memory_space<vmem>>, vector<8x128xbf16>
    %1343 = arith.extf %1342 : vector<8x128xbf16> to vector<8x128xf32>
    %1344 = vector.extract_strided_slice %1274 {offsets = [11, 0], sizes = [1, 128], strides = [1, 1]} : vector<16x128xf32> to vector<1x128xf32>
    %1345 = vector.broadcast %1344 : vector<1x128xf32> to vector<8x128xf32>
    %1346 = arith.mulf %1345, %1343 : vector<8x128xf32>
    %1347 = arith.addf %1341, %1346 : vector<8x128xf32>
    %c96_358 = arith.constant 96 : index
    %c0_359 = arith.constant 0 : index
    %1348 = vector.load %arg2[%c96_358, %c0_359] : memref<128x128xbf16, #tpu.memory_space<vmem>>, vector<8x128xbf16>
    %1349 = arith.extf %1348 : vector<8x128xbf16> to vector<8x128xf32>
    %1350 = vector.extract_strided_slice %1274 {offsets = [12, 0], sizes = [1, 128], strides = [1, 1]} : vector<16x128xf32> to vector<1x128xf32>
    %1351 = vector.broadcast %1350 : vector<1x128xf32> to vector<8x128xf32>
    %1352 = arith.mulf %1351, %1349 : vector<8x128xf32>
    %1353 = arith.addf %1347, %1352 : vector<8x128xf32>
    %c104_360 = arith.constant 104 : index
    %c0_361 = arith.constant 0 : index
    %1354 = vector.load %arg2[%c104_360, %c0_361] : memref<128x128xbf16, #tpu.memory_space<vmem>>, vector<8x128xbf16>
    %1355 = arith.extf %1354 : vector<8x128xbf16> to vector<8x128xf32>
    %1356 = vector.extract_strided_slice %1274 {offsets = [13, 0], sizes = [1, 128], strides = [1, 1]} : vector<16x128xf32> to vector<1x128xf32>
    %1357 = vector.broadcast %1356 : vector<1x128xf32> to vector<8x128xf32>
    %1358 = arith.mulf %1357, %1355 : vector<8x128xf32>
    %1359 = arith.addf %1353, %1358 : vector<8x128xf32>
    %c112_362 = arith.constant 112 : index
    %c0_363 = arith.constant 0 : index
    %1360 = vector.load %arg2[%c112_362, %c0_363] : memref<128x128xbf16, #tpu.memory_space<vmem>>, vector<8x128xbf16>
    %1361 = arith.extf %1360 : vector<8x128xbf16> to vector<8x128xf32>
    %1362 = vector.extract_strided_slice %1274 {offsets = [14, 0], sizes = [1, 128], strides = [1, 1]} : vector<16x128xf32> to vector<1x128xf32>
    %1363 = vector.broadcast %1362 : vector<1x128xf32> to vector<8x128xf32>
    %1364 = arith.mulf %1363, %1361 : vector<8x128xf32>
    %1365 = arith.addf %1359, %1364 : vector<8x128xf32>
    %c120_364 = arith.constant 120 : index
    %c0_365 = arith.constant 0 : index
    %1366 = vector.load %arg2[%c120_364, %c0_365] : memref<128x128xbf16, #tpu.memory_space<vmem>>, vector<8x128xbf16>
    %1367 = arith.extf %1366 : vector<8x128xbf16> to vector<8x128xf32>
    %1368 = vector.extract_strided_slice %1274 {offsets = [15, 0], sizes = [1, 128], strides = [1, 1]} : vector<16x128xf32> to vector<1x128xf32>
    %1369 = vector.broadcast %1368 : vector<1x128xf32> to vector<8x128xf32>
    %1370 = arith.mulf %1369, %1367 : vector<8x128xf32>
    %1371 = arith.addf %1365, %1370 : vector<8x128xf32>
    %c9_366 = arith.constant 9 : index
    %1372 = memref.load %arg3[%c9_366] : memref<45xf32, #tpu.memory_space<smem>>
    %1373 = vector.broadcast %1372 : f32 to vector<16x128xf32>
    %1374 = arith.subf %0, %1373 : vector<16x128xf32>
    %c24_367 = arith.constant 24 : index
    %1375 = memref.load %arg3[%c24_367] : memref<45xf32, #tpu.memory_space<smem>>
    %1376 = vector.broadcast %1375 : f32 to vector<16x128xf32>
    %1377 = arith.subf %1, %1376 : vector<16x128xf32>
    %c39_368 = arith.constant 39 : index
    %1378 = memref.load %arg3[%c39_368] : memref<45xf32, #tpu.memory_space<smem>>
    %1379 = vector.broadcast %1378 : f32 to vector<16x128xf32>
    %1380 = arith.subf %2, %1379 : vector<16x128xf32>
    %1381 = arith.mulf %1374, %1374 : vector<16x128xf32>
    %1382 = arith.mulf %1377, %1377 : vector<16x128xf32>
    %1383 = arith.addf %1381, %1382 : vector<16x128xf32>
    %1384 = arith.mulf %1380, %1380 : vector<16x128xf32>
    %1385 = arith.addf %1383, %1384 : vector<16x128xf32>
    %1386 = math.sqrt %1385 : vector<16x128xf32>
    %cst_369 = arith.constant 1.66666663 : f32
    %1387 = vector.broadcast %cst_369 : f32 to vector<16x128xf32>
    %1388 = arith.mulf %1386, %1387 : vector<16x128xf32>
    %cst_370 = arith.constant 1.000000e+00 : f32
    %1389 = vector.broadcast %cst_370 : f32 to vector<16x128xf32>
    %1390 = arith.subf %1389, %1388 : vector<16x128xf32>
    %cst_371 = arith.constant 0.000000e+00 : f32
    %1391 = vector.broadcast %cst_371 : f32 to vector<16x128xf32>
    %1392 = arith.maximumf %1390, %1391 : vector<16x128xf32>
    %c9_i32_372 = arith.constant 9 : i32
    %1393 = vector.broadcast %c9_i32_372 : i32 to vector<16x128xi32>
    %1394 = arith.cmpi eq, %273, %1393 : vector<16x128xi32>
    %cst_373 = arith.constant 0.000000e+00 : f32
    %1395 = vector.broadcast %cst_373 : f32 to vector<16x128xf32>
    %1396 = arith.select %1394, %1392, %1395 : vector<16x128xi1>, vector<16x128xf32>
    %cst_374 = arith.constant 0.000000e+00 : f32
    %1397 = vector.broadcast %cst_374 : f32 to vector<8x128xf32>
    %c0_375 = arith.constant 0 : index
    %c0_376 = arith.constant 0 : index
    %1398 = vector.load %arg2[%c0_375, %c0_376] : memref<128x128xbf16, #tpu.memory_space<vmem>>, vector<8x128xbf16>
    %1399 = arith.extf %1398 : vector<8x128xbf16> to vector<8x128xf32>
    %1400 = vector.extract_strided_slice %1396 {offsets = [0, 0], sizes = [1, 128], strides = [1, 1]} : vector<16x128xf32> to vector<1x128xf32>
    %1401 = vector.broadcast %1400 : vector<1x128xf32> to vector<8x128xf32>
    %1402 = arith.mulf %1401, %1399 : vector<8x128xf32>
    %1403 = arith.addf %1397, %1402 : vector<8x128xf32>
    %c8_377 = arith.constant 8 : index
    %c0_378 = arith.constant 0 : index
    %1404 = vector.load %arg2[%c8_377, %c0_378] : memref<128x128xbf16, #tpu.memory_space<vmem>>, vector<8x128xbf16>
    %1405 = arith.extf %1404 : vector<8x128xbf16> to vector<8x128xf32>
    %1406 = vector.extract_strided_slice %1396 {offsets = [1, 0], sizes = [1, 128], strides = [1, 1]} : vector<16x128xf32> to vector<1x128xf32>
    %1407 = vector.broadcast %1406 : vector<1x128xf32> to vector<8x128xf32>
    %1408 = arith.mulf %1407, %1405 : vector<8x128xf32>
    %1409 = arith.addf %1403, %1408 : vector<8x128xf32>
    %c16_379 = arith.constant 16 : index
    %c0_380 = arith.constant 0 : index
    %1410 = vector.load %arg2[%c16_379, %c0_380] : memref<128x128xbf16, #tpu.memory_space<vmem>>, vector<8x128xbf16>
    %1411 = arith.extf %1410 : vector<8x128xbf16> to vector<8x128xf32>
    %1412 = vector.extract_strided_slice %1396 {offsets = [2, 0], sizes = [1, 128], strides = [1, 1]} : vector<16x128xf32> to vector<1x128xf32>
    %1413 = vector.broadcast %1412 : vector<1x128xf32> to vector<8x128xf32>
    %1414 = arith.mulf %1413, %1411 : vector<8x128xf32>
    %1415 = arith.addf %1409, %1414 : vector<8x128xf32>
    %c24_381 = arith.constant 24 : index
    %c0_382 = arith.constant 0 : index
    %1416 = vector.load %arg2[%c24_381, %c0_382] : memref<128x128xbf16, #tpu.memory_space<vmem>>, vector<8x128xbf16>
    %1417 = arith.extf %1416 : vector<8x128xbf16> to vector<8x128xf32>
    %1418 = vector.extract_strided_slice %1396 {offsets = [3, 0], sizes = [1, 128], strides = [1, 1]} : vector<16x128xf32> to vector<1x128xf32>
    %1419 = vector.broadcast %1418 : vector<1x128xf32> to vector<8x128xf32>
    %1420 = arith.mulf %1419, %1417 : vector<8x128xf32>
    %1421 = arith.addf %1415, %1420 : vector<8x128xf32>
    %c32_383 = arith.constant 32 : index
    %c0_384 = arith.constant 0 : index
    %1422 = vector.load %arg2[%c32_383, %c0_384] : memref<128x128xbf16, #tpu.memory_space<vmem>>, vector<8x128xbf16>
    %1423 = arith.extf %1422 : vector<8x128xbf16> to vector<8x128xf32>
    %1424 = vector.extract_strided_slice %1396 {offsets = [4, 0], sizes = [1, 128], strides = [1, 1]} : vector<16x128xf32> to vector<1x128xf32>
    %1425 = vector.broadcast %1424 : vector<1x128xf32> to vector<8x128xf32>
    %1426 = arith.mulf %1425, %1423 : vector<8x128xf32>
    %1427 = arith.addf %1421, %1426 : vector<8x128xf32>
    %c40_385 = arith.constant 40 : index
    %c0_386 = arith.constant 0 : index
    %1428 = vector.load %arg2[%c40_385, %c0_386] : memref<128x128xbf16, #tpu.memory_space<vmem>>, vector<8x128xbf16>
    %1429 = arith.extf %1428 : vector<8x128xbf16> to vector<8x128xf32>
    %1430 = vector.extract_strided_slice %1396 {offsets = [5, 0], sizes = [1, 128], strides = [1, 1]} : vector<16x128xf32> to vector<1x128xf32>
    %1431 = vector.broadcast %1430 : vector<1x128xf32> to vector<8x128xf32>
    %1432 = arith.mulf %1431, %1429 : vector<8x128xf32>
    %1433 = arith.addf %1427, %1432 : vector<8x128xf32>
    %c48_387 = arith.constant 48 : index
    %c0_388 = arith.constant 0 : index
    %1434 = vector.load %arg2[%c48_387, %c0_388] : memref<128x128xbf16, #tpu.memory_space<vmem>>, vector<8x128xbf16>
    %1435 = arith.extf %1434 : vector<8x128xbf16> to vector<8x128xf32>
    %1436 = vector.extract_strided_slice %1396 {offsets = [6, 0], sizes = [1, 128], strides = [1, 1]} : vector<16x128xf32> to vector<1x128xf32>
    %1437 = vector.broadcast %1436 : vector<1x128xf32> to vector<8x128xf32>
    %1438 = arith.mulf %1437, %1435 : vector<8x128xf32>
    %1439 = arith.addf %1433, %1438 : vector<8x128xf32>
    %c56_389 = arith.constant 56 : index
    %c0_390 = arith.constant 0 : index
    %1440 = vector.load %arg2[%c56_389, %c0_390] : memref<128x128xbf16, #tpu.memory_space<vmem>>, vector<8x128xbf16>
    %1441 = arith.extf %1440 : vector<8x128xbf16> to vector<8x128xf32>
    %1442 = vector.extract_strided_slice %1396 {offsets = [7, 0], sizes = [1, 128], strides = [1, 1]} : vector<16x128xf32> to vector<1x128xf32>
    %1443 = vector.broadcast %1442 : vector<1x128xf32> to vector<8x128xf32>
    %1444 = arith.mulf %1443, %1441 : vector<8x128xf32>
    %1445 = arith.addf %1439, %1444 : vector<8x128xf32>
    %c64_391 = arith.constant 64 : index
    %c0_392 = arith.constant 0 : index
    %1446 = vector.load %arg2[%c64_391, %c0_392] : memref<128x128xbf16, #tpu.memory_space<vmem>>, vector<8x128xbf16>
    %1447 = arith.extf %1446 : vector<8x128xbf16> to vector<8x128xf32>
    %1448 = vector.extract_strided_slice %1396 {offsets = [8, 0], sizes = [1, 128], strides = [1, 1]} : vector<16x128xf32> to vector<1x128xf32>
    %1449 = vector.broadcast %1448 : vector<1x128xf32> to vector<8x128xf32>
    %1450 = arith.mulf %1449, %1447 : vector<8x128xf32>
    %1451 = arith.addf %1445, %1450 : vector<8x128xf32>
    %c72_393 = arith.constant 72 : index
    %c0_394 = arith.constant 0 : index
    %1452 = vector.load %arg2[%c72_393, %c0_394] : memref<128x128xbf16, #tpu.memory_space<vmem>>, vector<8x128xbf16>
    %1453 = arith.extf %1452 : vector<8x128xbf16> to vector<8x128xf32>
    %1454 = vector.extract_strided_slice %1396 {offsets = [9, 0], sizes = [1, 128], strides = [1, 1]} : vector<16x128xf32> to vector<1x128xf32>
    %1455 = vector.broadcast %1454 : vector<1x128xf32> to vector<8x128xf32>
    %1456 = arith.mulf %1455, %1453 : vector<8x128xf32>
    %1457 = arith.addf %1451, %1456 : vector<8x128xf32>
    %c80_395 = arith.constant 80 : index
    %c0_396 = arith.constant 0 : index
    %1458 = vector.load %arg2[%c80_395, %c0_396] : memref<128x128xbf16, #tpu.memory_space<vmem>>, vector<8x128xbf16>
    %1459 = arith.extf %1458 : vector<8x128xbf16> to vector<8x128xf32>
    %1460 = vector.extract_strided_slice %1396 {offsets = [10, 0], sizes = [1, 128], strides = [1, 1]} : vector<16x128xf32> to vector<1x128xf32>
    %1461 = vector.broadcast %1460 : vector<1x128xf32> to vector<8x128xf32>
    %1462 = arith.mulf %1461, %1459 : vector<8x128xf32>
    %1463 = arith.addf %1457, %1462 : vector<8x128xf32>
    %c88_397 = arith.constant 88 : index
    %c0_398 = arith.constant 0 : index
    %1464 = vector.load %arg2[%c88_397, %c0_398] : memref<128x128xbf16, #tpu.memory_space<vmem>>, vector<8x128xbf16>
    %1465 = arith.extf %1464 : vector<8x128xbf16> to vector<8x128xf32>
    %1466 = vector.extract_strided_slice %1396 {offsets = [11, 0], sizes = [1, 128], strides = [1, 1]} : vector<16x128xf32> to vector<1x128xf32>
    %1467 = vector.broadcast %1466 : vector<1x128xf32> to vector<8x128xf32>
    %1468 = arith.mulf %1467, %1465 : vector<8x128xf32>
    %1469 = arith.addf %1463, %1468 : vector<8x128xf32>
    %c96_399 = arith.constant 96 : index
    %c0_400 = arith.constant 0 : index
    %1470 = vector.load %arg2[%c96_399, %c0_400] : memref<128x128xbf16, #tpu.memory_space<vmem>>, vector<8x128xbf16>
    %1471 = arith.extf %1470 : vector<8x128xbf16> to vector<8x128xf32>
    %1472 = vector.extract_strided_slice %1396 {offsets = [12, 0], sizes = [1, 128], strides = [1, 1]} : vector<16x128xf32> to vector<1x128xf32>
    %1473 = vector.broadcast %1472 : vector<1x128xf32> to vector<8x128xf32>
    %1474 = arith.mulf %1473, %1471 : vector<8x128xf32>
    %1475 = arith.addf %1469, %1474 : vector<8x128xf32>
    %c104_401 = arith.constant 104 : index
    %c0_402 = arith.constant 0 : index
    %1476 = vector.load %arg2[%c104_401, %c0_402] : memref<128x128xbf16, #tpu.memory_space<vmem>>, vector<8x128xbf16>
    %1477 = arith.extf %1476 : vector<8x128xbf16> to vector<8x128xf32>
    %1478 = vector.extract_strided_slice %1396 {offsets = [13, 0], sizes = [1, 128], strides = [1, 1]} : vector<16x128xf32> to vector<1x128xf32>
    %1479 = vector.broadcast %1478 : vector<1x128xf32> to vector<8x128xf32>
    %1480 = arith.mulf %1479, %1477 : vector<8x128xf32>
    %1481 = arith.addf %1475, %1480 : vector<8x128xf32>
    %c112_403 = arith.constant 112 : index
    %c0_404 = arith.constant 0 : index
    %1482 = vector.load %arg2[%c112_403, %c0_404] : memref<128x128xbf16, #tpu.memory_space<vmem>>, vector<8x128xbf16>
    %1483 = arith.extf %1482 : vector<8x128xbf16> to vector<8x128xf32>
    %1484 = vector.extract_strided_slice %1396 {offsets = [14, 0], sizes = [1, 128], strides = [1, 1]} : vector<16x128xf32> to vector<1x128xf32>
    %1485 = vector.broadcast %1484 : vector<1x128xf32> to vector<8x128xf32>
    %1486 = arith.mulf %1485, %1483 : vector<8x128xf32>
    %1487 = arith.addf %1481, %1486 : vector<8x128xf32>
    %c120_405 = arith.constant 120 : index
    %c0_406 = arith.constant 0 : index
    %1488 = vector.load %arg2[%c120_405, %c0_406] : memref<128x128xbf16, #tpu.memory_space<vmem>>, vector<8x128xbf16>
    %1489 = arith.extf %1488 : vector<8x128xbf16> to vector<8x128xf32>
    %1490 = vector.extract_strided_slice %1396 {offsets = [15, 0], sizes = [1, 128], strides = [1, 1]} : vector<16x128xf32> to vector<1x128xf32>
    %1491 = vector.broadcast %1490 : vector<1x128xf32> to vector<8x128xf32>
    %1492 = arith.mulf %1491, %1489 : vector<8x128xf32>
    %1493 = arith.addf %1487, %1492 : vector<8x128xf32>
    %c10_407 = arith.constant 10 : index
    %1494 = memref.load %arg3[%c10_407] : memref<45xf32, #tpu.memory_space<smem>>
    %1495 = vector.broadcast %1494 : f32 to vector<16x128xf32>
    %1496 = arith.subf %0, %1495 : vector<16x128xf32>
    %c25_408 = arith.constant 25 : index
    %1497 = memref.load %arg3[%c25_408] : memref<45xf32, #tpu.memory_space<smem>>
    %1498 = vector.broadcast %1497 : f32 to vector<16x128xf32>
    %1499 = arith.subf %1, %1498 : vector<16x128xf32>
    %c40_409 = arith.constant 40 : index
    %1500 = memref.load %arg3[%c40_409] : memref<45xf32, #tpu.memory_space<smem>>
    %1501 = vector.broadcast %1500 : f32 to vector<16x128xf32>
    %1502 = arith.subf %2, %1501 : vector<16x128xf32>
    %1503 = arith.mulf %1496, %1496 : vector<16x128xf32>
    %1504 = arith.mulf %1499, %1499 : vector<16x128xf32>
    %1505 = arith.addf %1503, %1504 : vector<16x128xf32>
    %1506 = arith.mulf %1502, %1502 : vector<16x128xf32>
    %1507 = arith.addf %1505, %1506 : vector<16x128xf32>
    %1508 = math.sqrt %1507 : vector<16x128xf32>
    %cst_410 = arith.constant 1.66666663 : f32
    %1509 = vector.broadcast %cst_410 : f32 to vector<16x128xf32>
    %1510 = arith.mulf %1508, %1509 : vector<16x128xf32>
    %cst_411 = arith.constant 1.000000e+00 : f32
    %1511 = vector.broadcast %cst_411 : f32 to vector<16x128xf32>
    %1512 = arith.subf %1511, %1510 : vector<16x128xf32>
    %cst_412 = arith.constant 0.000000e+00 : f32
    %1513 = vector.broadcast %cst_412 : f32 to vector<16x128xf32>
    %1514 = arith.maximumf %1512, %1513 : vector<16x128xf32>
    %c10_i32_413 = arith.constant 10 : i32
    %1515 = vector.broadcast %c10_i32_413 : i32 to vector<16x128xi32>
    %1516 = arith.cmpi eq, %273, %1515 : vector<16x128xi32>
    %cst_414 = arith.constant 0.000000e+00 : f32
    %1517 = vector.broadcast %cst_414 : f32 to vector<16x128xf32>
    %1518 = arith.select %1516, %1514, %1517 : vector<16x128xi1>, vector<16x128xf32>
    %cst_415 = arith.constant 0.000000e+00 : f32
    %1519 = vector.broadcast %cst_415 : f32 to vector<8x128xf32>
    %c0_416 = arith.constant 0 : index
    %c0_417 = arith.constant 0 : index
    %1520 = vector.load %arg2[%c0_416, %c0_417] : memref<128x128xbf16, #tpu.memory_space<vmem>>, vector<8x128xbf16>
    %1521 = arith.extf %1520 : vector<8x128xbf16> to vector<8x128xf32>
    %1522 = vector.extract_strided_slice %1518 {offsets = [0, 0], sizes = [1, 128], strides = [1, 1]} : vector<16x128xf32> to vector<1x128xf32>
    %1523 = vector.broadcast %1522 : vector<1x128xf32> to vector<8x128xf32>
    %1524 = arith.mulf %1523, %1521 : vector<8x128xf32>
    %1525 = arith.addf %1519, %1524 : vector<8x128xf32>
    %c8_418 = arith.constant 8 : index
    %c0_419 = arith.constant 0 : index
    %1526 = vector.load %arg2[%c8_418, %c0_419] : memref<128x128xbf16, #tpu.memory_space<vmem>>, vector<8x128xbf16>
    %1527 = arith.extf %1526 : vector<8x128xbf16> to vector<8x128xf32>
    %1528 = vector.extract_strided_slice %1518 {offsets = [1, 0], sizes = [1, 128], strides = [1, 1]} : vector<16x128xf32> to vector<1x128xf32>
    %1529 = vector.broadcast %1528 : vector<1x128xf32> to vector<8x128xf32>
    %1530 = arith.mulf %1529, %1527 : vector<8x128xf32>
    %1531 = arith.addf %1525, %1530 : vector<8x128xf32>
    %c16_420 = arith.constant 16 : index
    %c0_421 = arith.constant 0 : index
    %1532 = vector.load %arg2[%c16_420, %c0_421] : memref<128x128xbf16, #tpu.memory_space<vmem>>, vector<8x128xbf16>
    %1533 = arith.extf %1532 : vector<8x128xbf16> to vector<8x128xf32>
    %1534 = vector.extract_strided_slice %1518 {offsets = [2, 0], sizes = [1, 128], strides = [1, 1]} : vector<16x128xf32> to vector<1x128xf32>
    %1535 = vector.broadcast %1534 : vector<1x128xf32> to vector<8x128xf32>
    %1536 = arith.mulf %1535, %1533 : vector<8x128xf32>
    %1537 = arith.addf %1531, %1536 : vector<8x128xf32>
    %c24_422 = arith.constant 24 : index
    %c0_423 = arith.constant 0 : index
    %1538 = vector.load %arg2[%c24_422, %c0_423] : memref<128x128xbf16, #tpu.memory_space<vmem>>, vector<8x128xbf16>
    %1539 = arith.extf %1538 : vector<8x128xbf16> to vector<8x128xf32>
    %1540 = vector.extract_strided_slice %1518 {offsets = [3, 0], sizes = [1, 128], strides = [1, 1]} : vector<16x128xf32> to vector<1x128xf32>
    %1541 = vector.broadcast %1540 : vector<1x128xf32> to vector<8x128xf32>
    %1542 = arith.mulf %1541, %1539 : vector<8x128xf32>
    %1543 = arith.addf %1537, %1542 : vector<8x128xf32>
    %c32_424 = arith.constant 32 : index
    %c0_425 = arith.constant 0 : index
    %1544 = vector.load %arg2[%c32_424, %c0_425] : memref<128x128xbf16, #tpu.memory_space<vmem>>, vector<8x128xbf16>
    %1545 = arith.extf %1544 : vector<8x128xbf16> to vector<8x128xf32>
    %1546 = vector.extract_strided_slice %1518 {offsets = [4, 0], sizes = [1, 128], strides = [1, 1]} : vector<16x128xf32> to vector<1x128xf32>
    %1547 = vector.broadcast %1546 : vector<1x128xf32> to vector<8x128xf32>
    %1548 = arith.mulf %1547, %1545 : vector<8x128xf32>
    %1549 = arith.addf %1543, %1548 : vector<8x128xf32>
    %c40_426 = arith.constant 40 : index
    %c0_427 = arith.constant 0 : index
    %1550 = vector.load %arg2[%c40_426, %c0_427] : memref<128x128xbf16, #tpu.memory_space<vmem>>, vector<8x128xbf16>
    %1551 = arith.extf %1550 : vector<8x128xbf16> to vector<8x128xf32>
    %1552 = vector.extract_strided_slice %1518 {offsets = [5, 0], sizes = [1, 128], strides = [1, 1]} : vector<16x128xf32> to vector<1x128xf32>
    %1553 = vector.broadcast %1552 : vector<1x128xf32> to vector<8x128xf32>
    %1554 = arith.mulf %1553, %1551 : vector<8x128xf32>
    %1555 = arith.addf %1549, %1554 : vector<8x128xf32>
    %c48_428 = arith.constant 48 : index
    %c0_429 = arith.constant 0 : index
    %1556 = vector.load %arg2[%c48_428, %c0_429] : memref<128x128xbf16, #tpu.memory_space<vmem>>, vector<8x128xbf16>
    %1557 = arith.extf %1556 : vector<8x128xbf16> to vector<8x128xf32>
    %1558 = vector.extract_strided_slice %1518 {offsets = [6, 0], sizes = [1, 128], strides = [1, 1]} : vector<16x128xf32> to vector<1x128xf32>
    %1559 = vector.broadcast %1558 : vector<1x128xf32> to vector<8x128xf32>
    %1560 = arith.mulf %1559, %1557 : vector<8x128xf32>
    %1561 = arith.addf %1555, %1560 : vector<8x128xf32>
    %c56_430 = arith.constant 56 : index
    %c0_431 = arith.constant 0 : index
    %1562 = vector.load %arg2[%c56_430, %c0_431] : memref<128x128xbf16, #tpu.memory_space<vmem>>, vector<8x128xbf16>
    %1563 = arith.extf %1562 : vector<8x128xbf16> to vector<8x128xf32>
    %1564 = vector.extract_strided_slice %1518 {offsets = [7, 0], sizes = [1, 128], strides = [1, 1]} : vector<16x128xf32> to vector<1x128xf32>
    %1565 = vector.broadcast %1564 : vector<1x128xf32> to vector<8x128xf32>
    %1566 = arith.mulf %1565, %1563 : vector<8x128xf32>
    %1567 = arith.addf %1561, %1566 : vector<8x128xf32>
    %c64_432 = arith.constant 64 : index
    %c0_433 = arith.constant 0 : index
    %1568 = vector.load %arg2[%c64_432, %c0_433] : memref<128x128xbf16, #tpu.memory_space<vmem>>, vector<8x128xbf16>
    %1569 = arith.extf %1568 : vector<8x128xbf16> to vector<8x128xf32>
    %1570 = vector.extract_strided_slice %1518 {offsets = [8, 0], sizes = [1, 128], strides = [1, 1]} : vector<16x128xf32> to vector<1x128xf32>
    %1571 = vector.broadcast %1570 : vector<1x128xf32> to vector<8x128xf32>
    %1572 = arith.mulf %1571, %1569 : vector<8x128xf32>
    %1573 = arith.addf %1567, %1572 : vector<8x128xf32>
    %c72_434 = arith.constant 72 : index
    %c0_435 = arith.constant 0 : index
    %1574 = vector.load %arg2[%c72_434, %c0_435] : memref<128x128xbf16, #tpu.memory_space<vmem>>, vector<8x128xbf16>
    %1575 = arith.extf %1574 : vector<8x128xbf16> to vector<8x128xf32>
    %1576 = vector.extract_strided_slice %1518 {offsets = [9, 0], sizes = [1, 128], strides = [1, 1]} : vector<16x128xf32> to vector<1x128xf32>
    %1577 = vector.broadcast %1576 : vector<1x128xf32> to vector<8x128xf32>
    %1578 = arith.mulf %1577, %1575 : vector<8x128xf32>
    %1579 = arith.addf %1573, %1578 : vector<8x128xf32>
    %c80_436 = arith.constant 80 : index
    %c0_437 = arith.constant 0 : index
    %1580 = vector.load %arg2[%c80_436, %c0_437] : memref<128x128xbf16, #tpu.memory_space<vmem>>, vector<8x128xbf16>
    %1581 = arith.extf %1580 : vector<8x128xbf16> to vector<8x128xf32>
    %1582 = vector.extract_strided_slice %1518 {offsets = [10, 0], sizes = [1, 128], strides = [1, 1]} : vector<16x128xf32> to vector<1x128xf32>
    %1583 = vector.broadcast %1582 : vector<1x128xf32> to vector<8x128xf32>
    %1584 = arith.mulf %1583, %1581 : vector<8x128xf32>
    %1585 = arith.addf %1579, %1584 : vector<8x128xf32>
    %c88_438 = arith.constant 88 : index
    %c0_439 = arith.constant 0 : index
    %1586 = vector.load %arg2[%c88_438, %c0_439] : memref<128x128xbf16, #tpu.memory_space<vmem>>, vector<8x128xbf16>
    %1587 = arith.extf %1586 : vector<8x128xbf16> to vector<8x128xf32>
    %1588 = vector.extract_strided_slice %1518 {offsets = [11, 0], sizes = [1, 128], strides = [1, 1]} : vector<16x128xf32> to vector<1x128xf32>
    %1589 = vector.broadcast %1588 : vector<1x128xf32> to vector<8x128xf32>
    %1590 = arith.mulf %1589, %1587 : vector<8x128xf32>
    %1591 = arith.addf %1585, %1590 : vector<8x128xf32>
    %c96_440 = arith.constant 96 : index
    %c0_441 = arith.constant 0 : index
    %1592 = vector.load %arg2[%c96_440, %c0_441] : memref<128x128xbf16, #tpu.memory_space<vmem>>, vector<8x128xbf16>
    %1593 = arith.extf %1592 : vector<8x128xbf16> to vector<8x128xf32>
    %1594 = vector.extract_strided_slice %1518 {offsets = [12, 0], sizes = [1, 128], strides = [1, 1]} : vector<16x128xf32> to vector<1x128xf32>
    %1595 = vector.broadcast %1594 : vector<1x128xf32> to vector<8x128xf32>
    %1596 = arith.mulf %1595, %1593 : vector<8x128xf32>
    %1597 = arith.addf %1591, %1596 : vector<8x128xf32>
    %c104_442 = arith.constant 104 : index
    %c0_443 = arith.constant 0 : index
    %1598 = vector.load %arg2[%c104_442, %c0_443] : memref<128x128xbf16, #tpu.memory_space<vmem>>, vector<8x128xbf16>
    %1599 = arith.extf %1598 : vector<8x128xbf16> to vector<8x128xf32>
    %1600 = vector.extract_strided_slice %1518 {offsets = [13, 0], sizes = [1, 128], strides = [1, 1]} : vector<16x128xf32> to vector<1x128xf32>
    %1601 = vector.broadcast %1600 : vector<1x128xf32> to vector<8x128xf32>
    %1602 = arith.mulf %1601, %1599 : vector<8x128xf32>
    %1603 = arith.addf %1597, %1602 : vector<8x128xf32>
    %c112_444 = arith.constant 112 : index
    %c0_445 = arith.constant 0 : index
    %1604 = vector.load %arg2[%c112_444, %c0_445] : memref<128x128xbf16, #tpu.memory_space<vmem>>, vector<8x128xbf16>
    %1605 = arith.extf %1604 : vector<8x128xbf16> to vector<8x128xf32>
    %1606 = vector.extract_strided_slice %1518 {offsets = [14, 0], sizes = [1, 128], strides = [1, 1]} : vector<16x128xf32> to vector<1x128xf32>
    %1607 = vector.broadcast %1606 : vector<1x128xf32> to vector<8x128xf32>
    %1608 = arith.mulf %1607, %1605 : vector<8x128xf32>
    %1609 = arith.addf %1603, %1608 : vector<8x128xf32>
    %c120_446 = arith.constant 120 : index
    %c0_447 = arith.constant 0 : index
    %1610 = vector.load %arg2[%c120_446, %c0_447] : memref<128x128xbf16, #tpu.memory_space<vmem>>, vector<8x128xbf16>
    %1611 = arith.extf %1610 : vector<8x128xbf16> to vector<8x128xf32>
    %1612 = vector.extract_strided_slice %1518 {offsets = [15, 0], sizes = [1, 128], strides = [1, 1]} : vector<16x128xf32> to vector<1x128xf32>
    %1613 = vector.broadcast %1612 : vector<1x128xf32> to vector<8x128xf32>
    %1614 = arith.mulf %1613, %1611 : vector<8x128xf32>
    %1615 = arith.addf %1609, %1614 : vector<8x128xf32>
    %c11_448 = arith.constant 11 : index
    %1616 = memref.load %arg3[%c11_448] : memref<45xf32, #tpu.memory_space<smem>>
    %1617 = vector.broadcast %1616 : f32 to vector<16x128xf32>
    %1618 = arith.subf %0, %1617 : vector<16x128xf32>
    %c26_449 = arith.constant 26 : index
    %1619 = memref.load %arg3[%c26_449] : memref<45xf32, #tpu.memory_space<smem>>
    %1620 = vector.broadcast %1619 : f32 to vector<16x128xf32>
    %1621 = arith.subf %1, %1620 : vector<16x128xf32>
    %c41_450 = arith.constant 41 : index
    %1622 = memref.load %arg3[%c41_450] : memref<45xf32, #tpu.memory_space<smem>>
    %1623 = vector.broadcast %1622 : f32 to vector<16x128xf32>
    %1624 = arith.subf %2, %1623 : vector<16x128xf32>
    %1625 = arith.mulf %1618, %1618 : vector<16x128xf32>
    %1626 = arith.mulf %1621, %1621 : vector<16x128xf32>
    %1627 = arith.addf %1625, %1626 : vector<16x128xf32>
    %1628 = arith.mulf %1624, %1624 : vector<16x128xf32>
    %1629 = arith.addf %1627, %1628 : vector<16x128xf32>
    %1630 = math.sqrt %1629 : vector<16x128xf32>
    %cst_451 = arith.constant 1.66666663 : f32
    %1631 = vector.broadcast %cst_451 : f32 to vector<16x128xf32>
    %1632 = arith.mulf %1630, %1631 : vector<16x128xf32>
    %cst_452 = arith.constant 1.000000e+00 : f32
    %1633 = vector.broadcast %cst_452 : f32 to vector<16x128xf32>
    %1634 = arith.subf %1633, %1632 : vector<16x128xf32>
    %cst_453 = arith.constant 0.000000e+00 : f32
    %1635 = vector.broadcast %cst_453 : f32 to vector<16x128xf32>
    %1636 = arith.maximumf %1634, %1635 : vector<16x128xf32>
    %c11_i32_454 = arith.constant 11 : i32
    %1637 = vector.broadcast %c11_i32_454 : i32 to vector<16x128xi32>
    %1638 = arith.cmpi eq, %273, %1637 : vector<16x128xi32>
    %cst_455 = arith.constant 0.000000e+00 : f32
    %1639 = vector.broadcast %cst_455 : f32 to vector<16x128xf32>
    %1640 = arith.select %1638, %1636, %1639 : vector<16x128xi1>, vector<16x128xf32>
    %cst_456 = arith.constant 0.000000e+00 : f32
    %1641 = vector.broadcast %cst_456 : f32 to vector<8x128xf32>
    %c0_457 = arith.constant 0 : index
    %c0_458 = arith.constant 0 : index
    %1642 = vector.load %arg2[%c0_457, %c0_458] : memref<128x128xbf16, #tpu.memory_space<vmem>>, vector<8x128xbf16>
    %1643 = arith.extf %1642 : vector<8x128xbf16> to vector<8x128xf32>
    %1644 = vector.extract_strided_slice %1640 {offsets = [0, 0], sizes = [1, 128], strides = [1, 1]} : vector<16x128xf32> to vector<1x128xf32>
    %1645 = vector.broadcast %1644 : vector<1x128xf32> to vector<8x128xf32>
    %1646 = arith.mulf %1645, %1643 : vector<8x128xf32>
    %1647 = arith.addf %1641, %1646 : vector<8x128xf32>
    %c8_459 = arith.constant 8 : index
    %c0_460 = arith.constant 0 : index
    %1648 = vector.load %arg2[%c8_459, %c0_460] : memref<128x128xbf16, #tpu.memory_space<vmem>>, vector<8x128xbf16>
    %1649 = arith.extf %1648 : vector<8x128xbf16> to vector<8x128xf32>
    %1650 = vector.extract_strided_slice %1640 {offsets = [1, 0], sizes = [1, 128], strides = [1, 1]} : vector<16x128xf32> to vector<1x128xf32>
    %1651 = vector.broadcast %1650 : vector<1x128xf32> to vector<8x128xf32>
    %1652 = arith.mulf %1651, %1649 : vector<8x128xf32>
    %1653 = arith.addf %1647, %1652 : vector<8x128xf32>
    %c16_461 = arith.constant 16 : index
    %c0_462 = arith.constant 0 : index
    %1654 = vector.load %arg2[%c16_461, %c0_462] : memref<128x128xbf16, #tpu.memory_space<vmem>>, vector<8x128xbf16>
    %1655 = arith.extf %1654 : vector<8x128xbf16> to vector<8x128xf32>
    %1656 = vector.extract_strided_slice %1640 {offsets = [2, 0], sizes = [1, 128], strides = [1, 1]} : vector<16x128xf32> to vector<1x128xf32>
    %1657 = vector.broadcast %1656 : vector<1x128xf32> to vector<8x128xf32>
    %1658 = arith.mulf %1657, %1655 : vector<8x128xf32>
    %1659 = arith.addf %1653, %1658 : vector<8x128xf32>
    %c24_463 = arith.constant 24 : index
    %c0_464 = arith.constant 0 : index
    %1660 = vector.load %arg2[%c24_463, %c0_464] : memref<128x128xbf16, #tpu.memory_space<vmem>>, vector<8x128xbf16>
    %1661 = arith.extf %1660 : vector<8x128xbf16> to vector<8x128xf32>
    %1662 = vector.extract_strided_slice %1640 {offsets = [3, 0], sizes = [1, 128], strides = [1, 1]} : vector<16x128xf32> to vector<1x128xf32>
    %1663 = vector.broadcast %1662 : vector<1x128xf32> to vector<8x128xf32>
    %1664 = arith.mulf %1663, %1661 : vector<8x128xf32>
    %1665 = arith.addf %1659, %1664 : vector<8x128xf32>
    %c32_465 = arith.constant 32 : index
    %c0_466 = arith.constant 0 : index
    %1666 = vector.load %arg2[%c32_465, %c0_466] : memref<128x128xbf16, #tpu.memory_space<vmem>>, vector<8x128xbf16>
    %1667 = arith.extf %1666 : vector<8x128xbf16> to vector<8x128xf32>
    %1668 = vector.extract_strided_slice %1640 {offsets = [4, 0], sizes = [1, 128], strides = [1, 1]} : vector<16x128xf32> to vector<1x128xf32>
    %1669 = vector.broadcast %1668 : vector<1x128xf32> to vector<8x128xf32>
    %1670 = arith.mulf %1669, %1667 : vector<8x128xf32>
    %1671 = arith.addf %1665, %1670 : vector<8x128xf32>
    %c40_467 = arith.constant 40 : index
    %c0_468 = arith.constant 0 : index
    %1672 = vector.load %arg2[%c40_467, %c0_468] : memref<128x128xbf16, #tpu.memory_space<vmem>>, vector<8x128xbf16>
    %1673 = arith.extf %1672 : vector<8x128xbf16> to vector<8x128xf32>
    %1674 = vector.extract_strided_slice %1640 {offsets = [5, 0], sizes = [1, 128], strides = [1, 1]} : vector<16x128xf32> to vector<1x128xf32>
    %1675 = vector.broadcast %1674 : vector<1x128xf32> to vector<8x128xf32>
    %1676 = arith.mulf %1675, %1673 : vector<8x128xf32>
    %1677 = arith.addf %1671, %1676 : vector<8x128xf32>
    %c48_469 = arith.constant 48 : index
    %c0_470 = arith.constant 0 : index
    %1678 = vector.load %arg2[%c48_469, %c0_470] : memref<128x128xbf16, #tpu.memory_space<vmem>>, vector<8x128xbf16>
    %1679 = arith.extf %1678 : vector<8x128xbf16> to vector<8x128xf32>
    %1680 = vector.extract_strided_slice %1640 {offsets = [6, 0], sizes = [1, 128], strides = [1, 1]} : vector<16x128xf32> to vector<1x128xf32>
    %1681 = vector.broadcast %1680 : vector<1x128xf32> to vector<8x128xf32>
    %1682 = arith.mulf %1681, %1679 : vector<8x128xf32>
    %1683 = arith.addf %1677, %1682 : vector<8x128xf32>
    %c56_471 = arith.constant 56 : index
    %c0_472 = arith.constant 0 : index
    %1684 = vector.load %arg2[%c56_471, %c0_472] : memref<128x128xbf16, #tpu.memory_space<vmem>>, vector<8x128xbf16>
    %1685 = arith.extf %1684 : vector<8x128xbf16> to vector<8x128xf32>
    %1686 = vector.extract_strided_slice %1640 {offsets = [7, 0], sizes = [1, 128], strides = [1, 1]} : vector<16x128xf32> to vector<1x128xf32>
    %1687 = vector.broadcast %1686 : vector<1x128xf32> to vector<8x128xf32>
    %1688 = arith.mulf %1687, %1685 : vector<8x128xf32>
    %1689 = arith.addf %1683, %1688 : vector<8x128xf32>
    %c64_473 = arith.constant 64 : index
    %c0_474 = arith.constant 0 : index
    %1690 = vector.load %arg2[%c64_473, %c0_474] : memref<128x128xbf16, #tpu.memory_space<vmem>>, vector<8x128xbf16>
    %1691 = arith.extf %1690 : vector<8x128xbf16> to vector<8x128xf32>
    %1692 = vector.extract_strided_slice %1640 {offsets = [8, 0], sizes = [1, 128], strides = [1, 1]} : vector<16x128xf32> to vector<1x128xf32>
    %1693 = vector.broadcast %1692 : vector<1x128xf32> to vector<8x128xf32>
    %1694 = arith.mulf %1693, %1691 : vector<8x128xf32>
    %1695 = arith.addf %1689, %1694 : vector<8x128xf32>
    %c72_475 = arith.constant 72 : index
    %c0_476 = arith.constant 0 : index
    %1696 = vector.load %arg2[%c72_475, %c0_476] : memref<128x128xbf16, #tpu.memory_space<vmem>>, vector<8x128xbf16>
    %1697 = arith.extf %1696 : vector<8x128xbf16> to vector<8x128xf32>
    %1698 = vector.extract_strided_slice %1640 {offsets = [9, 0], sizes = [1, 128], strides = [1, 1]} : vector<16x128xf32> to vector<1x128xf32>
    %1699 = vector.broadcast %1698 : vector<1x128xf32> to vector<8x128xf32>
    %1700 = arith.mulf %1699, %1697 : vector<8x128xf32>
    %1701 = arith.addf %1695, %1700 : vector<8x128xf32>
    %c80_477 = arith.constant 80 : index
    %c0_478 = arith.constant 0 : index
    %1702 = vector.load %arg2[%c80_477, %c0_478] : memref<128x128xbf16, #tpu.memory_space<vmem>>, vector<8x128xbf16>
    %1703 = arith.extf %1702 : vector<8x128xbf16> to vector<8x128xf32>
    %1704 = vector.extract_strided_slice %1640 {offsets = [10, 0], sizes = [1, 128], strides = [1, 1]} : vector<16x128xf32> to vector<1x128xf32>
    %1705 = vector.broadcast %1704 : vector<1x128xf32> to vector<8x128xf32>
    %1706 = arith.mulf %1705, %1703 : vector<8x128xf32>
    %1707 = arith.addf %1701, %1706 : vector<8x128xf32>
    %c88_479 = arith.constant 88 : index
    %c0_480 = arith.constant 0 : index
    %1708 = vector.load %arg2[%c88_479, %c0_480] : memref<128x128xbf16, #tpu.memory_space<vmem>>, vector<8x128xbf16>
    %1709 = arith.extf %1708 : vector<8x128xbf16> to vector<8x128xf32>
    %1710 = vector.extract_strided_slice %1640 {offsets = [11, 0], sizes = [1, 128], strides = [1, 1]} : vector<16x128xf32> to vector<1x128xf32>
    %1711 = vector.broadcast %1710 : vector<1x128xf32> to vector<8x128xf32>
    %1712 = arith.mulf %1711, %1709 : vector<8x128xf32>
    %1713 = arith.addf %1707, %1712 : vector<8x128xf32>
    %c96_481 = arith.constant 96 : index
    %c0_482 = arith.constant 0 : index
    %1714 = vector.load %arg2[%c96_481, %c0_482] : memref<128x128xbf16, #tpu.memory_space<vmem>>, vector<8x128xbf16>
    %1715 = arith.extf %1714 : vector<8x128xbf16> to vector<8x128xf32>
    %1716 = vector.extract_strided_slice %1640 {offsets = [12, 0], sizes = [1, 128], strides = [1, 1]} : vector<16x128xf32> to vector<1x128xf32>
    %1717 = vector.broadcast %1716 : vector<1x128xf32> to vector<8x128xf32>
    %1718 = arith.mulf %1717, %1715 : vector<8x128xf32>
    %1719 = arith.addf %1713, %1718 : vector<8x128xf32>
    %c104_483 = arith.constant 104 : index
    %c0_484 = arith.constant 0 : index
    %1720 = vector.load %arg2[%c104_483, %c0_484] : memref<128x128xbf16, #tpu.memory_space<vmem>>, vector<8x128xbf16>
    %1721 = arith.extf %1720 : vector<8x128xbf16> to vector<8x128xf32>
    %1722 = vector.extract_strided_slice %1640 {offsets = [13, 0], sizes = [1, 128], strides = [1, 1]} : vector<16x128xf32> to vector<1x128xf32>
    %1723 = vector.broadcast %1722 : vector<1x128xf32> to vector<8x128xf32>
    %1724 = arith.mulf %1723, %1721 : vector<8x128xf32>
    %1725 = arith.addf %1719, %1724 : vector<8x128xf32>
    %c112_485 = arith.constant 112 : index
    %c0_486 = arith.constant 0 : index
    %1726 = vector.load %arg2[%c112_485, %c0_486] : memref<128x128xbf16, #tpu.memory_space<vmem>>, vector<8x128xbf16>
    %1727 = arith.extf %1726 : vector<8x128xbf16> to vector<8x128xf32>
    %1728 = vector.extract_strided_slice %1640 {offsets = [14, 0], sizes = [1, 128], strides = [1, 1]} : vector<16x128xf32> to vector<1x128xf32>
    %1729 = vector.broadcast %1728 : vector<1x128xf32> to vector<8x128xf32>
    %1730 = arith.mulf %1729, %1727 : vector<8x128xf32>
    %1731 = arith.addf %1725, %1730 : vector<8x128xf32>
    %c120_487 = arith.constant 120 : index
    %c0_488 = arith.constant 0 : index
    %1732 = vector.load %arg2[%c120_487, %c0_488] : memref<128x128xbf16, #tpu.memory_space<vmem>>, vector<8x128xbf16>
    %1733 = arith.extf %1732 : vector<8x128xbf16> to vector<8x128xf32>
    %1734 = vector.extract_strided_slice %1640 {offsets = [15, 0], sizes = [1, 128], strides = [1, 1]} : vector<16x128xf32> to vector<1x128xf32>
    %1735 = vector.broadcast %1734 : vector<1x128xf32> to vector<8x128xf32>
    %1736 = arith.mulf %1735, %1733 : vector<8x128xf32>
    %1737 = arith.addf %1731, %1736 : vector<8x128xf32>
    %c12_489 = arith.constant 12 : index
    %1738 = memref.load %arg3[%c12_489] : memref<45xf32, #tpu.memory_space<smem>>
    %1739 = vector.broadcast %1738 : f32 to vector<16x128xf32>
    %1740 = arith.subf %0, %1739 : vector<16x128xf32>
    %c27_490 = arith.constant 27 : index
    %1741 = memref.load %arg3[%c27_490] : memref<45xf32, #tpu.memory_space<smem>>
    %1742 = vector.broadcast %1741 : f32 to vector<16x128xf32>
    %1743 = arith.subf %1, %1742 : vector<16x128xf32>
    %c42_491 = arith.constant 42 : index
    %1744 = memref.load %arg3[%c42_491] : memref<45xf32, #tpu.memory_space<smem>>
    %1745 = vector.broadcast %1744 : f32 to vector<16x128xf32>
    %1746 = arith.subf %2, %1745 : vector<16x128xf32>
    %1747 = arith.mulf %1740, %1740 : vector<16x128xf32>
    %1748 = arith.mulf %1743, %1743 : vector<16x128xf32>
    %1749 = arith.addf %1747, %1748 : vector<16x128xf32>
    %1750 = arith.mulf %1746, %1746 : vector<16x128xf32>
    %1751 = arith.addf %1749, %1750 : vector<16x128xf32>
    %1752 = math.sqrt %1751 : vector<16x128xf32>
    %cst_492 = arith.constant 1.66666663 : f32
    %1753 = vector.broadcast %cst_492 : f32 to vector<16x128xf32>
    %1754 = arith.mulf %1752, %1753 : vector<16x128xf32>
    %cst_493 = arith.constant 1.000000e+00 : f32
    %1755 = vector.broadcast %cst_493 : f32 to vector<16x128xf32>
    %1756 = arith.subf %1755, %1754 : vector<16x128xf32>
    %cst_494 = arith.constant 0.000000e+00 : f32
    %1757 = vector.broadcast %cst_494 : f32 to vector<16x128xf32>
    %1758 = arith.maximumf %1756, %1757 : vector<16x128xf32>
    %c12_i32_495 = arith.constant 12 : i32
    %1759 = vector.broadcast %c12_i32_495 : i32 to vector<16x128xi32>
    %1760 = arith.cmpi eq, %273, %1759 : vector<16x128xi32>
    %cst_496 = arith.constant 0.000000e+00 : f32
    %1761 = vector.broadcast %cst_496 : f32 to vector<16x128xf32>
    %1762 = arith.select %1760, %1758, %1761 : vector<16x128xi1>, vector<16x128xf32>
    %cst_497 = arith.constant 0.000000e+00 : f32
    %1763 = vector.broadcast %cst_497 : f32 to vector<8x128xf32>
    %c0_498 = arith.constant 0 : index
    %c0_499 = arith.constant 0 : index
    %1764 = vector.load %arg2[%c0_498, %c0_499] : memref<128x128xbf16, #tpu.memory_space<vmem>>, vector<8x128xbf16>
    %1765 = arith.extf %1764 : vector<8x128xbf16> to vector<8x128xf32>
    %1766 = vector.extract_strided_slice %1762 {offsets = [0, 0], sizes = [1, 128], strides = [1, 1]} : vector<16x128xf32> to vector<1x128xf32>
    %1767 = vector.broadcast %1766 : vector<1x128xf32> to vector<8x128xf32>
    %1768 = arith.mulf %1767, %1765 : vector<8x128xf32>
    %1769 = arith.addf %1763, %1768 : vector<8x128xf32>
    %c8_500 = arith.constant 8 : index
    %c0_501 = arith.constant 0 : index
    %1770 = vector.load %arg2[%c8_500, %c0_501] : memref<128x128xbf16, #tpu.memory_space<vmem>>, vector<8x128xbf16>
    %1771 = arith.extf %1770 : vector<8x128xbf16> to vector<8x128xf32>
    %1772 = vector.extract_strided_slice %1762 {offsets = [1, 0], sizes = [1, 128], strides = [1, 1]} : vector<16x128xf32> to vector<1x128xf32>
    %1773 = vector.broadcast %1772 : vector<1x128xf32> to vector<8x128xf32>
    %1774 = arith.mulf %1773, %1771 : vector<8x128xf32>
    %1775 = arith.addf %1769, %1774 : vector<8x128xf32>
    %c16_502 = arith.constant 16 : index
    %c0_503 = arith.constant 0 : index
    %1776 = vector.load %arg2[%c16_502, %c0_503] : memref<128x128xbf16, #tpu.memory_space<vmem>>, vector<8x128xbf16>
    %1777 = arith.extf %1776 : vector<8x128xbf16> to vector<8x128xf32>
    %1778 = vector.extract_strided_slice %1762 {offsets = [2, 0], sizes = [1, 128], strides = [1, 1]} : vector<16x128xf32> to vector<1x128xf32>
    %1779 = vector.broadcast %1778 : vector<1x128xf32> to vector<8x128xf32>
    %1780 = arith.mulf %1779, %1777 : vector<8x128xf32>
    %1781 = arith.addf %1775, %1780 : vector<8x128xf32>
    %c24_504 = arith.constant 24 : index
    %c0_505 = arith.constant 0 : index
    %1782 = vector.load %arg2[%c24_504, %c0_505] : memref<128x128xbf16, #tpu.memory_space<vmem>>, vector<8x128xbf16>
    %1783 = arith.extf %1782 : vector<8x128xbf16> to vector<8x128xf32>
    %1784 = vector.extract_strided_slice %1762 {offsets = [3, 0], sizes = [1, 128], strides = [1, 1]} : vector<16x128xf32> to vector<1x128xf32>
    %1785 = vector.broadcast %1784 : vector<1x128xf32> to vector<8x128xf32>
    %1786 = arith.mulf %1785, %1783 : vector<8x128xf32>
    %1787 = arith.addf %1781, %1786 : vector<8x128xf32>
    %c32_506 = arith.constant 32 : index
    %c0_507 = arith.constant 0 : index
    %1788 = vector.load %arg2[%c32_506, %c0_507] : memref<128x128xbf16, #tpu.memory_space<vmem>>, vector<8x128xbf16>
    %1789 = arith.extf %1788 : vector<8x128xbf16> to vector<8x128xf32>
    %1790 = vector.extract_strided_slice %1762 {offsets = [4, 0], sizes = [1, 128], strides = [1, 1]} : vector<16x128xf32> to vector<1x128xf32>
    %1791 = vector.broadcast %1790 : vector<1x128xf32> to vector<8x128xf32>
    %1792 = arith.mulf %1791, %1789 : vector<8x128xf32>
    %1793 = arith.addf %1787, %1792 : vector<8x128xf32>
    %c40_508 = arith.constant 40 : index
    %c0_509 = arith.constant 0 : index
    %1794 = vector.load %arg2[%c40_508, %c0_509] : memref<128x128xbf16, #tpu.memory_space<vmem>>, vector<8x128xbf16>
    %1795 = arith.extf %1794 : vector<8x128xbf16> to vector<8x128xf32>
    %1796 = vector.extract_strided_slice %1762 {offsets = [5, 0], sizes = [1, 128], strides = [1, 1]} : vector<16x128xf32> to vector<1x128xf32>
    %1797 = vector.broadcast %1796 : vector<1x128xf32> to vector<8x128xf32>
    %1798 = arith.mulf %1797, %1795 : vector<8x128xf32>
    %1799 = arith.addf %1793, %1798 : vector<8x128xf32>
    %c48_510 = arith.constant 48 : index
    %c0_511 = arith.constant 0 : index
    %1800 = vector.load %arg2[%c48_510, %c0_511] : memref<128x128xbf16, #tpu.memory_space<vmem>>, vector<8x128xbf16>
    %1801 = arith.extf %1800 : vector<8x128xbf16> to vector<8x128xf32>
    %1802 = vector.extract_strided_slice %1762 {offsets = [6, 0], sizes = [1, 128], strides = [1, 1]} : vector<16x128xf32> to vector<1x128xf32>
    %1803 = vector.broadcast %1802 : vector<1x128xf32> to vector<8x128xf32>
    %1804 = arith.mulf %1803, %1801 : vector<8x128xf32>
    %1805 = arith.addf %1799, %1804 : vector<8x128xf32>
    %c56_512 = arith.constant 56 : index
    %c0_513 = arith.constant 0 : index
    %1806 = vector.load %arg2[%c56_512, %c0_513] : memref<128x128xbf16, #tpu.memory_space<vmem>>, vector<8x128xbf16>
    %1807 = arith.extf %1806 : vector<8x128xbf16> to vector<8x128xf32>
    %1808 = vector.extract_strided_slice %1762 {offsets = [7, 0], sizes = [1, 128], strides = [1, 1]} : vector<16x128xf32> to vector<1x128xf32>
    %1809 = vector.broadcast %1808 : vector<1x128xf32> to vector<8x128xf32>
    %1810 = arith.mulf %1809, %1807 : vector<8x128xf32>
    %1811 = arith.addf %1805, %1810 : vector<8x128xf32>
    %c64_514 = arith.constant 64 : index
    %c0_515 = arith.constant 0 : index
    %1812 = vector.load %arg2[%c64_514, %c0_515] : memref<128x128xbf16, #tpu.memory_space<vmem>>, vector<8x128xbf16>
    %1813 = arith.extf %1812 : vector<8x128xbf16> to vector<8x128xf32>
    %1814 = vector.extract_strided_slice %1762 {offsets = [8, 0], sizes = [1, 128], strides = [1, 1]} : vector<16x128xf32> to vector<1x128xf32>
    %1815 = vector.broadcast %1814 : vector<1x128xf32> to vector<8x128xf32>
    %1816 = arith.mulf %1815, %1813 : vector<8x128xf32>
    %1817 = arith.addf %1811, %1816 : vector<8x128xf32>
    %c72_516 = arith.constant 72 : index
    %c0_517 = arith.constant 0 : index
    %1818 = vector.load %arg2[%c72_516, %c0_517] : memref<128x128xbf16, #tpu.memory_space<vmem>>, vector<8x128xbf16>
    %1819 = arith.extf %1818 : vector<8x128xbf16> to vector<8x128xf32>
    %1820 = vector.extract_strided_slice %1762 {offsets = [9, 0], sizes = [1, 128], strides = [1, 1]} : vector<16x128xf32> to vector<1x128xf32>
    %1821 = vector.broadcast %1820 : vector<1x128xf32> to vector<8x128xf32>
    %1822 = arith.mulf %1821, %1819 : vector<8x128xf32>
    %1823 = arith.addf %1817, %1822 : vector<8x128xf32>
    %c80_518 = arith.constant 80 : index
    %c0_519 = arith.constant 0 : index
    %1824 = vector.load %arg2[%c80_518, %c0_519] : memref<128x128xbf16, #tpu.memory_space<vmem>>, vector<8x128xbf16>
    %1825 = arith.extf %1824 : vector<8x128xbf16> to vector<8x128xf32>
    %1826 = vector.extract_strided_slice %1762 {offsets = [10, 0], sizes = [1, 128], strides = [1, 1]} : vector<16x128xf32> to vector<1x128xf32>
    %1827 = vector.broadcast %1826 : vector<1x128xf32> to vector<8x128xf32>
    %1828 = arith.mulf %1827, %1825 : vector<8x128xf32>
    %1829 = arith.addf %1823, %1828 : vector<8x128xf32>
    %c88_520 = arith.constant 88 : index
    %c0_521 = arith.constant 0 : index
    %1830 = vector.load %arg2[%c88_520, %c0_521] : memref<128x128xbf16, #tpu.memory_space<vmem>>, vector<8x128xbf16>
    %1831 = arith.extf %1830 : vector<8x128xbf16> to vector<8x128xf32>
    %1832 = vector.extract_strided_slice %1762 {offsets = [11, 0], sizes = [1, 128], strides = [1, 1]} : vector<16x128xf32> to vector<1x128xf32>
    %1833 = vector.broadcast %1832 : vector<1x128xf32> to vector<8x128xf32>
    %1834 = arith.mulf %1833, %1831 : vector<8x128xf32>
    %1835 = arith.addf %1829, %1834 : vector<8x128xf32>
    %c96_522 = arith.constant 96 : index
    %c0_523 = arith.constant 0 : index
    %1836 = vector.load %arg2[%c96_522, %c0_523] : memref<128x128xbf16, #tpu.memory_space<vmem>>, vector<8x128xbf16>
    %1837 = arith.extf %1836 : vector<8x128xbf16> to vector<8x128xf32>
    %1838 = vector.extract_strided_slice %1762 {offsets = [12, 0], sizes = [1, 128], strides = [1, 1]} : vector<16x128xf32> to vector<1x128xf32>
    %1839 = vector.broadcast %1838 : vector<1x128xf32> to vector<8x128xf32>
    %1840 = arith.mulf %1839, %1837 : vector<8x128xf32>
    %1841 = arith.addf %1835, %1840 : vector<8x128xf32>
    %c104_524 = arith.constant 104 : index
    %c0_525 = arith.constant 0 : index
    %1842 = vector.load %arg2[%c104_524, %c0_525] : memref<128x128xbf16, #tpu.memory_space<vmem>>, vector<8x128xbf16>
    %1843 = arith.extf %1842 : vector<8x128xbf16> to vector<8x128xf32>
    %1844 = vector.extract_strided_slice %1762 {offsets = [13, 0], sizes = [1, 128], strides = [1, 1]} : vector<16x128xf32> to vector<1x128xf32>
    %1845 = vector.broadcast %1844 : vector<1x128xf32> to vector<8x128xf32>
    %1846 = arith.mulf %1845, %1843 : vector<8x128xf32>
    %1847 = arith.addf %1841, %1846 : vector<8x128xf32>
    %c112_526 = arith.constant 112 : index
    %c0_527 = arith.constant 0 : index
    %1848 = vector.load %arg2[%c112_526, %c0_527] : memref<128x128xbf16, #tpu.memory_space<vmem>>, vector<8x128xbf16>
    %1849 = arith.extf %1848 : vector<8x128xbf16> to vector<8x128xf32>
    %1850 = vector.extract_strided_slice %1762 {offsets = [14, 0], sizes = [1, 128], strides = [1, 1]} : vector<16x128xf32> to vector<1x128xf32>
    %1851 = vector.broadcast %1850 : vector<1x128xf32> to vector<8x128xf32>
    %1852 = arith.mulf %1851, %1849 : vector<8x128xf32>
    %1853 = arith.addf %1847, %1852 : vector<8x128xf32>
    %c120_528 = arith.constant 120 : index
    %c0_529 = arith.constant 0 : index
    %1854 = vector.load %arg2[%c120_528, %c0_529] : memref<128x128xbf16, #tpu.memory_space<vmem>>, vector<8x128xbf16>
    %1855 = arith.extf %1854 : vector<8x128xbf16> to vector<8x128xf32>
    %1856 = vector.extract_strided_slice %1762 {offsets = [15, 0], sizes = [1, 128], strides = [1, 1]} : vector<16x128xf32> to vector<1x128xf32>
    %1857 = vector.broadcast %1856 : vector<1x128xf32> to vector<8x128xf32>
    %1858 = arith.mulf %1857, %1855 : vector<8x128xf32>
    %1859 = arith.addf %1853, %1858 : vector<8x128xf32>
    %c13_530 = arith.constant 13 : index
    %1860 = memref.load %arg3[%c13_530] : memref<45xf32, #tpu.memory_space<smem>>
    %1861 = vector.broadcast %1860 : f32 to vector<16x128xf32>
    %1862 = arith.subf %0, %1861 : vector<16x128xf32>
    %c28_531 = arith.constant 28 : index
    %1863 = memref.load %arg3[%c28_531] : memref<45xf32, #tpu.memory_space<smem>>
    %1864 = vector.broadcast %1863 : f32 to vector<16x128xf32>
    %1865 = arith.subf %1, %1864 : vector<16x128xf32>
    %c43_532 = arith.constant 43 : index
    %1866 = memref.load %arg3[%c43_532] : memref<45xf32, #tpu.memory_space<smem>>
    %1867 = vector.broadcast %1866 : f32 to vector<16x128xf32>
    %1868 = arith.subf %2, %1867 : vector<16x128xf32>
    %1869 = arith.mulf %1862, %1862 : vector<16x128xf32>
    %1870 = arith.mulf %1865, %1865 : vector<16x128xf32>
    %1871 = arith.addf %1869, %1870 : vector<16x128xf32>
    %1872 = arith.mulf %1868, %1868 : vector<16x128xf32>
    %1873 = arith.addf %1871, %1872 : vector<16x128xf32>
    %1874 = math.sqrt %1873 : vector<16x128xf32>
    %cst_533 = arith.constant 1.66666663 : f32
    %1875 = vector.broadcast %cst_533 : f32 to vector<16x128xf32>
    %1876 = arith.mulf %1874, %1875 : vector<16x128xf32>
    %cst_534 = arith.constant 1.000000e+00 : f32
    %1877 = vector.broadcast %cst_534 : f32 to vector<16x128xf32>
    %1878 = arith.subf %1877, %1876 : vector<16x128xf32>
    %cst_535 = arith.constant 0.000000e+00 : f32
    %1879 = vector.broadcast %cst_535 : f32 to vector<16x128xf32>
    %1880 = arith.maximumf %1878, %1879 : vector<16x128xf32>
    %c13_i32_536 = arith.constant 13 : i32
    %1881 = vector.broadcast %c13_i32_536 : i32 to vector<16x128xi32>
    %1882 = arith.cmpi eq, %273, %1881 : vector<16x128xi32>
    %cst_537 = arith.constant 0.000000e+00 : f32
    %1883 = vector.broadcast %cst_537 : f32 to vector<16x128xf32>
    %1884 = arith.select %1882, %1880, %1883 : vector<16x128xi1>, vector<16x128xf32>
    %cst_538 = arith.constant 0.000000e+00 : f32
    %1885 = vector.broadcast %cst_538 : f32 to vector<8x128xf32>
    %c0_539 = arith.constant 0 : index
    %c0_540 = arith.constant 0 : index
    %1886 = vector.load %arg2[%c0_539, %c0_540] : memref<128x128xbf16, #tpu.memory_space<vmem>>, vector<8x128xbf16>
    %1887 = arith.extf %1886 : vector<8x128xbf16> to vector<8x128xf32>
    %1888 = vector.extract_strided_slice %1884 {offsets = [0, 0], sizes = [1, 128], strides = [1, 1]} : vector<16x128xf32> to vector<1x128xf32>
    %1889 = vector.broadcast %1888 : vector<1x128xf32> to vector<8x128xf32>
    %1890 = arith.mulf %1889, %1887 : vector<8x128xf32>
    %1891 = arith.addf %1885, %1890 : vector<8x128xf32>
    %c8_541 = arith.constant 8 : index
    %c0_542 = arith.constant 0 : index
    %1892 = vector.load %arg2[%c8_541, %c0_542] : memref<128x128xbf16, #tpu.memory_space<vmem>>, vector<8x128xbf16>
    %1893 = arith.extf %1892 : vector<8x128xbf16> to vector<8x128xf32>
    %1894 = vector.extract_strided_slice %1884 {offsets = [1, 0], sizes = [1, 128], strides = [1, 1]} : vector<16x128xf32> to vector<1x128xf32>
    %1895 = vector.broadcast %1894 : vector<1x128xf32> to vector<8x128xf32>
    %1896 = arith.mulf %1895, %1893 : vector<8x128xf32>
    %1897 = arith.addf %1891, %1896 : vector<8x128xf32>
    %c16_543 = arith.constant 16 : index
    %c0_544 = arith.constant 0 : index
    %1898 = vector.load %arg2[%c16_543, %c0_544] : memref<128x128xbf16, #tpu.memory_space<vmem>>, vector<8x128xbf16>
    %1899 = arith.extf %1898 : vector<8x128xbf16> to vector<8x128xf32>
    %1900 = vector.extract_strided_slice %1884 {offsets = [2, 0], sizes = [1, 128], strides = [1, 1]} : vector<16x128xf32> to vector<1x128xf32>
    %1901 = vector.broadcast %1900 : vector<1x128xf32> to vector<8x128xf32>
    %1902 = arith.mulf %1901, %1899 : vector<8x128xf32>
    %1903 = arith.addf %1897, %1902 : vector<8x128xf32>
    %c24_545 = arith.constant 24 : index
    %c0_546 = arith.constant 0 : index
    %1904 = vector.load %arg2[%c24_545, %c0_546] : memref<128x128xbf16, #tpu.memory_space<vmem>>, vector<8x128xbf16>
    %1905 = arith.extf %1904 : vector<8x128xbf16> to vector<8x128xf32>
    %1906 = vector.extract_strided_slice %1884 {offsets = [3, 0], sizes = [1, 128], strides = [1, 1]} : vector<16x128xf32> to vector<1x128xf32>
    %1907 = vector.broadcast %1906 : vector<1x128xf32> to vector<8x128xf32>
    %1908 = arith.mulf %1907, %1905 : vector<8x128xf32>
    %1909 = arith.addf %1903, %1908 : vector<8x128xf32>
    %c32_547 = arith.constant 32 : index
    %c0_548 = arith.constant 0 : index
    %1910 = vector.load %arg2[%c32_547, %c0_548] : memref<128x128xbf16, #tpu.memory_space<vmem>>, vector<8x128xbf16>
    %1911 = arith.extf %1910 : vector<8x128xbf16> to vector<8x128xf32>
    %1912 = vector.extract_strided_slice %1884 {offsets = [4, 0], sizes = [1, 128], strides = [1, 1]} : vector<16x128xf32> to vector<1x128xf32>
    %1913 = vector.broadcast %1912 : vector<1x128xf32> to vector<8x128xf32>
    %1914 = arith.mulf %1913, %1911 : vector<8x128xf32>
    %1915 = arith.addf %1909, %1914 : vector<8x128xf32>
    %c40_549 = arith.constant 40 : index
    %c0_550 = arith.constant 0 : index
    %1916 = vector.load %arg2[%c40_549, %c0_550] : memref<128x128xbf16, #tpu.memory_space<vmem>>, vector<8x128xbf16>
    %1917 = arith.extf %1916 : vector<8x128xbf16> to vector<8x128xf32>
    %1918 = vector.extract_strided_slice %1884 {offsets = [5, 0], sizes = [1, 128], strides = [1, 1]} : vector<16x128xf32> to vector<1x128xf32>
    %1919 = vector.broadcast %1918 : vector<1x128xf32> to vector<8x128xf32>
    %1920 = arith.mulf %1919, %1917 : vector<8x128xf32>
    %1921 = arith.addf %1915, %1920 : vector<8x128xf32>
    %c48_551 = arith.constant 48 : index
    %c0_552 = arith.constant 0 : index
    %1922 = vector.load %arg2[%c48_551, %c0_552] : memref<128x128xbf16, #tpu.memory_space<vmem>>, vector<8x128xbf16>
    %1923 = arith.extf %1922 : vector<8x128xbf16> to vector<8x128xf32>
    %1924 = vector.extract_strided_slice %1884 {offsets = [6, 0], sizes = [1, 128], strides = [1, 1]} : vector<16x128xf32> to vector<1x128xf32>
    %1925 = vector.broadcast %1924 : vector<1x128xf32> to vector<8x128xf32>
    %1926 = arith.mulf %1925, %1923 : vector<8x128xf32>
    %1927 = arith.addf %1921, %1926 : vector<8x128xf32>
    %c56_553 = arith.constant 56 : index
    %c0_554 = arith.constant 0 : index
    %1928 = vector.load %arg2[%c56_553, %c0_554] : memref<128x128xbf16, #tpu.memory_space<vmem>>, vector<8x128xbf16>
    %1929 = arith.extf %1928 : vector<8x128xbf16> to vector<8x128xf32>
    %1930 = vector.extract_strided_slice %1884 {offsets = [7, 0], sizes = [1, 128], strides = [1, 1]} : vector<16x128xf32> to vector<1x128xf32>
    %1931 = vector.broadcast %1930 : vector<1x128xf32> to vector<8x128xf32>
    %1932 = arith.mulf %1931, %1929 : vector<8x128xf32>
    %1933 = arith.addf %1927, %1932 : vector<8x128xf32>
    %c64_555 = arith.constant 64 : index
    %c0_556 = arith.constant 0 : index
    %1934 = vector.load %arg2[%c64_555, %c0_556] : memref<128x128xbf16, #tpu.memory_space<vmem>>, vector<8x128xbf16>
    %1935 = arith.extf %1934 : vector<8x128xbf16> to vector<8x128xf32>
    %1936 = vector.extract_strided_slice %1884 {offsets = [8, 0], sizes = [1, 128], strides = [1, 1]} : vector<16x128xf32> to vector<1x128xf32>
    %1937 = vector.broadcast %1936 : vector<1x128xf32> to vector<8x128xf32>
    %1938 = arith.mulf %1937, %1935 : vector<8x128xf32>
    %1939 = arith.addf %1933, %1938 : vector<8x128xf32>
    %c72_557 = arith.constant 72 : index
    %c0_558 = arith.constant 0 : index
    %1940 = vector.load %arg2[%c72_557, %c0_558] : memref<128x128xbf16, #tpu.memory_space<vmem>>, vector<8x128xbf16>
    %1941 = arith.extf %1940 : vector<8x128xbf16> to vector<8x128xf32>
    %1942 = vector.extract_strided_slice %1884 {offsets = [9, 0], sizes = [1, 128], strides = [1, 1]} : vector<16x128xf32> to vector<1x128xf32>
    %1943 = vector.broadcast %1942 : vector<1x128xf32> to vector<8x128xf32>
    %1944 = arith.mulf %1943, %1941 : vector<8x128xf32>
    %1945 = arith.addf %1939, %1944 : vector<8x128xf32>
    %c80_559 = arith.constant 80 : index
    %c0_560 = arith.constant 0 : index
    %1946 = vector.load %arg2[%c80_559, %c0_560] : memref<128x128xbf16, #tpu.memory_space<vmem>>, vector<8x128xbf16>
    %1947 = arith.extf %1946 : vector<8x128xbf16> to vector<8x128xf32>
    %1948 = vector.extract_strided_slice %1884 {offsets = [10, 0], sizes = [1, 128], strides = [1, 1]} : vector<16x128xf32> to vector<1x128xf32>
    %1949 = vector.broadcast %1948 : vector<1x128xf32> to vector<8x128xf32>
    %1950 = arith.mulf %1949, %1947 : vector<8x128xf32>
    %1951 = arith.addf %1945, %1950 : vector<8x128xf32>
    %c88_561 = arith.constant 88 : index
    %c0_562 = arith.constant 0 : index
    %1952 = vector.load %arg2[%c88_561, %c0_562] : memref<128x128xbf16, #tpu.memory_space<vmem>>, vector<8x128xbf16>
    %1953 = arith.extf %1952 : vector<8x128xbf16> to vector<8x128xf32>
    %1954 = vector.extract_strided_slice %1884 {offsets = [11, 0], sizes = [1, 128], strides = [1, 1]} : vector<16x128xf32> to vector<1x128xf32>
    %1955 = vector.broadcast %1954 : vector<1x128xf32> to vector<8x128xf32>
    %1956 = arith.mulf %1955, %1953 : vector<8x128xf32>
    %1957 = arith.addf %1951, %1956 : vector<8x128xf32>
    %c96_563 = arith.constant 96 : index
    %c0_564 = arith.constant 0 : index
    %1958 = vector.load %arg2[%c96_563, %c0_564] : memref<128x128xbf16, #tpu.memory_space<vmem>>, vector<8x128xbf16>
    %1959 = arith.extf %1958 : vector<8x128xbf16> to vector<8x128xf32>
    %1960 = vector.extract_strided_slice %1884 {offsets = [12, 0], sizes = [1, 128], strides = [1, 1]} : vector<16x128xf32> to vector<1x128xf32>
    %1961 = vector.broadcast %1960 : vector<1x128xf32> to vector<8x128xf32>
    %1962 = arith.mulf %1961, %1959 : vector<8x128xf32>
    %1963 = arith.addf %1957, %1962 : vector<8x128xf32>
    %c104_565 = arith.constant 104 : index
    %c0_566 = arith.constant 0 : index
    %1964 = vector.load %arg2[%c104_565, %c0_566] : memref<128x128xbf16, #tpu.memory_space<vmem>>, vector<8x128xbf16>
    %1965 = arith.extf %1964 : vector<8x128xbf16> to vector<8x128xf32>
    %1966 = vector.extract_strided_slice %1884 {offsets = [13, 0], sizes = [1, 128], strides = [1, 1]} : vector<16x128xf32> to vector<1x128xf32>
    %1967 = vector.broadcast %1966 : vector<1x128xf32> to vector<8x128xf32>
    %1968 = arith.mulf %1967, %1965 : vector<8x128xf32>
    %1969 = arith.addf %1963, %1968 : vector<8x128xf32>
    %c112_567 = arith.constant 112 : index
    %c0_568 = arith.constant 0 : index
    %1970 = vector.load %arg2[%c112_567, %c0_568] : memref<128x128xbf16, #tpu.memory_space<vmem>>, vector<8x128xbf16>
    %1971 = arith.extf %1970 : vector<8x128xbf16> to vector<8x128xf32>
    %1972 = vector.extract_strided_slice %1884 {offsets = [14, 0], sizes = [1, 128], strides = [1, 1]} : vector<16x128xf32> to vector<1x128xf32>
    %1973 = vector.broadcast %1972 : vector<1x128xf32> to vector<8x128xf32>
    %1974 = arith.mulf %1973, %1971 : vector<8x128xf32>
    %1975 = arith.addf %1969, %1974 : vector<8x128xf32>
    %c120_569 = arith.constant 120 : index
    %c0_570 = arith.constant 0 : index
    %1976 = vector.load %arg2[%c120_569, %c0_570] : memref<128x128xbf16, #tpu.memory_space<vmem>>, vector<8x128xbf16>
    %1977 = arith.extf %1976 : vector<8x128xbf16> to vector<8x128xf32>
    %1978 = vector.extract_strided_slice %1884 {offsets = [15, 0], sizes = [1, 128], strides = [1, 1]} : vector<16x128xf32> to vector<1x128xf32>
    %1979 = vector.broadcast %1978 : vector<1x128xf32> to vector<8x128xf32>
    %1980 = arith.mulf %1979, %1977 : vector<8x128xf32>
    %1981 = arith.addf %1975, %1980 : vector<8x128xf32>
    %c14_571 = arith.constant 14 : index
    %1982 = memref.load %arg3[%c14_571] : memref<45xf32, #tpu.memory_space<smem>>
    %1983 = vector.broadcast %1982 : f32 to vector<16x128xf32>
    %1984 = arith.subf %0, %1983 : vector<16x128xf32>
    %c29_572 = arith.constant 29 : index
    %1985 = memref.load %arg3[%c29_572] : memref<45xf32, #tpu.memory_space<smem>>
    %1986 = vector.broadcast %1985 : f32 to vector<16x128xf32>
    %1987 = arith.subf %1, %1986 : vector<16x128xf32>
    %c44_573 = arith.constant 44 : index
    %1988 = memref.load %arg3[%c44_573] : memref<45xf32, #tpu.memory_space<smem>>
    %1989 = vector.broadcast %1988 : f32 to vector<16x128xf32>
    %1990 = arith.subf %2, %1989 : vector<16x128xf32>
    %1991 = arith.mulf %1984, %1984 : vector<16x128xf32>
    %1992 = arith.mulf %1987, %1987 : vector<16x128xf32>
    %1993 = arith.addf %1991, %1992 : vector<16x128xf32>
    %1994 = arith.mulf %1990, %1990 : vector<16x128xf32>
    %1995 = arith.addf %1993, %1994 : vector<16x128xf32>
    %1996 = math.sqrt %1995 : vector<16x128xf32>
    %cst_574 = arith.constant 1.66666663 : f32
    %1997 = vector.broadcast %cst_574 : f32 to vector<16x128xf32>
    %1998 = arith.mulf %1996, %1997 : vector<16x128xf32>
    %cst_575 = arith.constant 1.000000e+00 : f32
    %1999 = vector.broadcast %cst_575 : f32 to vector<16x128xf32>
    %2000 = arith.subf %1999, %1998 : vector<16x128xf32>
    %cst_576 = arith.constant 0.000000e+00 : f32
    %2001 = vector.broadcast %cst_576 : f32 to vector<16x128xf32>
    %2002 = arith.maximumf %2000, %2001 : vector<16x128xf32>
    %c14_i32_577 = arith.constant 14 : i32
    %2003 = vector.broadcast %c14_i32_577 : i32 to vector<16x128xi32>
    %2004 = arith.cmpi eq, %273, %2003 : vector<16x128xi32>
    %cst_578 = arith.constant 0.000000e+00 : f32
    %2005 = vector.broadcast %cst_578 : f32 to vector<16x128xf32>
    %2006 = arith.select %2004, %2002, %2005 : vector<16x128xi1>, vector<16x128xf32>
    %cst_579 = arith.constant 0.000000e+00 : f32
    %2007 = vector.broadcast %cst_579 : f32 to vector<8x128xf32>
    %c0_580 = arith.constant 0 : index
    %c0_581 = arith.constant 0 : index
    %2008 = vector.load %arg2[%c0_580, %c0_581] : memref<128x128xbf16, #tpu.memory_space<vmem>>, vector<8x128xbf16>
    %2009 = arith.extf %2008 : vector<8x128xbf16> to vector<8x128xf32>
    %2010 = vector.extract_strided_slice %2006 {offsets = [0, 0], sizes = [1, 128], strides = [1, 1]} : vector<16x128xf32> to vector<1x128xf32>
    %2011 = vector.broadcast %2010 : vector<1x128xf32> to vector<8x128xf32>
    %2012 = arith.mulf %2011, %2009 : vector<8x128xf32>
    %2013 = arith.addf %2007, %2012 : vector<8x128xf32>
    %c8_582 = arith.constant 8 : index
    %c0_583 = arith.constant 0 : index
    %2014 = vector.load %arg2[%c8_582, %c0_583] : memref<128x128xbf16, #tpu.memory_space<vmem>>, vector<8x128xbf16>
    %2015 = arith.extf %2014 : vector<8x128xbf16> to vector<8x128xf32>
    %2016 = vector.extract_strided_slice %2006 {offsets = [1, 0], sizes = [1, 128], strides = [1, 1]} : vector<16x128xf32> to vector<1x128xf32>
    %2017 = vector.broadcast %2016 : vector<1x128xf32> to vector<8x128xf32>
    %2018 = arith.mulf %2017, %2015 : vector<8x128xf32>
    %2019 = arith.addf %2013, %2018 : vector<8x128xf32>
    %c16_584 = arith.constant 16 : index
    %c0_585 = arith.constant 0 : index
    %2020 = vector.load %arg2[%c16_584, %c0_585] : memref<128x128xbf16, #tpu.memory_space<vmem>>, vector<8x128xbf16>
    %2021 = arith.extf %2020 : vector<8x128xbf16> to vector<8x128xf32>
    %2022 = vector.extract_strided_slice %2006 {offsets = [2, 0], sizes = [1, 128], strides = [1, 1]} : vector<16x128xf32> to vector<1x128xf32>
    %2023 = vector.broadcast %2022 : vector<1x128xf32> to vector<8x128xf32>
    %2024 = arith.mulf %2023, %2021 : vector<8x128xf32>
    %2025 = arith.addf %2019, %2024 : vector<8x128xf32>
    %c24_586 = arith.constant 24 : index
    %c0_587 = arith.constant 0 : index
    %2026 = vector.load %arg2[%c24_586, %c0_587] : memref<128x128xbf16, #tpu.memory_space<vmem>>, vector<8x128xbf16>
    %2027 = arith.extf %2026 : vector<8x128xbf16> to vector<8x128xf32>
    %2028 = vector.extract_strided_slice %2006 {offsets = [3, 0], sizes = [1, 128], strides = [1, 1]} : vector<16x128xf32> to vector<1x128xf32>
    %2029 = vector.broadcast %2028 : vector<1x128xf32> to vector<8x128xf32>
    %2030 = arith.mulf %2029, %2027 : vector<8x128xf32>
    %2031 = arith.addf %2025, %2030 : vector<8x128xf32>
    %c32_588 = arith.constant 32 : index
    %c0_589 = arith.constant 0 : index
    %2032 = vector.load %arg2[%c32_588, %c0_589] : memref<128x128xbf16, #tpu.memory_space<vmem>>, vector<8x128xbf16>
    %2033 = arith.extf %2032 : vector<8x128xbf16> to vector<8x128xf32>
    %2034 = vector.extract_strided_slice %2006 {offsets = [4, 0], sizes = [1, 128], strides = [1, 1]} : vector<16x128xf32> to vector<1x128xf32>
    %2035 = vector.broadcast %2034 : vector<1x128xf32> to vector<8x128xf32>
    %2036 = arith.mulf %2035, %2033 : vector<8x128xf32>
    %2037 = arith.addf %2031, %2036 : vector<8x128xf32>
    %c40_590 = arith.constant 40 : index
    %c0_591 = arith.constant 0 : index
    %2038 = vector.load %arg2[%c40_590, %c0_591] : memref<128x128xbf16, #tpu.memory_space<vmem>>, vector<8x128xbf16>
    %2039 = arith.extf %2038 : vector<8x128xbf16> to vector<8x128xf32>
    %2040 = vector.extract_strided_slice %2006 {offsets = [5, 0], sizes = [1, 128], strides = [1, 1]} : vector<16x128xf32> to vector<1x128xf32>
    %2041 = vector.broadcast %2040 : vector<1x128xf32> to vector<8x128xf32>
    %2042 = arith.mulf %2041, %2039 : vector<8x128xf32>
    %2043 = arith.addf %2037, %2042 : vector<8x128xf32>
    %c48_592 = arith.constant 48 : index
    %c0_593 = arith.constant 0 : index
    %2044 = vector.load %arg2[%c48_592, %c0_593] : memref<128x128xbf16, #tpu.memory_space<vmem>>, vector<8x128xbf16>
    %2045 = arith.extf %2044 : vector<8x128xbf16> to vector<8x128xf32>
    %2046 = vector.extract_strided_slice %2006 {offsets = [6, 0], sizes = [1, 128], strides = [1, 1]} : vector<16x128xf32> to vector<1x128xf32>
    %2047 = vector.broadcast %2046 : vector<1x128xf32> to vector<8x128xf32>
    %2048 = arith.mulf %2047, %2045 : vector<8x128xf32>
    %2049 = arith.addf %2043, %2048 : vector<8x128xf32>
    %c56_594 = arith.constant 56 : index
    %c0_595 = arith.constant 0 : index
    %2050 = vector.load %arg2[%c56_594, %c0_595] : memref<128x128xbf16, #tpu.memory_space<vmem>>, vector<8x128xbf16>
    %2051 = arith.extf %2050 : vector<8x128xbf16> to vector<8x128xf32>
    %2052 = vector.extract_strided_slice %2006 {offsets = [7, 0], sizes = [1, 128], strides = [1, 1]} : vector<16x128xf32> to vector<1x128xf32>
    %2053 = vector.broadcast %2052 : vector<1x128xf32> to vector<8x128xf32>
    %2054 = arith.mulf %2053, %2051 : vector<8x128xf32>
    %2055 = arith.addf %2049, %2054 : vector<8x128xf32>
    %c64_596 = arith.constant 64 : index
    %c0_597 = arith.constant 0 : index
    %2056 = vector.load %arg2[%c64_596, %c0_597] : memref<128x128xbf16, #tpu.memory_space<vmem>>, vector<8x128xbf16>
    %2057 = arith.extf %2056 : vector<8x128xbf16> to vector<8x128xf32>
    %2058 = vector.extract_strided_slice %2006 {offsets = [8, 0], sizes = [1, 128], strides = [1, 1]} : vector<16x128xf32> to vector<1x128xf32>
    %2059 = vector.broadcast %2058 : vector<1x128xf32> to vector<8x128xf32>
    %2060 = arith.mulf %2059, %2057 : vector<8x128xf32>
    %2061 = arith.addf %2055, %2060 : vector<8x128xf32>
    %c72_598 = arith.constant 72 : index
    %c0_599 = arith.constant 0 : index
    %2062 = vector.load %arg2[%c72_598, %c0_599] : memref<128x128xbf16, #tpu.memory_space<vmem>>, vector<8x128xbf16>
    %2063 = arith.extf %2062 : vector<8x128xbf16> to vector<8x128xf32>
    %2064 = vector.extract_strided_slice %2006 {offsets = [9, 0], sizes = [1, 128], strides = [1, 1]} : vector<16x128xf32> to vector<1x128xf32>
    %2065 = vector.broadcast %2064 : vector<1x128xf32> to vector<8x128xf32>
    %2066 = arith.mulf %2065, %2063 : vector<8x128xf32>
    %2067 = arith.addf %2061, %2066 : vector<8x128xf32>
    %c80_600 = arith.constant 80 : index
    %c0_601 = arith.constant 0 : index
    %2068 = vector.load %arg2[%c80_600, %c0_601] : memref<128x128xbf16, #tpu.memory_space<vmem>>, vector<8x128xbf16>
    %2069 = arith.extf %2068 : vector<8x128xbf16> to vector<8x128xf32>
    %2070 = vector.extract_strided_slice %2006 {offsets = [10, 0], sizes = [1, 128], strides = [1, 1]} : vector<16x128xf32> to vector<1x128xf32>
    %2071 = vector.broadcast %2070 : vector<1x128xf32> to vector<8x128xf32>
    %2072 = arith.mulf %2071, %2069 : vector<8x128xf32>
    %2073 = arith.addf %2067, %2072 : vector<8x128xf32>
    %c88_602 = arith.constant 88 : index
    %c0_603 = arith.constant 0 : index
    %2074 = vector.load %arg2[%c88_602, %c0_603] : memref<128x128xbf16, #tpu.memory_space<vmem>>, vector<8x128xbf16>
    %2075 = arith.extf %2074 : vector<8x128xbf16> to vector<8x128xf32>
    %2076 = vector.extract_strided_slice %2006 {offsets = [11, 0], sizes = [1, 128], strides = [1, 1]} : vector<16x128xf32> to vector<1x128xf32>
    %2077 = vector.broadcast %2076 : vector<1x128xf32> to vector<8x128xf32>
    %2078 = arith.mulf %2077, %2075 : vector<8x128xf32>
    %2079 = arith.addf %2073, %2078 : vector<8x128xf32>
    %c96_604 = arith.constant 96 : index
    %c0_605 = arith.constant 0 : index
    %2080 = vector.load %arg2[%c96_604, %c0_605] : memref<128x128xbf16, #tpu.memory_space<vmem>>, vector<8x128xbf16>
    %2081 = arith.extf %2080 : vector<8x128xbf16> to vector<8x128xf32>
    %2082 = vector.extract_strided_slice %2006 {offsets = [12, 0], sizes = [1, 128], strides = [1, 1]} : vector<16x128xf32> to vector<1x128xf32>
    %2083 = vector.broadcast %2082 : vector<1x128xf32> to vector<8x128xf32>
    %2084 = arith.mulf %2083, %2081 : vector<8x128xf32>
    %2085 = arith.addf %2079, %2084 : vector<8x128xf32>
    %c104_606 = arith.constant 104 : index
    %c0_607 = arith.constant 0 : index
    %2086 = vector.load %arg2[%c104_606, %c0_607] : memref<128x128xbf16, #tpu.memory_space<vmem>>, vector<8x128xbf16>
    %2087 = arith.extf %2086 : vector<8x128xbf16> to vector<8x128xf32>
    %2088 = vector.extract_strided_slice %2006 {offsets = [13, 0], sizes = [1, 128], strides = [1, 1]} : vector<16x128xf32> to vector<1x128xf32>
    %2089 = vector.broadcast %2088 : vector<1x128xf32> to vector<8x128xf32>
    %2090 = arith.mulf %2089, %2087 : vector<8x128xf32>
    %2091 = arith.addf %2085, %2090 : vector<8x128xf32>
    %c112_608 = arith.constant 112 : index
    %c0_609 = arith.constant 0 : index
    %2092 = vector.load %arg2[%c112_608, %c0_609] : memref<128x128xbf16, #tpu.memory_space<vmem>>, vector<8x128xbf16>
    %2093 = arith.extf %2092 : vector<8x128xbf16> to vector<8x128xf32>
    %2094 = vector.extract_strided_slice %2006 {offsets = [14, 0], sizes = [1, 128], strides = [1, 1]} : vector<16x128xf32> to vector<1x128xf32>
    %2095 = vector.broadcast %2094 : vector<1x128xf32> to vector<8x128xf32>
    %2096 = arith.mulf %2095, %2093 : vector<8x128xf32>
    %2097 = arith.addf %2091, %2096 : vector<8x128xf32>
    %c120_610 = arith.constant 120 : index
    %c0_611 = arith.constant 0 : index
    %2098 = vector.load %arg2[%c120_610, %c0_611] : memref<128x128xbf16, #tpu.memory_space<vmem>>, vector<8x128xbf16>
    %2099 = arith.extf %2098 : vector<8x128xbf16> to vector<8x128xf32>
    %2100 = vector.extract_strided_slice %2006 {offsets = [15, 0], sizes = [1, 128], strides = [1, 1]} : vector<16x128xf32> to vector<1x128xf32>
    %2101 = vector.broadcast %2100 : vector<1x128xf32> to vector<8x128xf32>
    %2102 = arith.mulf %2101, %2099 : vector<8x128xf32>
    %2103 = arith.addf %2097, %2102 : vector<8x128xf32>
    %2104 = tpu.concatenate %395, %517, %639, %761, %883, %1005, %1127, %1249, %1371, %1493, %1615, %1737, %1859, %1981, %2103 in 0 : vector<8x128xf32>, vector<8x128xf32>, vector<8x128xf32>, vector<8x128xf32>, vector<8x128xf32>, vector<8x128xf32>, vector<8x128xf32>, vector<8x128xf32>, vector<8x128xf32>, vector<8x128xf32>, vector<8x128xf32>, vector<8x128xf32>, vector<8x128xf32>, vector<8x128xf32>, vector<8x128xf32> -> vector<120x128xf32>
    %2105 = arith.truncf %2104 : vector<120x128xf32> to vector<120x128xbf16>
    %c0_612 = arith.constant 0 : index
    %c0_613 = arith.constant 0 : index
    %2106 = vector.load %arg4[%c0_612, %c0_613] : memref<16x120xbf16, #tpu.memory_space<vmem>>, vector<16x120xbf16>
    %cst_614 = arith.constant dense<0.000000e+00> : vector<16x128xf32>
    %2107 = tpu.matmul %2106, %2105, %cst_614 {dimension_numbers = #tpu.dot_dimension_numbers<[1], [0], [0], [1], [0, 0, 1, 1], [], []>} : vector<16x120xbf16>, vector<120x128xbf16>, vector<16x128xf32> -> vector<16x128xf32>
    %c0_615 = arith.constant 0 : index
    %c0_616 = arith.constant 0 : index
    %2108 = vector.load %arg5[%c0_615, %c0_616] : memref<16x128xf32, #tpu.memory_space<vmem>>, vector<16x128xf32>
    tpu.vector_store %arg5[%c0_615, %c0_616], %2107 {strides = array<i32>} : memref<16x128xf32, #tpu.memory_space<vmem>>, vector<16x128xf32>,
    return
  }
  func.func @transform_0(%arg0: i32) -> (i32, i32) {
    %c0_i32 = arith.constant 0 : i32
    %c0_i32_0 = arith.constant 0 : i32
    return %c0_i32, %arg0 : i32, i32
  }
  func.func @transform_1(%arg0: i32) -> (i32, i32) {
    %c0_i32 = arith.constant 0 : i32
    %c0_i32_0 = arith.constant 0 : i32
    return %c0_i32, %arg0 : i32, i32
  }
  func.func @transform_2(%arg0: i32) -> i32 {
    %c0_i32 = arith.constant 0 : i32
    %c0_i32_0 = arith.constant 0 : i32
    return %c0_i32 : i32
  }
  func.func @transform_3(%arg0: i32) -> (i32, i32) {
    %c0_i32 = arith.constant 0 : i32
    %c0_i32_0 = arith.constant 0 : i32
    %c0_i32_1 = arith.constant 0 : i32
    return %c0_i32, %c0_i32_0 : i32, i32
  }
  func.func @transform_4(%arg0: i32) -> (i32, i32) {
    %c0_i32 = arith.constant 0 : i32
    %c0_i32_0 = arith.constant 0 : i32
    return %c0_i32, %arg0 : i32, i32
  }
}

</mosaic_0001>

<llo_original>
// kernel: tpu_custom_call.1
$region0: #{tpu_custom_call.1}
  #allocation0 [shape = 'u32[]', space=smem, size = 0x4, offset = 0x4, fixed_abs, tag = 'smem constant byte address 0x4 - core index']
  #allocation1 [shape = 'u32[144,128]{1,0:T(1,128)}', space=vmem, size = 0x12000, scoped, tag = 'internal scratch']
  %s0 = inlined_call_operand.hbm [shape: f32[48,128], index: 0, kind: input, shape index: {}]
  %s1 = inlined_call_operand.hbm [shape: bf16[128,128], index: 1, kind: input, shape index: {}]
  %s2 = inlined_call_operand.vmem [shape: f32[45], index: 2, kind: input, shape index: {}]
  %s3 = inlined_call_operand.vmem [shape: bf16[16,120], index: 3, kind: input, shape index: {}]
  %s4 = inlined_call_operand.hbm [shape: f32[16,128], index: 4, kind: output, shape index: {}]
  %s5 = sld [smem:[#allocation0]]
  $region38: #{tpu_custom_call.1} parent=0
    _
  %s7 = ssub.s32 1, %s5
  %s8 = scalar_select 0, %s7, %s5
  $region1: #{tpu_custom_call.1} parent=0
    #allocation2 [shape = 'u8[24576]{0}', space=vmem, size = 0x6000, scoped, tag = 'input window, operand 0, single buffered']
    #allocation3 [shape = 's32[1]{0}', space=sflag, size = 0x4, scoped, tag = 'scoped memory for tpu_custom_call.1']
    #allocation4 [shape = 's32[1]{0}', space=sflag, size = 0x4, scoped, tag = 'scoped memory for tpu_custom_call.1']
    #allocation5 [shape = 's32[1]{0}', space=sflag, size = 0x4, scoped, tag = 'scoped memory for tpu_custom_call.1']
    #allocation6 [shape = 'u8[32768]{0}', space=vmem, size = 0x8000, scoped, tag = 'input window, operand 1, single buffered']
    #allocation7 [shape = 's32[1]{0}', space=sflag, size = 0x4, scoped, tag = 'scoped memory for tpu_custom_call.1']
    #allocation8 [shape = 'u8[512]{0}', space=smem, size = 0x200, scoped, tag = 'input window, operand 2, single buffered']
    #allocation9 [shape = 'u8[8192]{0}', space=vmem, size = 0x2000, scoped, tag = 'output window, operand 0, single buffered']
    %9 = vsyncpa [#allocation3], 0
    %10 = vsyncpa [#allocation7], 0
    %11 = vsyncpa [#allocation5], 0
    %12 = vsyncpa [#allocation4], 0
    // Predicated region
    $region2: #{tpu_custom_call.1} parent=1 // pred_check
      _
    $region3: #{tpu_custom_call.1} parent=1 // pred_check_branch
      %14 = sbr.rel (0) target = $region5
    $region4: #{tpu_custom_call.1} parent=1 // pred_region
      %s16 = ssub.s32 768, 768
      %17 = vsyncadd [#allocation3], %s16
      %s18 = sshll.u32 [#allocation2], 4
      %s19 = int_to_ptr.vmem [resolvable:$true] %s18
      %24 = dma.hbm_to_vmem [thread:$0]  %s0, 768, %s19, [#allocation3], 128, 128, 8
    $region5: #{tpu_custom_call.1} parent=1 // pred_fallthru
      _
    // Predicated region
    $region6: #{tpu_custom_call.1} parent=1 // pred_check
      _
    $region7: #{tpu_custom_call.1} parent=1 // pred_check_branch
      %26 = sbr.rel (0) target = $region9
    $region8: #{tpu_custom_call.1} parent=1 // pred_region
      %s28 = ssub.s32 1024, 1024
      %29 = vsyncadd [#allocation7], %s28
      %s30 = sshll.u32 [#allocation6], 4
      %s31 = int_to_ptr.vmem [resolvable:$true] %s30
      %36 = dma.hbm_to_vmem [thread:$0]  %s1, 1024, %s31, [#allocation7], 64, 64, 4
    $region9: #{tpu_custom_call.1} parent=1 // pred_fallthru
      _
    // Predicated region
    $region10: #{tpu_custom_call.1} parent=1 // pred_check
      _
    $region11: #{tpu_custom_call.1} parent=1 // pred_check_branch
      %38 = sbr.rel (0) target = $region13
    $region12: #{tpu_custom_call.1} parent=1 // pred_region
      %s40 = ssub.s32 16, 16
      %41 = vsyncadd [#allocation5], %s40
      %s43 = sshll.u32 %s2, 4
      %s44 = int_to_ptr.vmem [resolvable:$true] %s43
      %46 = dma.vmem_to_smem %s44, 16, [#allocation8], [#allocation5]
    $region13: #{tpu_custom_call.1} parent=1 // pred_fallthru
      _
    // Predicated region
    $region14: #{tpu_custom_call.1} parent=1 // pred_check
      _
    $region15: #{tpu_custom_call.1} parent=1 // pred_check_branch
      %48 = sbr.rel (0) target = $region17
    $region16: #{tpu_custom_call.1} parent=1 // pred_region
      _
    $region17: #{tpu_custom_call.1} parent=1 // pred_fallthru
      _
    // Predicated region
    $region18: #{tpu_custom_call.1} parent=1 // pred_check
      _
    $region19: #{tpu_custom_call.1} parent=1 // pred_check_branch
      %50 = sbr.rel (0) target = $region21
    $region20: #{tpu_custom_call.1} parent=1 // pred_region
      %51 = dma.done [#allocation3], 768
    $region21: #{tpu_custom_call.1} parent=1 // pred_fallthru
      _
    // Predicated region
    $region22: #{tpu_custom_call.1} parent=1 // pred_check
      _
    $region23: #{tpu_custom_call.1} parent=1 // pred_check_branch
      %53 = sbr.rel (0) target = $region25
    $region24: #{tpu_custom_call.1} parent=1 // pred_region
      %54 = dma.done [#allocation7], 1024
    $region25: #{tpu_custom_call.1} parent=1 // pred_fallthru
      _
    // Predicated region
    $region26: #{tpu_custom_call.1} parent=1 // pred_check
      _
    $region27: #{tpu_custom_call.1} parent=1 // pred_check_branch
      %56 = sbr.rel (0) target = $region29
    $region28: #{tpu_custom_call.1} parent=1 // pred_region
      %57 = dma.done [#allocation5], 16
    $region29: #{tpu_custom_call.1} parent=1 // pred_fallthru
      _
    %58 = sfence
    %v60 = vld [vmem:[#allocation2] sm:$0xff]
    %v61 = vld [vmem:[#allocation2 + $0x8] sm:$0xff]
    %v62 = vld [vmem:[#allocation2 + $0x10] sm:$0xff]
    %v63 = vld [vmem:[#allocation2 + $0x18] sm:$0xff]
    %v64 = vld [vmem:[#allocation2 + $0x20] sm:$0xff]
    %v65 = vld [vmem:[#allocation2 + $0x28] sm:$0xff]
    %s66 = sld [smem:[#allocation8]]
    %v67 = vstv %s66
    %v68 = vsub.f32 %v60, %v67
    %v69 = vsub.f32 %v61, %v67
    %s70 = sld [smem:[#allocation8 + $0xf]]
    %v71 = vstv %s70
    %v72 = vsub.f32 %v62, %v71
    %v73 = vsub.f32 %v63, %v71
    %s74 = sld [smem:[#allocation8 + $0x1e]]
    %v75 = vstv %s74
    %v76 = vsub.f32 %v64, %v75
    %v77 = vsub.f32 %v65, %v75
    %v78 = vmul.f32 %v68, %v68
    %v79 = vmul.f32 %v69, %v69
    %v80 = vmul.f32 %v72, %v72
    %v81 = vmul.f32 %v73, %v73
    %v82 = vadd.f32 %v78, %v80
    %v83 = vadd.f32 %v79, %v81
    %v84 = vmul.f32 %v76, %v76
    %v85 = vmul.f32 %v77, %v77
    %v86 = vadd.f32 %v82, %v84
    %v87 = vadd.f32 %v83, %v85
    %vm88 = vcmp.lt.f32.partialorder %v86, inf
    %vm89 = vcmp.lt.f32.partialorder %v87, inf
    %v90 = vsel %vm88, %v86, inf
    %v91 = vsel %vm89, %v87, inf
    %s92 = sld [smem:[#allocation8 + $0x1]]
    %v93 = vstv %s92
    %v94 = vsub.f32 %v60, %v93
    %v95 = vsub.f32 %v61, %v93
    %s96 = sld [smem:[#allocation8 + $0x10]]
    %v97 = vstv %s96
    %v98 = vsub.f32 %v62, %v97
    %v99 = vsub.f32 %v63, %v97
    %s100 = sld [smem:[#allocation8 + $0x1f]]
    %v101 = vstv %s100
    %v102 = vsub.f32 %v64, %v101
    %v103 = vsub.f32 %v65, %v101
    %v104 = vmul.f32 %v94, %v94
    %v105 = vmul.f32 %v95, %v95
    %v106 = vmul.f32 %v98, %v98
    %v107 = vmul.f32 %v99, %v99
    %v108 = vadd.f32 %v104, %v106
    %v109 = vadd.f32 %v105, %v107
    %v110 = vmul.f32 %v102, %v102
    %v111 = vmul.f32 %v103, %v103
    %v112 = vadd.f32 %v108, %v110
    %v113 = vadd.f32 %v109, %v111
    %vm114 = vcmp.lt.f32.partialorder %v112, %v90
    %vm115 = vcmp.lt.f32.partialorder %v113, %v91
    %v116 = vsel %vm114, 1, 0
    %v117 = vsel %vm115, 1, 0
    %v118 = vsel %vm114, %v112, %v90
    %v119 = vsel %vm115, %v113, %v91
    %s120 = sld [smem:[#allocation8 + $0x2]]
    %v121 = vstv %s120
    %v122 = vsub.f32 %v60, %v121
    %v123 = vsub.f32 %v61, %v121
    %s124 = sld [smem:[#allocation8 + $0x11]]
    %v125 = vstv %s124
    %v126 = vsub.f32 %v62, %v125
    %v127 = vsub.f32 %v63, %v125
    %s128 = sld [smem:[#allocation8 + $0x20]]
    %v129 = vstv %s128
    %v130 = vsub.f32 %v64, %v129
    %v131 = vsub.f32 %v65, %v129
    %v132 = vmul.f32 %v122, %v122
    %v133 = vmul.f32 %v123, %v123
    %v134 = vmul.f32 %v126, %v126
    %v135 = vmul.f32 %v127, %v127
    %v136 = vadd.f32 %v132, %v134
    %v137 = vadd.f32 %v133, %v135
    %v138 = vmul.f32 %v130, %v130
    %v139 = vmul.f32 %v131, %v131
    %v140 = vadd.f32 %v136, %v138
    %v141 = vadd.f32 %v137, %v139
    %vm142 = vcmp.lt.f32.partialorder %v140, %v118
    %vm143 = vcmp.lt.f32.partialorder %v141, %v119
    %v144 = vsel %vm142, 2, %v116
    %v145 = vsel %vm143, 2, %v117
    %v146 = vsel %vm142, %v140, %v118
    %v147 = vsel %vm143, %v141, %v119
    %s148 = sld [smem:[#allocation8 + $0x3]]
    %v149 = vstv %s148
    %v150 = vsub.f32 %v60, %v149
    %v151 = vsub.f32 %v61, %v149
    %s152 = sld [smem:[#allocation8 + $0x12]]
    %v153 = vstv %s152
    %v154 = vsub.f32 %v62, %v153
    %v155 = vsub.f32 %v63, %v153
    %s156 = sld [smem:[#allocation8 + $0x21]]
    %v157 = vstv %s156
    %v158 = vsub.f32 %v64, %v157
    %v159 = vsub.f32 %v65, %v157
    %v160 = vmul.f32 %v150, %v150
    %v161 = vmul.f32 %v151, %v151
    %v162 = vmul.f32 %v154, %v154
    %v163 = vmul.f32 %v155, %v155
    %v164 = vadd.f32 %v160, %v162
    %v165 = vadd.f32 %v161, %v163
    %v166 = vmul.f32 %v158, %v158
    %v167 = vmul.f32 %v159, %v159
    %v168 = vadd.f32 %v164, %v166
    %v169 = vadd.f32 %v165, %v167
    %vm170 = vcmp.lt.f32.partialorder %v168, %v146
    %vm171 = vcmp.lt.f32.partialorder %v169, %v147
    %v172 = vsel %vm170, 3, %v144
    %v173 = vsel %vm171, 3, %v145
    %v174 = vsel %vm170, %v168, %v146
    %v175 = vsel %vm171, %v169, %v147
    %s176 = sld [smem:[#allocation8 + $0x4]]
    %v177 = vstv %s176
    %v178 = vsub.f32 %v60, %v177
    %v179 = vsub.f32 %v61, %v177
    %s180 = sld [smem:[#allocation8 + $0x13]]
    %v181 = vstv %s180
    %v182 = vsub.f32 %v62, %v181
    %v183 = vsub.f32 %v63, %v181
    %s184 = sld [smem:[#allocation8 + $0x22]]
    %v185 = vstv %s184
    %v186 = vsub.f32 %v64, %v185
    %v187 = vsub.f32 %v65, %v185
    %v188 = vmul.f32 %v178, %v178
    %v189 = vmul.f32 %v179, %v179
    %v190 = vmul.f32 %v182, %v182
    %v191 = vmul.f32 %v183, %v183
    %v192 = vadd.f32 %v188, %v190
    %v193 = vadd.f32 %v189, %v191
    %v194 = vmul.f32 %v186, %v186
    %v195 = vmul.f32 %v187, %v187
    %v196 = vadd.f32 %v192, %v194
    %v197 = vadd.f32 %v193, %v195
    %vm198 = vcmp.lt.f32.partialorder %v196, %v174
    %vm199 = vcmp.lt.f32.partialorder %v197, %v175
    %v200 = vsel %vm198, 4, %v172
    %v201 = vsel %vm199, 4, %v173
    %v202 = vsel %vm198, %v196, %v174
    %v203 = vsel %vm199, %v197, %v175
    %s204 = sld [smem:[#allocation8 + $0x5]]
    %v205 = vstv %s204
    %v206 = vsub.f32 %v60, %v205
    %v207 = vsub.f32 %v61, %v205
    %s208 = sld [smem:[#allocation8 + $0x14]]
    %v209 = vstv %s208
    %v210 = vsub.f32 %v62, %v209
    %v211 = vsub.f32 %v63, %v209
    %s212 = sld [smem:[#allocation8 + $0x23]]
    %v213 = vstv %s212
    %v214 = vsub.f32 %v64, %v213
    %v215 = vsub.f32 %v65, %v213
    %v216 = vmul.f32 %v206, %v206
    %v217 = vmul.f32 %v207, %v207
    %v218 = vmul.f32 %v210, %v210
    %v219 = vmul.f32 %v211, %v211
    %v220 = vadd.f32 %v216, %v218
    %v221 = vadd.f32 %v217, %v219
    %v222 = vmul.f32 %v214, %v214
    %v223 = vmul.f32 %v215, %v215
    %v224 = vadd.f32 %v220, %v222
    %v225 = vadd.f32 %v221, %v223
    %vm226 = vcmp.lt.f32.partialorder %v224, %v202
    %vm227 = vcmp.lt.f32.partialorder %v225, %v203
    %v228 = vsel %vm226, 5, %v200
    %v229 = vsel %vm227, 5, %v201
    %v230 = vsel %vm226, %v224, %v202
    %v231 = vsel %vm227, %v225, %v203
    %s232 = sld [smem:[#allocation8 + $0x6]]
    %v233 = vstv %s232
    %v234 = vsub.f32 %v60, %v233
    %v235 = vsub.f32 %v61, %v233
    %s236 = sld [smem:[#allocation8 + $0x15]]
    %v237 = vstv %s236
    %v238 = vsub.f32 %v62, %v237
    %v239 = vsub.f32 %v63, %v237
    %s240 = sld [smem:[#allocation8 + $0x24]]
    %v241 = vstv %s240
    %v242 = vsub.f32 %v64, %v241
    %v243 = vsub.f32 %v65, %v241
    %v244 = vmul.f32 %v234, %v234
    %v245 = vmul.f32 %v235, %v235
    %v246 = vmul.f32 %v238, %v238
    %v247 = vmul.f32 %v239, %v239
    %v248 = vadd.f32 %v244, %v246
    %v249 = vadd.f32 %v245, %v247
    %v250 = vmul.f32 %v242, %v242
    %v251 = vmul.f32 %v243, %v243
    %v252 = vadd.f32 %v248, %v250
    %v253 = vadd.f32 %v249, %v251
    %vm254 = vcmp.lt.f32.partialorder %v252, %v230
    %vm255 = vcmp.lt.f32.partialorder %v253, %v231
    %v256 = vsel %vm254, 6, %v228
    %v257 = vsel %vm255, 6, %v229
    %v258 = vsel %vm254, %v252, %v230
    %v259 = vsel %vm255, %v253, %v231
    %s260 = sld [smem:[#allocation8 + $0x7]]
    %v261 = vstv %s260
    %v262 = vsub.f32 %v60, %v261
    %v263 = vsub.f32 %v61, %v261
    %s264 = sld [smem:[#allocation8 + $0x16]]
    %v265 = vstv %s264
    %v266 = vsub.f32 %v62, %v265
    %v267 = vsub.f32 %v63, %v265
    %s268 = sld [smem:[#allocation8 + $0x25]]
    %v269 = vstv %s268
    %v270 = vsub.f32 %v64, %v269
    %v271 = vsub.f32 %v65, %v269
    %v272 = vmul.f32 %v262, %v262
    %v273 = vmul.f32 %v263, %v263
    %v274 = vmul.f32 %v266, %v266
    %v275 = vmul.f32 %v267, %v267
    %v276 = vadd.f32 %v272, %v274
    %v277 = vadd.f32 %v273, %v275
    %v278 = vmul.f32 %v270, %v270
    %v279 = vmul.f32 %v271, %v271
    %v280 = vadd.f32 %v276, %v278
    %v281 = vadd.f32 %v277, %v279
    %vm282 = vcmp.lt.f32.partialorder %v280, %v258
    %vm283 = vcmp.lt.f32.partialorder %v281, %v259
    %v284 = vsel %vm282, 7, %v256
    %v285 = vsel %vm283, 7, %v257
    %v286 = vsel %vm282, %v280, %v258
    %v287 = vsel %vm283, %v281, %v259
    %s288 = sld [smem:[#allocation8 + $0x8]]
    %v289 = vstv %s288
    %v290 = vsub.f32 %v60, %v289
    %v291 = vsub.f32 %v61, %v289
    %s292 = sld [smem:[#allocation8 + $0x17]]
    %v293 = vstv %s292
    %v294 = vsub.f32 %v62, %v293
    %v295 = vsub.f32 %v63, %v293
    %s296 = sld [smem:[#allocation8 + $0x26]]
    %v297 = vstv %s296
    %v298 = vsub.f32 %v64, %v297
    %v299 = vsub.f32 %v65, %v297
    %v300 = vmul.f32 %v290, %v290
    %v301 = vmul.f32 %v291, %v291
    %v302 = vmul.f32 %v294, %v294
    %v303 = vmul.f32 %v295, %v295
    %v304 = vadd.f32 %v300, %v302
    %v305 = vadd.f32 %v301, %v303
    %v306 = vmul.f32 %v298, %v298
    %v307 = vmul.f32 %v299, %v299
    %v308 = vadd.f32 %v304, %v306
    %v309 = vadd.f32 %v305, %v307
    %vm310 = vcmp.lt.f32.partialorder %v308, %v286
    %vm311 = vcmp.lt.f32.partialorder %v309, %v287
    %v312 = vsel %vm310, 8, %v284
    %v313 = vsel %vm311, 8, %v285
    %v314 = vsel %vm310, %v308, %v286
    %v315 = vsel %vm311, %v309, %v287
    %s316 = sld [smem:[#allocation8 + $0x9]]
    %v317 = vstv %s316
    %v318 = vsub.f32 %v60, %v317
    %v319 = vsub.f32 %v61, %v317
    %s320 = sld [smem:[#allocation8 + $0x18]]
    %v321 = vstv %s320
    %v322 = vsub.f32 %v62, %v321
    %v323 = vsub.f32 %v63, %v321
    %s324 = sld [smem:[#allocation8 + $0x27]]
    %v325 = vstv %s324
    %v326 = vsub.f32 %v64, %v325
    %v327 = vsub.f32 %v65, %v325
    %v328 = vmul.f32 %v318, %v318
    %v329 = vmul.f32 %v319, %v319
    %v330 = vmul.f32 %v322, %v322
    %v331 = vmul.f32 %v323, %v323
    %v332 = vadd.f32 %v328, %v330
    %v333 = vadd.f32 %v329, %v331
    %v334 = vmul.f32 %v326, %v326
    %v335 = vmul.f32 %v327, %v327
    %v336 = vadd.f32 %v332, %v334
    %v337 = vadd.f32 %v333, %v335
    %vm338 = vcmp.lt.f32.partialorder %v336, %v314
    %vm339 = vcmp.lt.f32.partialorder %v337, %v315
    %v340 = vsel %vm338, 9, %v312
    %v341 = vsel %vm339, 9, %v313
    %v342 = vsel %vm338, %v336, %v314
    %v343 = vsel %vm339, %v337, %v315
    %s344 = sld [smem:[#allocation8 + $0xa]]
    %v345 = vstv %s344
    %v346 = vsub.f32 %v60, %v345
    %v347 = vsub.f32 %v61, %v345
    %s348 = sld [smem:[#allocation8 + $0x19]]
    %v349 = vstv %s348
    %v350 = vsub.f32 %v62, %v349
    %v351 = vsub.f32 %v63, %v349
    %s352 = sld [smem:[#allocation8 + $0x28]]
    %v353 = vstv %s352
    %v354 = vsub.f32 %v64, %v353
    %v355 = vsub.f32 %v65, %v353
    %v356 = vmul.f32 %v346, %v346
    %v357 = vmul.f32 %v347, %v347
    %v358 = vmul.f32 %v350, %v350
    %v359 = vmul.f32 %v351, %v351
    %v360 = vadd.f32 %v356, %v358
    %v361 = vadd.f32 %v357, %v359
    %v362 = vmul.f32 %v354, %v354
    %v363 = vmul.f32 %v355, %v355
    %v364 = vadd.f32 %v360, %v362
    %v365 = vadd.f32 %v361, %v363
    %vm366 = vcmp.lt.f32.partialorder %v364, %v342
    %vm367 = vcmp.lt.f32.partialorder %v365, %v343
    %v368 = vsel %vm366, 10, %v340
    %v369 = vsel %vm367, 10, %v341
    %v370 = vsel %vm366, %v364, %v342
    %v371 = vsel %vm367, %v365, %v343
    %s372 = sld [smem:[#allocation8 + $0xb]]
    %v373 = vstv %s372
    %v374 = vsub.f32 %v60, %v373
    %v375 = vsub.f32 %v61, %v373
    %s376 = sld [smem:[#allocation8 + $0x1a]]
    %v377 = vstv %s376
    %v378 = vsub.f32 %v62, %v377
    %v379 = vsub.f32 %v63, %v377
    %s380 = sld [smem:[#allocation8 + $0x29]]
    %v381 = vstv %s380
    %v382 = vsub.f32 %v64, %v381
    %v383 = vsub.f32 %v65, %v381
    %v384 = vmul.f32 %v374, %v374
    %v385 = vmul.f32 %v375, %v375
    %v386 = vmul.f32 %v378, %v378
    %v387 = vmul.f32 %v379, %v379
    %v388 = vadd.f32 %v384, %v386
    %v389 = vadd.f32 %v385, %v387
    %v390 = vmul.f32 %v382, %v382
    %v391 = vmul.f32 %v383, %v383
    %v392 = vadd.f32 %v388, %v390
    %v393 = vadd.f32 %v389, %v391
    %vm394 = vcmp.lt.f32.partialorder %v392, %v370
    %vm395 = vcmp.lt.f32.partialorder %v393, %v371
    %v396 = vsel %vm394, 11, %v368
    %v397 = vsel %vm395, 11, %v369
    %v398 = vsel %vm394, %v392, %v370
    %v399 = vsel %vm395, %v393, %v371
    %s400 = sld [smem:[#allocation8 + $0xc]]
    %v401 = vstv %s400
    %v402 = vsub.f32 %v60, %v401
    %v403 = vsub.f32 %v61, %v401
    %s404 = sld [smem:[#allocation8 + $0x1b]]
    %v405 = vstv %s404
    %v406 = vsub.f32 %v62, %v405
    %v407 = vsub.f32 %v63, %v405
    %s408 = sld [smem:[#allocation8 + $0x2a]]
    %v409 = vstv %s408
    %v410 = vsub.f32 %v64, %v409
    %v411 = vsub.f32 %v65, %v409
    %v412 = vmul.f32 %v402, %v402
    %v413 = vmul.f32 %v403, %v403
    %v414 = vmul.f32 %v406, %v406
    %v415 = vmul.f32 %v407, %v407
    %v416 = vadd.f32 %v412, %v414
    %v417 = vadd.f32 %v413, %v415
    %v418 = vmul.f32 %v410, %v410
    %v419 = vmul.f32 %v411, %v411
    %v420 = vadd.f32 %v416, %v418
    %v421 = vadd.f32 %v417, %v419
    %vm422 = vcmp.lt.f32.partialorder %v420, %v398
    %vm423 = vcmp.lt.f32.partialorder %v421, %v399
    %v424 = vsel %vm422, 12, %v396
    %v425 = vsel %vm423, 12, %v397
    %v426 = vsel %vm422, %v420, %v398
    %v427 = vsel %vm423, %v421, %v399
    %s428 = sld [smem:[#allocation8 + $0xd]]
    %v429 = vstv %s428
    %v430 = vsub.f32 %v60, %v429
    %v431 = vsub.f32 %v61, %v429
    %s432 = sld [smem:[#allocation8 + $0x1c]]
    %v433 = vstv %s432
    %v434 = vsub.f32 %v62, %v433
    %v435 = vsub.f32 %v63, %v433
    %s436 = sld [smem:[#allocation8 + $0x2b]]
    %v437 = vstv %s436
    %v438 = vsub.f32 %v64, %v437
    %v439 = vsub.f32 %v65, %v437
    %v440 = vmul.f32 %v430, %v430
    %v441 = vmul.f32 %v431, %v431
    %v442 = vmul.f32 %v434, %v434
    %v443 = vmul.f32 %v435, %v435
    %v444 = vadd.f32 %v440, %v442
    %v445 = vadd.f32 %v441, %v443
    %v446 = vmul.f32 %v438, %v438
    %v447 = vmul.f32 %v439, %v439
    %v448 = vadd.f32 %v444, %v446
    %v449 = vadd.f32 %v445, %v447
    %vm450 = vcmp.lt.f32.partialorder %v448, %v426
    %vm451 = vcmp.lt.f32.partialorder %v449, %v427
    %v452 = vsel %vm450, 13, %v424
    %v453 = vsel %vm451, 13, %v425
    %v454 = vsel %vm450, %v448, %v426
    %v455 = vsel %vm451, %v449, %v427
    %s456 = sld [smem:[#allocation8 + $0xe]]
    %v457 = vstv %s456
    %v458 = vsub.f32 %v60, %v457
    %v459 = vsub.f32 %v61, %v457
    %s460 = sld [smem:[#allocation8 + $0x1d]]
    %v461 = vstv %s460
    %v462 = vsub.f32 %v62, %v461
    %v463 = vsub.f32 %v63, %v461
    %s464 = sld [smem:[#allocation8 + $0x2c]]
    %v465 = vstv %s464
    %v466 = vsub.f32 %v64, %v465
    %v467 = vsub.f32 %v65, %v465
    %v468 = vmul.f32 %v458, %v458
    %v469 = vmul.f32 %v459, %v459
    %v470 = vmul.f32 %v462, %v462
    %v471 = vmul.f32 %v463, %v463
    %v472 = vadd.f32 %v468, %v470
    %v473 = vadd.f32 %v469, %v471
    %v474 = vmul.f32 %v466, %v466
    %v475 = vmul.f32 %v467, %v467
    %v476 = vadd.f32 %v472, %v474
    %v477 = vadd.f32 %v473, %v475
    %vm478 = vcmp.lt.f32.partialorder %v476, %v454
    %vm479 = vcmp.lt.f32.partialorder %v477, %v455
    %v480 = vsel %vm478, 14, %v452
    %v481 = vsel %vm479, 14, %v453
    %v482 = vrsqrt.pop %v86
    %v483 = vmul.f32 %v86, %v482
    %vm484 = vcmp.eq.f32.partialorder %v86, inf
    %v485 = vsel %vm484, %v86, %v483
    %vm486 = vcmp.eq.f32.partialorder %v86, 0.0
    %v487 = vand.u32 %v86, 2147483648
    %v488 = vsel %vm486, %v487, %v485
    %v489 = vrsqrt.pop %v87
    %v490 = vmul.f32 %v87, %v489
    %vm491 = vcmp.eq.f32.partialorder %v87, inf
    %v492 = vsel %vm491, %v87, %v490
    %vm493 = vcmp.eq.f32.partialorder %v87, 0.0
    %v494 = vand.u32 %v87, 2147483648
    %v495 = vsel %vm493, %v494, %v492
    %v496 = vmul.f32 %v488, 1.6666666
    %v497 = vmul.f32 %v495, 1.6666666
    %v498 = vsub.f32 1.0, %v496
    %v499 = vsub.f32 1.0, %v497
    %v500 = vmax.f32 %v498, 0.0
    %v501 = vmax.f32 %v499, 0.0
    %vm502 = vcmp.eq.s32.totalorder %v480, 0
    %vm503 = vcmp.eq.s32.totalorder %v481, 0
    %v504 = vsel %vm502, %v500, 0.0
    %v505 = vsel %vm503, %v501, 0.0
    %v506 = vld [vmem:[#allocation6] sm:$0xf]
    %v507 = vunpack.c.l.bf16 %v506
    %v508 = vlaneseq
    %v509 = vshrl.u32 %v508, 7
    %v510 = vsub.s32 0, %v509
    %v511 = vrot.slane %v504, %v510
    %v512 = vmul.f32 %v511, %v507
    %v513 = vadd.f32 %v512, 0.0
    %v514 = vld [vmem:[#allocation6 + $0x4] sm:$0xf]
    %v515 = vunpack.c.l.bf16 %v514
    %v516 = vlaneseq
    %v517 = vshrl.u32 %v516, 7
    %v518 = vsub.s32 1, %v517
    %v519 = vrot.slane %v504, %v518
    %v520 = vmul.f32 %v519, %v515
    %v521 = vadd.f32 %v513, %v520
    %v522 = vld [vmem:[#allocation6 + $0x8] sm:$0xf]
    %v523 = vunpack.c.l.bf16 %v522
    %v524 = vlaneseq
    %v525 = vshrl.u32 %v524, 7
    %v526 = vsub.s32 2, %v525
    %v527 = vrot.slane %v504, %v526
    %v528 = vmul.f32 %v527, %v523
    %v529 = vadd.f32 %v521, %v528
    %v530 = vld [vmem:[#allocation6 + $0xc] sm:$0xf]
    %v531 = vunpack.c.l.bf16 %v530
    %v532 = vlaneseq
    %v533 = vshrl.u32 %v532, 7
    %v534 = vsub.s32 3, %v533
    %v535 = vrot.slane %v504, %v534
    %v536 = vmul.f32 %v535, %v531
    %v537 = vadd.f32 %v529, %v536
    %v538 = vld [vmem:[#allocation6 + $0x10] sm:$0xf]
    %v539 = vunpack.c.l.bf16 %v538
    %v540 = vlaneseq
    %v541 = vshrl.u32 %v540, 7
    %v542 = vsub.s32 4, %v541
    %v543 = vrot.slane %v504, %v542
    %v544 = vmul.f32 %v543, %v539
    %v545 = vadd.f32 %v537, %v544
    %v546 = vld [vmem:[#allocation6 + $0x14] sm:$0xf]
    %v547 = vunpack.c.l.bf16 %v546
    %v548 = vlaneseq
    %v549 = vshrl.u32 %v548, 7
    %v550 = vsub.s32 5, %v549
    %v551 = vrot.slane %v504, %v550
    %v552 = vmul.f32 %v551, %v547
    %v553 = vadd.f32 %v545, %v552
    %v554 = vld [vmem:[#allocation6 + $0x18] sm:$0xf]
    %v555 = vunpack.c.l.bf16 %v554
    %v556 = vlaneseq
    %v557 = vshrl.u32 %v556, 7
    %v558 = vsub.s32 6, %v557
    %v559 = vrot.slane %v504, %v558
    %v560 = vmul.f32 %v559, %v555
    %v561 = vadd.f32 %v553, %v560
    %v562 = vld [vmem:[#allocation6 + $0x1c] sm:$0xf]
    %v563 = vunpack.c.l.bf16 %v562
    %v564 = vlaneseq
    %v565 = vshrl.u32 %v564, 7
    %v566 = vsub.s32 7, %v565
    %v567 = vrot.slane %v504, %v566
    %v568 = vmul.f32 %v567, %v563
    %v569 = vadd.f32 %v561, %v568
    %v570 = vld [vmem:[#allocation6 + $0x20] sm:$0xf]
    %v571 = vunpack.c.l.bf16 %v570
    %v572 = vlaneseq
    %v573 = vshrl.u32 %v572, 7
    %v574 = vsub.s32 0, %v573
    %v575 = vrot.slane %v505, %v574
    %v576 = vmul.f32 %v575, %v571
    %v577 = vadd.f32 %v569, %v576
    %v578 = vld [vmem:[#allocation6 + $0x24] sm:$0xf]
    %v579 = vunpack.c.l.bf16 %v578
    %v580 = vlaneseq
    %v581 = vshrl.u32 %v580, 7
    %v582 = vsub.s32 1, %v581
    %v583 = vrot.slane %v505, %v582
    %v584 = vmul.f32 %v583, %v579
    %v585 = vadd.f32 %v577, %v584
    %v586 = vld [vmem:[#allocation6 + $0x28] sm:$0xf]
    %v587 = vunpack.c.l.bf16 %v586
    %v588 = vlaneseq
    %v589 = vshrl.u32 %v588, 7
    %v590 = vsub.s32 2, %v589
    %v591 = vrot.slane %v505, %v590
    %v592 = vmul.f32 %v591, %v587
    %v593 = vadd.f32 %v585, %v592
    %v594 = vld [vmem:[#allocation6 + $0x2c] sm:$0xf]
    %v595 = vunpack.c.l.bf16 %v594
    %v596 = vlaneseq
    %v597 = vshrl.u32 %v596, 7
    %v598 = vsub.s32 3, %v597
    %v599 = vrot.slane %v505, %v598
    %v600 = vmul.f32 %v599, %v595
    %v601 = vadd.f32 %v593, %v600
    %v602 = vld [vmem:[#allocation6 + $0x30] sm:$0xf]
    %v603 = vunpack.c.l.bf16 %v602
    %v604 = vlaneseq
    %v605 = vshrl.u32 %v604, 7
    %v606 = vsub.s32 4, %v605
    %v607 = vrot.slane %v505, %v606
    %v608 = vmul.f32 %v607, %v603
    %v609 = vadd.f32 %v601, %v608
    %v610 = vld [vmem:[#allocation6 + $0x34] sm:$0xf]
    %v611 = vunpack.c.l.bf16 %v610
    %v612 = vlaneseq
    %v613 = vshrl.u32 %v612, 7
    %v614 = vsub.s32 5, %v613
    %v615 = vrot.slane %v505, %v614
    %v616 = vmul.f32 %v615, %v611
    %v617 = vadd.f32 %v609, %v616
    %v618 = vld [vmem:[#allocation6 + $0x38] sm:$0xf]
    %v619 = vunpack.c.l.bf16 %v618
    %v620 = vlaneseq
    %v621 = vshrl.u32 %v620, 7
    %v622 = vsub.s32 6, %v621
    %v623 = vrot.slane %v505, %v622
    %v624 = vmul.f32 %v623, %v619
    %v625 = vadd.f32 %v617, %v624
    %v626 = vld [vmem:[#allocation6 + $0x3c] sm:$0xf]
    %v627 = vunpack.c.l.bf16 %v626
    %v628 = vlaneseq
    %v629 = vshrl.u32 %v628, 7
    %v630 = vsub.s32 7, %v629
    %v631 = vrot.slane %v505, %v630
    %v632 = vmul.f32 %v631, %v627
    %v633 = vadd.f32 %v625, %v632
    %v634 = vrsqrt.pop %v112
    %v635 = vmul.f32 %v112, %v634
    %vm636 = vcmp.eq.f32.partialorder %v112, inf
    %v637 = vsel %vm636, %v112, %v635
    %vm638 = vcmp.eq.f32.partialorder %v112, 0.0
    %v639 = vand.u32 %v112, 2147483648
    %v640 = vsel %vm638, %v639, %v637
    %v641 = vrsqrt.pop %v113
    %v642 = vmul.f32 %v113, %v641
    %vm643 = vcmp.eq.f32.partialorder %v113, inf
    %v644 = vsel %vm643, %v113, %v642
    %vm645 = vcmp.eq.f32.partialorder %v113, 0.0
    %v646 = vand.u32 %v113, 2147483648
    %v647 = vsel %vm645, %v646, %v644
    %v648 = vmul.f32 %v640, 1.6666666
    %v649 = vmul.f32 %v647, 1.6666666
    %v650 = vsub.f32 1.0, %v648
    %v651 = vsub.f32 1.0, %v649
    %v652 = vmax.f32 %v650, 0.0
    %v653 = vmax.f32 %v651, 0.0
    %vm654 = vcmp.eq.s32.totalorder %v480, 1
    %vm655 = vcmp.eq.s32.totalorder %v481, 1
    %v656 = vsel %vm654, %v652, 0.0
    %v657 = vsel %vm655, %v653, 0.0
    %v658 = vlaneseq
    %v659 = vshrl.u32 %v658, 7
    %v660 = vsub.s32 0, %v659
    %v661 = vrot.slane %v656, %v660
    %v662 = vmul.f32 %v661, %v507
    %v663 = vadd.f32 %v662, 0.0
    %v664 = vlaneseq
    %v665 = vshrl.u32 %v664, 7
    %v666 = vsub.s32 1, %v665
    %v667 = vrot.slane %v656, %v666
    %v668 = vmul.f32 %v667, %v515
    %v669 = vadd.f32 %v663, %v668
    %v670 = vlaneseq
    %v671 = vshrl.u32 %v670, 7
    %v672 = vsub.s32 2, %v671
    %v673 = vrot.slane %v656, %v672
    %v674 = vmul.f32 %v673, %v523
    %v675 = vadd.f32 %v669, %v674
    %v676 = vlaneseq
    %v677 = vshrl.u32 %v676, 7
    %v678 = vsub.s32 3, %v677
    %v679 = vrot.slane %v656, %v678
    %v680 = vmul.f32 %v679, %v531
    %v681 = vadd.f32 %v675, %v680
    %v682 = vlaneseq
    %v683 = vshrl.u32 %v682, 7
    %v684 = vsub.s32 4, %v683
    %v685 = vrot.slane %v656, %v684
    %v686 = vmul.f32 %v685, %v539
    %v687 = vadd.f32 %v681, %v686
    %v688 = vlaneseq
    %v689 = vshrl.u32 %v688, 7
    %v690 = vsub.s32 5, %v689
    %v691 = vrot.slane %v656, %v690
    %v692 = vmul.f32 %v691, %v547
    %v693 = vadd.f32 %v687, %v692
    %v694 = vlaneseq
    %v695 = vshrl.u32 %v694, 7
    %v696 = vsub.s32 6, %v695
    %v697 = vrot.slane %v656, %v696
    %v698 = vmul.f32 %v697, %v555
    %v699 = vadd.f32 %v693, %v698
    %v700 = vlaneseq
    %v701 = vshrl.u32 %v700, 7
    %v702 = vsub.s32 7, %v701
    %v703 = vrot.slane %v656, %v702
    %v704 = vmul.f32 %v703, %v563
    %v705 = vadd.f32 %v699, %v704
    %v706 = vlaneseq
    %v707 = vshrl.u32 %v706, 7
    %v708 = vsub.s32 0, %v707
    %v709 = vrot.slane %v657, %v708
    %v710 = vmul.f32 %v709, %v571
    %v711 = vadd.f32 %v705, %v710
    %v712 = vlaneseq
    %v713 = vshrl.u32 %v712, 7
    %v714 = vsub.s32 1, %v713
    %v715 = vrot.slane %v657, %v714
    %v716 = vmul.f32 %v715, %v579
    %v717 = vadd.f32 %v711, %v716
    %v718 = vlaneseq
    %v719 = vshrl.u32 %v718, 7
    %v720 = vsub.s32 2, %v719
    %v721 = vrot.slane %v657, %v720
    %v722 = vmul.f32 %v721, %v587
    %v723 = vadd.f32 %v717, %v722
    %v724 = vlaneseq
    %v725 = vshrl.u32 %v724, 7
    %v726 = vsub.s32 3, %v725
    %v727 = vrot.slane %v657, %v726
    %v728 = vmul.f32 %v727, %v595
    %v729 = vadd.f32 %v723, %v728
    %v730 = vlaneseq
    %v731 = vshrl.u32 %v730, 7
    %v732 = vsub.s32 4, %v731
    %v733 = vrot.slane %v657, %v732
    %v734 = vmul.f32 %v733, %v603
    %v735 = vadd.f32 %v729, %v734
    %v736 = vlaneseq
    %v737 = vshrl.u32 %v736, 7
    %v738 = vsub.s32 5, %v737
    %v739 = vrot.slane %v657, %v738
    %v740 = vmul.f32 %v739, %v611
    %v741 = vadd.f32 %v735, %v740
    %v742 = vlaneseq
    %v743 = vshrl.u32 %v742, 7
    %v744 = vsub.s32 6, %v743
    %v745 = vrot.slane %v657, %v744
    %v746 = vmul.f32 %v745, %v619
    %v747 = vadd.f32 %v741, %v746
    %v748 = vlaneseq
    %v749 = vshrl.u32 %v748, 7
    %v750 = vsub.s32 7, %v749
    %v751 = vrot.slane %v657, %v750
    %v752 = vmul.f32 %v751, %v627
    %v753 = vadd.f32 %v747, %v752
    %v754 = vrsqrt.pop %v140
    %v755 = vmul.f32 %v140, %v754
    %vm756 = vcmp.eq.f32.partialorder %v140, inf
    %v757 = vsel %vm756, %v140, %v755
    %vm758 = vcmp.eq.f32.partialorder %v140, 0.0
    %v759 = vand.u32 %v140, 2147483648
    %v760 = vsel %vm758, %v759, %v757
    %v761 = vrsqrt.pop %v141
    %v762 = vmul.f32 %v141, %v761
    %vm763 = vcmp.eq.f32.partialorder %v141, inf
    %v764 = vsel %vm763, %v141, %v762
    %vm765 = vcmp.eq.f32.partialorder %v141, 0.0
    %v766 = vand.u32 %v141, 2147483648
    %v767 = vsel %vm765, %v766, %v764
    %v768 = vmul.f32 %v760, 1.6666666
    %v769 = vmul.f32 %v767, 1.6666666
    %v770 = vsub.f32 1.0, %v768
    %v771 = vsub.f32 1.0, %v769
    %v772 = vmax.f32 %v770, 0.0
    %v773 = vmax.f32 %v771, 0.0
    %vm774 = vcmp.eq.s32.totalorder %v480, 2
    %vm775 = vcmp.eq.s32.totalorder %v481, 2
    %v776 = vsel %vm774, %v772, 0.0
    %v777 = vsel %vm775, %v773, 0.0
    %v778 = vlaneseq
    %v779 = vshrl.u32 %v778, 7
    %v780 = vsub.s32 0, %v779
    %v781 = vrot.slane %v776, %v780
    %v782 = vmul.f32 %v781, %v507
    %v783 = vadd.f32 %v782, 0.0
    %v784 = vlaneseq
    %v785 = vshrl.u32 %v784, 7
    %v786 = vsub.s32 1, %v785
    %v787 = vrot.slane %v776, %v786
    %v788 = vmul.f32 %v787, %v515
    %v789 = vadd.f32 %v783, %v788
    %v790 = vlaneseq
    %v791 = vshrl.u32 %v790, 7
    %v792 = vsub.s32 2, %v791
    %v793 = vrot.slane %v776, %v792
    %v794 = vmul.f32 %v793, %v523
    %v795 = vadd.f32 %v789, %v794
    %v796 = vlaneseq
    %v797 = vshrl.u32 %v796, 7
    %v798 = vsub.s32 3, %v797
    %v799 = vrot.slane %v776, %v798
    %v800 = vmul.f32 %v799, %v531
    %v801 = vadd.f32 %v795, %v800
    %v802 = vlaneseq
    %v803 = vshrl.u32 %v802, 7
    %v804 = vsub.s32 4, %v803
    %v805 = vrot.slane %v776, %v804
    %v806 = vmul.f32 %v805, %v539
    %v807 = vadd.f32 %v801, %v806
    %v808 = vlaneseq
    %v809 = vshrl.u32 %v808, 7
    %v810 = vsub.s32 5, %v809
    %v811 = vrot.slane %v776, %v810
    %v812 = vmul.f32 %v811, %v547
    %v813 = vadd.f32 %v807, %v812
    %v814 = vlaneseq
    %v815 = vshrl.u32 %v814, 7
    %v816 = vsub.s32 6, %v815
    %v817 = vrot.slane %v776, %v816
    %v818 = vmul.f32 %v817, %v555
    %v819 = vadd.f32 %v813, %v818
    %v820 = vlaneseq
    %v821 = vshrl.u32 %v820, 7
    %v822 = vsub.s32 7, %v821
    %v823 = vrot.slane %v776, %v822
    %v824 = vmul.f32 %v823, %v563
    %v825 = vadd.f32 %v819, %v824
    %v826 = vlaneseq
    %v827 = vshrl.u32 %v826, 7
    %v828 = vsub.s32 0, %v827
    %v829 = vrot.slane %v777, %v828
    %v830 = vmul.f32 %v829, %v571
    %v831 = vadd.f32 %v825, %v830
    %v832 = vlaneseq
    %v833 = vshrl.u32 %v832, 7
    %v834 = vsub.s32 1, %v833
    %v835 = vrot.slane %v777, %v834
    %v836 = vmul.f32 %v835, %v579
    %v837 = vadd.f32 %v831, %v836
    %v838 = vlaneseq
    %v839 = vshrl.u32 %v838, 7
    %v840 = vsub.s32 2, %v839
    %v841 = vrot.slane %v777, %v840
    %v842 = vmul.f32 %v841, %v587
    %v843 = vadd.f32 %v837, %v842
    %v844 = vlaneseq
    %v845 = vshrl.u32 %v844, 7
    %v846 = vsub.s32 3, %v845
    %v847 = vrot.slane %v777, %v846
    %v848 = vmul.f32 %v847, %v595
    %v849 = vadd.f32 %v843, %v848
    %v850 = vlaneseq
    %v851 = vshrl.u32 %v850, 7
    %v852 = vsub.s32 4, %v851
    %v853 = vrot.slane %v777, %v852
    %v854 = vmul.f32 %v853, %v603
    %v855 = vadd.f32 %v849, %v854
    %v856 = vlaneseq
    %v857 = vshrl.u32 %v856, 7
    %v858 = vsub.s32 5, %v857
    %v859 = vrot.slane %v777, %v858
    %v860 = vmul.f32 %v859, %v611
    %v861 = vadd.f32 %v855, %v860
    %v862 = vlaneseq
    %v863 = vshrl.u32 %v862, 7
    %v864 = vsub.s32 6, %v863
    %v865 = vrot.slane %v777, %v864
    %v866 = vmul.f32 %v865, %v619
    %v867 = vadd.f32 %v861, %v866
    %v868 = vlaneseq
    %v869 = vshrl.u32 %v868, 7
    %v870 = vsub.s32 7, %v869
    %v871 = vrot.slane %v777, %v870
    %v872 = vmul.f32 %v871, %v627
    %v873 = vadd.f32 %v867, %v872
    %v874 = vrsqrt.pop %v168
    %v875 = vmul.f32 %v168, %v874
    %vm876 = vcmp.eq.f32.partialorder %v168, inf
    %v877 = vsel %vm876, %v168, %v875
    %vm878 = vcmp.eq.f32.partialorder %v168, 0.0
    %v879 = vand.u32 %v168, 2147483648
    %v880 = vsel %vm878, %v879, %v877
    %v881 = vrsqrt.pop %v169
    %v882 = vmul.f32 %v169, %v881
    %vm883 = vcmp.eq.f32.partialorder %v169, inf
    %v884 = vsel %vm883, %v169, %v882
    %vm885 = vcmp.eq.f32.partialorder %v169, 0.0
    %v886 = vand.u32 %v169, 2147483648
    %v887 = vsel %vm885, %v886, %v884
    %v888 = vmul.f32 %v880, 1.6666666
    %v889 = vmul.f32 %v887, 1.6666666
    %v890 = vsub.f32 1.0, %v888
    %v891 = vsub.f32 1.0, %v889
    %v892 = vmax.f32 %v890, 0.0
    %v893 = vmax.f32 %v891, 0.0
    %vm894 = vcmp.eq.s32.totalorder %v480, 3
    %vm895 = vcmp.eq.s32.totalorder %v481, 3
    %v896 = vsel %vm894, %v892, 0.0
    %v897 = vsel %vm895, %v893, 0.0
    %v898 = vlaneseq
    %v899 = vshrl.u32 %v898, 7
    %v900 = vsub.s32 0, %v899
    %v901 = vrot.slane %v896, %v900
    %v902 = vmul.f32 %v901, %v507
    %v903 = vadd.f32 %v902, 0.0
    %v904 = vlaneseq
    %v905 = vshrl.u32 %v904, 7
    %v906 = vsub.s32 1, %v905
    %v907 = vrot.slane %v896, %v906
    %v908 = vmul.f32 %v907, %v515
    %v909 = vadd.f32 %v903, %v908
    %v910 = vlaneseq
    %v911 = vshrl.u32 %v910, 7
    %v912 = vsub.s32 2, %v911
    %v913 = vrot.slane %v896, %v912
    %v914 = vmul.f32 %v913, %v523
    %v915 = vadd.f32 %v909, %v914
    %v916 = vlaneseq
    %v917 = vshrl.u32 %v916, 7
    %v918 = vsub.s32 3, %v917
    %v919 = vrot.slane %v896, %v918
    %v920 = vmul.f32 %v919, %v531
    %v921 = vadd.f32 %v915, %v920
    %v922 = vlaneseq
    %v923 = vshrl.u32 %v922, 7
    %v924 = vsub.s32 4, %v923
    %v925 = vrot.slane %v896, %v924
    %v926 = vmul.f32 %v925, %v539
    %v927 = vadd.f32 %v921, %v926
    %v928 = vlaneseq
    %v929 = vshrl.u32 %v928, 7
    %v930 = vsub.s32 5, %v929
    %v931 = vrot.slane %v896, %v930
    %v932 = vmul.f32 %v931, %v547
    %v933 = vadd.f32 %v927, %v932
    %v934 = vlaneseq
    %v935 = vshrl.u32 %v934, 7
    %v936 = vsub.s32 6, %v935
    %v937 = vrot.slane %v896, %v936
    %v938 = vmul.f32 %v937, %v555
    %v939 = vadd.f32 %v933, %v938
    %v940 = vlaneseq
    %v941 = vshrl.u32 %v940, 7
    %v942 = vsub.s32 7, %v941
    %v943 = vrot.slane %v896, %v942
    %v944 = vmul.f32 %v943, %v563
    %v945 = vadd.f32 %v939, %v944
    %v946 = vlaneseq
    %v947 = vshrl.u32 %v946, 7
    %v948 = vsub.s32 0, %v947
    %v949 = vrot.slane %v897, %v948
    %v950 = vmul.f32 %v949, %v571
    %v951 = vadd.f32 %v945, %v950
    %v952 = vlaneseq
    %v953 = vshrl.u32 %v952, 7
    %v954 = vsub.s32 1, %v953
    %v955 = vrot.slane %v897, %v954
    %v956 = vmul.f32 %v955, %v579
    %v957 = vadd.f32 %v951, %v956
    %v958 = vlaneseq
    %v959 = vshrl.u32 %v958, 7
    %v960 = vsub.s32 2, %v959
    %v961 = vrot.slane %v897, %v960
    %v962 = vmul.f32 %v961, %v587
    %v963 = vadd.f32 %v957, %v962
    %v964 = vlaneseq
    %v965 = vshrl.u32 %v964, 7
    %v966 = vsub.s32 3, %v965
    %v967 = vrot.slane %v897, %v966
    %v968 = vmul.f32 %v967, %v595
    %v969 = vadd.f32 %v963, %v968
    %v970 = vlaneseq
    %v971 = vshrl.u32 %v970, 7
    %v972 = vsub.s32 4, %v971
    %v973 = vrot.slane %v897, %v972
    %v974 = vmul.f32 %v973, %v603
    %v975 = vadd.f32 %v969, %v974
    %v976 = vlaneseq
    %v977 = vshrl.u32 %v976, 7
    %v978 = vsub.s32 5, %v977
    %v979 = vrot.slane %v897, %v978
    %v980 = vmul.f32 %v979, %v611
    %v981 = vadd.f32 %v975, %v980
    %v982 = vlaneseq
    %v983 = vshrl.u32 %v982, 7
    %v984 = vsub.s32 6, %v983
    %v985 = vrot.slane %v897, %v984
    %v986 = vmul.f32 %v985, %v619
    %v987 = vadd.f32 %v981, %v986
    %v988 = vlaneseq
    %v989 = vshrl.u32 %v988, 7
    %v990 = vsub.s32 7, %v989
    %v991 = vrot.slane %v897, %v990
    %v992 = vmul.f32 %v991, %v627
    %v993 = vadd.f32 %v987, %v992
    %v994 = vrsqrt.pop %v196
    %v995 = vmul.f32 %v196, %v994
    %vm996 = vcmp.eq.f32.partialorder %v196, inf
    %v997 = vsel %vm996, %v196, %v995
    %vm998 = vcmp.eq.f32.partialorder %v196, 0.0
    %v999 = vand.u32 %v196, 2147483648
    %v1000 = vsel %vm998, %v999, %v997
    %v1001 = vrsqrt.pop %v197
    %v1002 = vmul.f32 %v197, %v1001
    %vm1003 = vcmp.eq.f32.partialorder %v197, inf
    %v1004 = vsel %vm1003, %v197, %v1002
    %vm1005 = vcmp.eq.f32.partialorder %v197, 0.0
    %v1006 = vand.u32 %v197, 2147483648
    %v1007 = vsel %vm1005, %v1006, %v1004
    %v1008 = vmul.f32 %v1000, 1.6666666
    %v1009 = vmul.f32 %v1007, 1.6666666
    %v1010 = vsub.f32 1.0, %v1008
    %v1011 = vsub.f32 1.0, %v1009
    %v1012 = vmax.f32 %v1010, 0.0
    %v1013 = vmax.f32 %v1011, 0.0
    %vm1014 = vcmp.eq.s32.totalorder %v480, 4
    %vm1015 = vcmp.eq.s32.totalorder %v481, 4
    %v1016 = vsel %vm1014, %v1012, 0.0
    %v1017 = vsel %vm1015, %v1013, 0.0
    %v1018 = vlaneseq
    %v1019 = vshrl.u32 %v1018, 7
    %v1020 = vsub.s32 0, %v1019
    %v1021 = vrot.slane %v1016, %v1020
    %v1022 = vmul.f32 %v1021, %v507
    %v1023 = vadd.f32 %v1022, 0.0
    %v1024 = vlaneseq
    %v1025 = vshrl.u32 %v1024, 7
    %v1026 = vsub.s32 1, %v1025
    %v1027 = vrot.slane %v1016, %v1026
    %v1028 = vmul.f32 %v1027, %v515
    %v1029 = vadd.f32 %v1023, %v1028
    %v1030 = vlaneseq
    %v1031 = vshrl.u32 %v1030, 7
    %v1032 = vsub.s32 2, %v1031
    %v1033 = vrot.slane %v1016, %v1032
    %v1034 = vmul.f32 %v1033, %v523
    %v1035 = vadd.f32 %v1029, %v1034
    %v1036 = vlaneseq
    %v1037 = vshrl.u32 %v1036, 7
    %v1038 = vsub.s32 3, %v1037
    %v1039 = vrot.slane %v1016, %v1038
    %v1040 = vmul.f32 %v1039, %v531
    %v1041 = vadd.f32 %v1035, %v1040
    %v1042 = vlaneseq
    %v1043 = vshrl.u32 %v1042, 7
    %v1044 = vsub.s32 4, %v1043
    %v1045 = vrot.slane %v1016, %v1044
    %v1046 = vmul.f32 %v1045, %v539
    %v1047 = vadd.f32 %v1041, %v1046
    %v1048 = vlaneseq
    %v1049 = vshrl.u32 %v1048, 7
    %v1050 = vsub.s32 5, %v1049
    %v1051 = vrot.slane %v1016, %v1050
    %v1052 = vmul.f32 %v1051, %v547
    %v1053 = vadd.f32 %v1047, %v1052
    %v1054 = vlaneseq
    %v1055 = vshrl.u32 %v1054, 7
    %v1056 = vsub.s32 6, %v1055
    %v1057 = vrot.slane %v1016, %v1056
    %v1058 = vmul.f32 %v1057, %v555
    %v1059 = vadd.f32 %v1053, %v1058
    %v1060 = vlaneseq
    %v1061 = vshrl.u32 %v1060, 7
    %v1062 = vsub.s32 7, %v1061
    %v1063 = vrot.slane %v1016, %v1062
    %v1064 = vmul.f32 %v1063, %v563
    %v1065 = vadd.f32 %v1059, %v1064
    %v1066 = vlaneseq
    %v1067 = vshrl.u32 %v1066, 7
    %v1068 = vsub.s32 0, %v1067
    %v1069 = vrot.slane %v1017, %v1068
    %v1070 = vmul.f32 %v1069, %v571
    %v1071 = vadd.f32 %v1065, %v1070
    %v1072 = vlaneseq
    %v1073 = vshrl.u32 %v1072, 7
    %v1074 = vsub.s32 1, %v1073
    %v1075 = vrot.slane %v1017, %v1074
    %v1076 = vmul.f32 %v1075, %v579
    %v1077 = vadd.f32 %v1071, %v1076
    %v1078 = vlaneseq
    %v1079 = vshrl.u32 %v1078, 7
    %v1080 = vsub.s32 2, %v1079
    %v1081 = vrot.slane %v1017, %v1080
    %v1082 = vmul.f32 %v1081, %v587
    %v1083 = vadd.f32 %v1077, %v1082
    %v1084 = vlaneseq
    %v1085 = vshrl.u32 %v1084, 7
    %v1086 = vsub.s32 3, %v1085
    %v1087 = vrot.slane %v1017, %v1086
    %v1088 = vmul.f32 %v1087, %v595
    %v1089 = vadd.f32 %v1083, %v1088
    %v1090 = vlaneseq
    %v1091 = vshrl.u32 %v1090, 7
    %v1092 = vsub.s32 4, %v1091
    %v1093 = vrot.slane %v1017, %v1092
    %v1094 = vmul.f32 %v1093, %v603
    %v1095 = vadd.f32 %v1089, %v1094
    %v1096 = vlaneseq
    %v1097 = vshrl.u32 %v1096, 7
    %v1098 = vsub.s32 5, %v1097
    %v1099 = vrot.slane %v1017, %v1098
    %v1100 = vmul.f32 %v1099, %v611
    %v1101 = vadd.f32 %v1095, %v1100
    %v1102 = vlaneseq
    %v1103 = vshrl.u32 %v1102, 7
    %v1104 = vsub.s32 6, %v1103
    %v1105 = vrot.slane %v1017, %v1104
    %v1106 = vmul.f32 %v1105, %v619
    %v1107 = vadd.f32 %v1101, %v1106
    %v1108 = vlaneseq
    %v1109 = vshrl.u32 %v1108, 7
    %v1110 = vsub.s32 7, %v1109
    %v1111 = vrot.slane %v1017, %v1110
    %v1112 = vmul.f32 %v1111, %v627
    %v1113 = vadd.f32 %v1107, %v1112
    %v1114 = vrsqrt.pop %v224
    %v1115 = vmul.f32 %v224, %v1114
    %vm1116 = vcmp.eq.f32.partialorder %v224, inf
    %v1117 = vsel %vm1116, %v224, %v1115
    %vm1118 = vcmp.eq.f32.partialorder %v224, 0.0
    %v1119 = vand.u32 %v224, 2147483648
    %v1120 = vsel %vm1118, %v1119, %v1117
    %v1121 = vrsqrt.pop %v225
    %v1122 = vmul.f32 %v225, %v1121
    %vm1123 = vcmp.eq.f32.partialorder %v225, inf
    %v1124 = vsel %vm1123, %v225, %v1122
    %vm1125 = vcmp.eq.f32.partialorder %v225, 0.0
    %v1126 = vand.u32 %v225, 2147483648
    %v1127 = vsel %vm1125, %v1126, %v1124
    %v1128 = vmul.f32 %v1120, 1.6666666
    %v1129 = vmul.f32 %v1127, 1.6666666
    %v1130 = vsub.f32 1.0, %v1128
    %v1131 = vsub.f32 1.0, %v1129
    %v1132 = vmax.f32 %v1130, 0.0
    %v1133 = vmax.f32 %v1131, 0.0
    %vm1134 = vcmp.eq.s32.totalorder %v480, 5
    %vm1135 = vcmp.eq.s32.totalorder %v481, 5
    %v1136 = vsel %vm1134, %v1132, 0.0
    %v1137 = vsel %vm1135, %v1133, 0.0
    %v1138 = vlaneseq
    %v1139 = vshrl.u32 %v1138, 7
    %v1140 = vsub.s32 0, %v1139
    %v1141 = vrot.slane %v1136, %v1140
    %v1142 = vmul.f32 %v1141, %v507
    %v1143 = vadd.f32 %v1142, 0.0
    %v1144 = vlaneseq
    %v1145 = vshrl.u32 %v1144, 7
    %v1146 = vsub.s32 1, %v1145
    %v1147 = vrot.slane %v1136, %v1146
    %v1148 = vmul.f32 %v1147, %v515
    %v1149 = vadd.f32 %v1143, %v1148
    %v1150 = vlaneseq
    %v1151 = vshrl.u32 %v1150, 7
    %v1152 = vsub.s32 2, %v1151
    %v1153 = vrot.slane %v1136, %v1152
    %v1154 = vmul.f32 %v1153, %v523
    %v1155 = vadd.f32 %v1149, %v1154
    %v1156 = vlaneseq
    %v1157 = vshrl.u32 %v1156, 7
    %v1158 = vsub.s32 3, %v1157
    %v1159 = vrot.slane %v1136, %v1158
    %v1160 = vmul.f32 %v1159, %v531
    %v1161 = vadd.f32 %v1155, %v1160
    %v1162 = vlaneseq
    %v1163 = vshrl.u32 %v1162, 7
    %v1164 = vsub.s32 4, %v1163
    %v1165 = vrot.slane %v1136, %v1164
    %v1166 = vmul.f32 %v1165, %v539
    %v1167 = vadd.f32 %v1161, %v1166
    %v1168 = vlaneseq
    %v1169 = vshrl.u32 %v1168, 7
    %v1170 = vsub.s32 5, %v1169
    %v1171 = vrot.slane %v1136, %v1170
    %v1172 = vmul.f32 %v1171, %v547
    %v1173 = vadd.f32 %v1167, %v1172
    %v1174 = vlaneseq
    %v1175 = vshrl.u32 %v1174, 7
    %v1176 = vsub.s32 6, %v1175
    %v1177 = vrot.slane %v1136, %v1176
    %v1178 = vmul.f32 %v1177, %v555
    %v1179 = vadd.f32 %v1173, %v1178
    %v1180 = vlaneseq
    %v1181 = vshrl.u32 %v1180, 7
    %v1182 = vsub.s32 7, %v1181
    %v1183 = vrot.slane %v1136, %v1182
    %v1184 = vmul.f32 %v1183, %v563
    %v1185 = vadd.f32 %v1179, %v1184
    %v1186 = vlaneseq
    %v1187 = vshrl.u32 %v1186, 7
    %v1188 = vsub.s32 0, %v1187
    %v1189 = vrot.slane %v1137, %v1188
    %v1190 = vmul.f32 %v1189, %v571
    %v1191 = vadd.f32 %v1185, %v1190
    %v1192 = vlaneseq
    %v1193 = vshrl.u32 %v1192, 7
    %v1194 = vsub.s32 1, %v1193
    %v1195 = vrot.slane %v1137, %v1194
    %v1196 = vmul.f32 %v1195, %v579
    %v1197 = vadd.f32 %v1191, %v1196
    %v1198 = vlaneseq
    %v1199 = vshrl.u32 %v1198, 7
    %v1200 = vsub.s32 2, %v1199
    %v1201 = vrot.slane %v1137, %v1200
    %v1202 = vmul.f32 %v1201, %v587
    %v1203 = vadd.f32 %v1197, %v1202
    %v1204 = vlaneseq
    %v1205 = vshrl.u32 %v1204, 7
    %v1206 = vsub.s32 3, %v1205
    %v1207 = vrot.slane %v1137, %v1206
    %v1208 = vmul.f32 %v1207, %v595
    %v1209 = vadd.f32 %v1203, %v1208
    %v1210 = vlaneseq
    %v1211 = vshrl.u32 %v1210, 7
    %v1212 = vsub.s32 4, %v1211
    %v1213 = vrot.slane %v1137, %v1212
    %v1214 = vmul.f32 %v1213, %v603
    %v1215 = vadd.f32 %v1209, %v1214
    %v1216 = vlaneseq
    %v1217 = vshrl.u32 %v1216, 7
    %v1218 = vsub.s32 5, %v1217
    %v1219 = vrot.slane %v1137, %v1218
    %v1220 = vmul.f32 %v1219, %v611
    %v1221 = vadd.f32 %v1215, %v1220
    %v1222 = vlaneseq
    %v1223 = vshrl.u32 %v1222, 7
    %v1224 = vsub.s32 6, %v1223
    %v1225 = vrot.slane %v1137, %v1224
    %v1226 = vmul.f32 %v1225, %v619
    %v1227 = vadd.f32 %v1221, %v1226
    %v1228 = vlaneseq
    %v1229 = vshrl.u32 %v1228, 7
    %v1230 = vsub.s32 7, %v1229
    %v1231 = vrot.slane %v1137, %v1230
    %v1232 = vmul.f32 %v1231, %v627
    %v1233 = vadd.f32 %v1227, %v1232
    %v1234 = vrsqrt.pop %v252
    %v1235 = vmul.f32 %v252, %v1234
    %vm1236 = vcmp.eq.f32.partialorder %v252, inf
    %v1237 = vsel %vm1236, %v252, %v1235
    %vm1238 = vcmp.eq.f32.partialorder %v252, 0.0
    %v1239 = vand.u32 %v252, 2147483648
    %v1240 = vsel %vm1238, %v1239, %v1237
    %v1241 = vrsqrt.pop %v253
    %v1242 = vmul.f32 %v253, %v1241
    %vm1243 = vcmp.eq.f32.partialorder %v253, inf
    %v1244 = vsel %vm1243, %v253, %v1242
    %vm1245 = vcmp.eq.f32.partialorder %v253, 0.0
    %v1246 = vand.u32 %v253, 2147483648
    %v1247 = vsel %vm1245, %v1246, %v1244
    %v1248 = vmul.f32 %v1240, 1.6666666
    %v1249 = vmul.f32 %v1247, 1.6666666
    %v1250 = vsub.f32 1.0, %v1248
    %v1251 = vsub.f32 1.0, %v1249
    %v1252 = vmax.f32 %v1250, 0.0
    %v1253 = vmax.f32 %v1251, 0.0
    %vm1254 = vcmp.eq.s32.totalorder %v480, 6
    %vm1255 = vcmp.eq.s32.totalorder %v481, 6
    %v1256 = vsel %vm1254, %v1252, 0.0
    %v1257 = vsel %vm1255, %v1253, 0.0
    %v1258 = vlaneseq
    %v1259 = vshrl.u32 %v1258, 7
    %v1260 = vsub.s32 0, %v1259
    %v1261 = vrot.slane %v1256, %v1260
    %v1262 = vmul.f32 %v1261, %v507
    %v1263 = vadd.f32 %v1262, 0.0
    %v1264 = vlaneseq
    %v1265 = vshrl.u32 %v1264, 7
    %v1266 = vsub.s32 1, %v1265
    %v1267 = vrot.slane %v1256, %v1266
    %v1268 = vmul.f32 %v1267, %v515
    %v1269 = vadd.f32 %v1263, %v1268
    %v1270 = vlaneseq
    %v1271 = vshrl.u32 %v1270, 7
    %v1272 = vsub.s32 2, %v1271
    %v1273 = vrot.slane %v1256, %v1272
    %v1274 = vmul.f32 %v1273, %v523
    %v1275 = vadd.f32 %v1269, %v1274
    %v1276 = vlaneseq
    %v1277 = vshrl.u32 %v1276, 7
    %v1278 = vsub.s32 3, %v1277
    %v1279 = vrot.slane %v1256, %v1278
    %v1280 = vmul.f32 %v1279, %v531
    %v1281 = vadd.f32 %v1275, %v1280
    %v1282 = vlaneseq
    %v1283 = vshrl.u32 %v1282, 7
    %v1284 = vsub.s32 4, %v1283
    %v1285 = vrot.slane %v1256, %v1284
    %v1286 = vmul.f32 %v1285, %v539
    %v1287 = vadd.f32 %v1281, %v1286
    %v1288 = vlaneseq
    %v1289 = vshrl.u32 %v1288, 7
    %v1290 = vsub.s32 5, %v1289
    %v1291 = vrot.slane %v1256, %v1290
    %v1292 = vmul.f32 %v1291, %v547
    %v1293 = vadd.f32 %v1287, %v1292
    %v1294 = vlaneseq
    %v1295 = vshrl.u32 %v1294, 7
    %v1296 = vsub.s32 6, %v1295
    %v1297 = vrot.slane %v1256, %v1296
    %v1298 = vmul.f32 %v1297, %v555
    %v1299 = vadd.f32 %v1293, %v1298
    %v1300 = vlaneseq
    %v1301 = vshrl.u32 %v1300, 7
    %v1302 = vsub.s32 7, %v1301
    %v1303 = vrot.slane %v1256, %v1302
    %v1304 = vmul.f32 %v1303, %v563
    %v1305 = vadd.f32 %v1299, %v1304
    %v1306 = vlaneseq
    %v1307 = vshrl.u32 %v1306, 7
    %v1308 = vsub.s32 0, %v1307
    %v1309 = vrot.slane %v1257, %v1308
    %v1310 = vmul.f32 %v1309, %v571
    %v1311 = vadd.f32 %v1305, %v1310
    %v1312 = vlaneseq
    %v1313 = vshrl.u32 %v1312, 7
    %v1314 = vsub.s32 1, %v1313
    %v1315 = vrot.slane %v1257, %v1314
    %v1316 = vmul.f32 %v1315, %v579
    %v1317 = vadd.f32 %v1311, %v1316
    %v1318 = vlaneseq
    %v1319 = vshrl.u32 %v1318, 7
    %v1320 = vsub.s32 2, %v1319
    %v1321 = vrot.slane %v1257, %v1320
    %v1322 = vmul.f32 %v1321, %v587
    %v1323 = vadd.f32 %v1317, %v1322
    %v1324 = vlaneseq
    %v1325 = vshrl.u32 %v1324, 7
    %v1326 = vsub.s32 3, %v1325
    %v1327 = vrot.slane %v1257, %v1326
    %v1328 = vmul.f32 %v1327, %v595
    %v1329 = vadd.f32 %v1323, %v1328
    %v1330 = vlaneseq
    %v1331 = vshrl.u32 %v1330, 7
    %v1332 = vsub.s32 4, %v1331
    %v1333 = vrot.slane %v1257, %v1332
    %v1334 = vmul.f32 %v1333, %v603
    %v1335 = vadd.f32 %v1329, %v1334
    %v1336 = vlaneseq
    %v1337 = vshrl.u32 %v1336, 7
    %v1338 = vsub.s32 5, %v1337
    %v1339 = vrot.slane %v1257, %v1338
    %v1340 = vmul.f32 %v1339, %v611
    %v1341 = vadd.f32 %v1335, %v1340
    %v1342 = vlaneseq
    %v1343 = vshrl.u32 %v1342, 7
    %v1344 = vsub.s32 6, %v1343
    %v1345 = vrot.slane %v1257, %v1344
    %v1346 = vmul.f32 %v1345, %v619
    %v1347 = vadd.f32 %v1341, %v1346
    %v1348 = vlaneseq
    %v1349 = vshrl.u32 %v1348, 7
    %v1350 = vsub.s32 7, %v1349
    %v1351 = vrot.slane %v1257, %v1350
    %v1352 = vmul.f32 %v1351, %v627
    %v1353 = vadd.f32 %v1347, %v1352
    %v1354 = vrsqrt.pop %v280
    %v1355 = vmul.f32 %v280, %v1354
    %vm1356 = vcmp.eq.f32.partialorder %v280, inf
    %v1357 = vsel %vm1356, %v280, %v1355
    %vm1358 = vcmp.eq.f32.partialorder %v280, 0.0
    %v1359 = vand.u32 %v280, 2147483648
    %v1360 = vsel %vm1358, %v1359, %v1357
    %v1361 = vrsqrt.pop %v281
    %v1362 = vmul.f32 %v281, %v1361
    %vm1363 = vcmp.eq.f32.partialorder %v281, inf
    %v1364 = vsel %vm1363, %v281, %v1362
    %vm1365 = vcmp.eq.f32.partialorder %v281, 0.0
    %v1366 = vand.u32 %v281, 2147483648
    %v1367 = vsel %vm1365, %v1366, %v1364
    %v1368 = vmul.f32 %v1360, 1.6666666
    %v1369 = vmul.f32 %v1367, 1.6666666
    %v1370 = vsub.f32 1.0, %v1368
    %v1371 = vsub.f32 1.0, %v1369
    %v1372 = vmax.f32 %v1370, 0.0
    %v1373 = vmax.f32 %v1371, 0.0
    %vm1374 = vcmp.eq.s32.totalorder %v480, 7
    %vm1375 = vcmp.eq.s32.totalorder %v481, 7
    %v1376 = vsel %vm1374, %v1372, 0.0
    %v1377 = vsel %vm1375, %v1373, 0.0
    %v1378 = vlaneseq
    %v1379 = vshrl.u32 %v1378, 7
    %v1380 = vsub.s32 0, %v1379
    %v1381 = vrot.slane %v1376, %v1380
    %v1382 = vmul.f32 %v1381, %v507
    %v1383 = vadd.f32 %v1382, 0.0
    %v1384 = vlaneseq
    %v1385 = vshrl.u32 %v1384, 7
    %v1386 = vsub.s32 1, %v1385
    %v1387 = vrot.slane %v1376, %v1386
    %v1388 = vmul.f32 %v1387, %v515
    %v1389 = vadd.f32 %v1383, %v1388
    %v1390 = vlaneseq
    %v1391 = vshrl.u32 %v1390, 7
    %v1392 = vsub.s32 2, %v1391
    %v1393 = vrot.slane %v1376, %v1392
    %v1394 = vmul.f32 %v1393, %v523
    %v1395 = vadd.f32 %v1389, %v1394
    %v1396 = vlaneseq
    %v1397 = vshrl.u32 %v1396, 7
    %v1398 = vsub.s32 3, %v1397
    %v1399 = vrot.slane %v1376, %v1398
    %v1400 = vmul.f32 %v1399, %v531
    %v1401 = vadd.f32 %v1395, %v1400
    %v1402 = vlaneseq
    %v1403 = vshrl.u32 %v1402, 7
    %v1404 = vsub.s32 4, %v1403
    %v1405 = vrot.slane %v1376, %v1404
    %v1406 = vmul.f32 %v1405, %v539
    %v1407 = vadd.f32 %v1401, %v1406
    %v1408 = vlaneseq
    %v1409 = vshrl.u32 %v1408, 7
    %v1410 = vsub.s32 5, %v1409
    %v1411 = vrot.slane %v1376, %v1410
    %v1412 = vmul.f32 %v1411, %v547
    %v1413 = vadd.f32 %v1407, %v1412
    %v1414 = vlaneseq
    %v1415 = vshrl.u32 %v1414, 7
    %v1416 = vsub.s32 6, %v1415
    %v1417 = vrot.slane %v1376, %v1416
    %v1418 = vmul.f32 %v1417, %v555
    %v1419 = vadd.f32 %v1413, %v1418
    %v1420 = vlaneseq
    %v1421 = vshrl.u32 %v1420, 7
    %v1422 = vsub.s32 7, %v1421
    %v1423 = vrot.slane %v1376, %v1422
    %v1424 = vmul.f32 %v1423, %v563
    %v1425 = vadd.f32 %v1419, %v1424
    %v1426 = vlaneseq
    %v1427 = vshrl.u32 %v1426, 7
    %v1428 = vsub.s32 0, %v1427
    %v1429 = vrot.slane %v1377, %v1428
    %v1430 = vmul.f32 %v1429, %v571
    %v1431 = vadd.f32 %v1425, %v1430
    %v1432 = vlaneseq
    %v1433 = vshrl.u32 %v1432, 7
    %v1434 = vsub.s32 1, %v1433
    %v1435 = vrot.slane %v1377, %v1434
    %v1436 = vmul.f32 %v1435, %v579
    %v1437 = vadd.f32 %v1431, %v1436
    %v1438 = vlaneseq
    %v1439 = vshrl.u32 %v1438, 7
    %v1440 = vsub.s32 2, %v1439
    %v1441 = vrot.slane %v1377, %v1440
    %v1442 = vmul.f32 %v1441, %v587
    %v1443 = vadd.f32 %v1437, %v1442
    %v1444 = vlaneseq
    %v1445 = vshrl.u32 %v1444, 7
    %v1446 = vsub.s32 3, %v1445
    %v1447 = vrot.slane %v1377, %v1446
    %v1448 = vmul.f32 %v1447, %v595
    %v1449 = vadd.f32 %v1443, %v1448
    %v1450 = vlaneseq
    %v1451 = vshrl.u32 %v1450, 7
    %v1452 = vsub.s32 4, %v1451
    %v1453 = vrot.slane %v1377, %v1452
    %v1454 = vmul.f32 %v1453, %v603
    %v1455 = vadd.f32 %v1449, %v1454
    %v1456 = vlaneseq
    %v1457 = vshrl.u32 %v1456, 7
    %v1458 = vsub.s32 5, %v1457
    %v1459 = vrot.slane %v1377, %v1458
    %v1460 = vmul.f32 %v1459, %v611
    %v1461 = vadd.f32 %v1455, %v1460
    %v1462 = vlaneseq
    %v1463 = vshrl.u32 %v1462, 7
    %v1464 = vsub.s32 6, %v1463
    %v1465 = vrot.slane %v1377, %v1464
    %v1466 = vmul.f32 %v1465, %v619
    %v1467 = vadd.f32 %v1461, %v1466
    %v1468 = vlaneseq
    %v1469 = vshrl.u32 %v1468, 7
    %v1470 = vsub.s32 7, %v1469
    %v1471 = vrot.slane %v1377, %v1470
    %v1472 = vmul.f32 %v1471, %v627
    %v1473 = vadd.f32 %v1467, %v1472
    %v1474 = vrsqrt.pop %v308
    %v1475 = vmul.f32 %v308, %v1474
    %vm1476 = vcmp.eq.f32.partialorder %v308, inf
    %v1477 = vsel %vm1476, %v308, %v1475
    %vm1478 = vcmp.eq.f32.partialorder %v308, 0.0
    %v1479 = vand.u32 %v308, 2147483648
    %v1480 = vsel %vm1478, %v1479, %v1477
    %v1481 = vrsqrt.pop %v309
    %v1482 = vmul.f32 %v309, %v1481
    %vm1483 = vcmp.eq.f32.partialorder %v309, inf
    %v1484 = vsel %vm1483, %v309, %v1482
    %vm1485 = vcmp.eq.f32.partialorder %v309, 0.0
    %v1486 = vand.u32 %v309, 2147483648
    %v1487 = vsel %vm1485, %v1486, %v1484
    %v1488 = vmul.f32 %v1480, 1.6666666
    %v1489 = vmul.f32 %v1487, 1.6666666
    %v1490 = vsub.f32 1.0, %v1488
    %v1491 = vsub.f32 1.0, %v1489
    %v1492 = vmax.f32 %v1490, 0.0
    %v1493 = vmax.f32 %v1491, 0.0
    %vm1494 = vcmp.eq.s32.totalorder %v480, 8
    %vm1495 = vcmp.eq.s32.totalorder %v481, 8
    %v1496 = vsel %vm1494, %v1492, 0.0
    %v1497 = vsel %vm1495, %v1493, 0.0
    %v1498 = vlaneseq
    %v1499 = vshrl.u32 %v1498, 7
    %v1500 = vsub.s32 0, %v1499
    %v1501 = vrot.slane %v1496, %v1500
    %v1502 = vmul.f32 %v1501, %v507
    %v1503 = vadd.f32 %v1502, 0.0
    %v1504 = vlaneseq
    %v1505 = vshrl.u32 %v1504, 7
    %v1506 = vsub.s32 1, %v1505
    %v1507 = vrot.slane %v1496, %v1506
    %v1508 = vmul.f32 %v1507, %v515
    %v1509 = vadd.f32 %v1503, %v1508
    %v1510 = vlaneseq
    %v1511 = vshrl.u32 %v1510, 7
    %v1512 = vsub.s32 2, %v1511
    %v1513 = vrot.slane %v1496, %v1512
    %v1514 = vmul.f32 %v1513, %v523
    %v1515 = vadd.f32 %v1509, %v1514
    %v1516 = vlaneseq
    %v1517 = vshrl.u32 %v1516, 7
    %v1518 = vsub.s32 3, %v1517
    %v1519 = vrot.slane %v1496, %v1518
    %v1520 = vmul.f32 %v1519, %v531
    %v1521 = vadd.f32 %v1515, %v1520
    %v1522 = vlaneseq
    %v1523 = vshrl.u32 %v1522, 7
    %v1524 = vsub.s32 4, %v1523
    %v1525 = vrot.slane %v1496, %v1524
    %v1526 = vmul.f32 %v1525, %v539
    %v1527 = vadd.f32 %v1521, %v1526
    %v1528 = vlaneseq
    %v1529 = vshrl.u32 %v1528, 7
    %v1530 = vsub.s32 5, %v1529
    %v1531 = vrot.slane %v1496, %v1530
    %v1532 = vmul.f32 %v1531, %v547
    %v1533 = vadd.f32 %v1527, %v1532
    %v1534 = vlaneseq
    %v1535 = vshrl.u32 %v1534, 7
    %v1536 = vsub.s32 6, %v1535
    %v1537 = vrot.slane %v1496, %v1536
    %v1538 = vmul.f32 %v1537, %v555
    %v1539 = vadd.f32 %v1533, %v1538
    %v1540 = vlaneseq
    %v1541 = vshrl.u32 %v1540, 7
    %v1542 = vsub.s32 7, %v1541
    %v1543 = vrot.slane %v1496, %v1542
    %v1544 = vmul.f32 %v1543, %v563
    %v1545 = vadd.f32 %v1539, %v1544
    %v1546 = vlaneseq
    %v1547 = vshrl.u32 %v1546, 7
    %v1548 = vsub.s32 0, %v1547
    %v1549 = vrot.slane %v1497, %v1548
    %v1550 = vmul.f32 %v1549, %v571
    %v1551 = vadd.f32 %v1545, %v1550
    %v1552 = vlaneseq
    %v1553 = vshrl.u32 %v1552, 7
    %v1554 = vsub.s32 1, %v1553
    %v1555 = vrot.slane %v1497, %v1554
    %v1556 = vmul.f32 %v1555, %v579
    %v1557 = vadd.f32 %v1551, %v1556
    %v1558 = vlaneseq
    %v1559 = vshrl.u32 %v1558, 7
    %v1560 = vsub.s32 2, %v1559
    %v1561 = vrot.slane %v1497, %v1560
    %v1562 = vmul.f32 %v1561, %v587
    %v1563 = vadd.f32 %v1557, %v1562
    %v1564 = vlaneseq
    %v1565 = vshrl.u32 %v1564, 7
    %v1566 = vsub.s32 3, %v1565
    %v1567 = vrot.slane %v1497, %v1566
    %v1568 = vmul.f32 %v1567, %v595
    %v1569 = vadd.f32 %v1563, %v1568
    %v1570 = vlaneseq
    %v1571 = vshrl.u32 %v1570, 7
    %v1572 = vsub.s32 4, %v1571
    %v1573 = vrot.slane %v1497, %v1572
    %v1574 = vmul.f32 %v1573, %v603
    %v1575 = vadd.f32 %v1569, %v1574
    %v1576 = vlaneseq
    %v1577 = vshrl.u32 %v1576, 7
    %v1578 = vsub.s32 5, %v1577
    %v1579 = vrot.slane %v1497, %v1578
    %v1580 = vmul.f32 %v1579, %v611
    %v1581 = vadd.f32 %v1575, %v1580
    %v1582 = vlaneseq
    %v1583 = vshrl.u32 %v1582, 7
    %v1584 = vsub.s32 6, %v1583
    %v1585 = vrot.slane %v1497, %v1584
    %v1586 = vmul.f32 %v1585, %v619
    %v1587 = vadd.f32 %v1581, %v1586
    %v1588 = vlaneseq
    %v1589 = vshrl.u32 %v1588, 7
    %v1590 = vsub.s32 7, %v1589
    %v1591 = vrot.slane %v1497, %v1590
    %v1592 = vmul.f32 %v1591, %v627
    %v1593 = vadd.f32 %v1587, %v1592
    %v1594 = vrsqrt.pop %v336
    %v1595 = vmul.f32 %v336, %v1594
    %vm1596 = vcmp.eq.f32.partialorder %v336, inf
    %v1597 = vsel %vm1596, %v336, %v1595
    %vm1598 = vcmp.eq.f32.partialorder %v336, 0.0
    %v1599 = vand.u32 %v336, 2147483648
    %v1600 = vsel %vm1598, %v1599, %v1597
    %v1601 = vrsqrt.pop %v337
    %v1602 = vmul.f32 %v337, %v1601
    %vm1603 = vcmp.eq.f32.partialorder %v337, inf
    %v1604 = vsel %vm1603, %v337, %v1602
    %vm1605 = vcmp.eq.f32.partialorder %v337, 0.0
    %v1606 = vand.u32 %v337, 2147483648
    %v1607 = vsel %vm1605, %v1606, %v1604
    %v1608 = vmul.f32 %v1600, 1.6666666
    %v1609 = vmul.f32 %v1607, 1.6666666
    %v1610 = vsub.f32 1.0, %v1608
    %v1611 = vsub.f32 1.0, %v1609
    %v1612 = vmax.f32 %v1610, 0.0
    %v1613 = vmax.f32 %v1611, 0.0
    %vm1614 = vcmp.eq.s32.totalorder %v480, 9
    %vm1615 = vcmp.eq.s32.totalorder %v481, 9
    %v1616 = vsel %vm1614, %v1612, 0.0
    %v1617 = vsel %vm1615, %v1613, 0.0
    %v1618 = vlaneseq
    %v1619 = vshrl.u32 %v1618, 7
    %v1620 = vsub.s32 0, %v1619
    %v1621 = vrot.slane %v1616, %v1620
    %v1622 = vmul.f32 %v1621, %v507
    %v1623 = vadd.f32 %v1622, 0.0
    %v1624 = vlaneseq
    %v1625 = vshrl.u32 %v1624, 7
    %v1626 = vsub.s32 1, %v1625
    %v1627 = vrot.slane %v1616, %v1626
    %v1628 = vmul.f32 %v1627, %v515
    %v1629 = vadd.f32 %v1623, %v1628
    %v1630 = vlaneseq
    %v1631 = vshrl.u32 %v1630, 7
    %v1632 = vsub.s32 2, %v1631
    %v1633 = vrot.slane %v1616, %v1632
    %v1634 = vmul.f32 %v1633, %v523
    %v1635 = vadd.f32 %v1629, %v1634
    %v1636 = vlaneseq
    %v1637 = vshrl.u32 %v1636, 7
    %v1638 = vsub.s32 3, %v1637
    %v1639 = vrot.slane %v1616, %v1638
    %v1640 = vmul.f32 %v1639, %v531
    %v1641 = vadd.f32 %v1635, %v1640
    %v1642 = vlaneseq
    %v1643 = vshrl.u32 %v1642, 7
    %v1644 = vsub.s32 4, %v1643
    %v1645 = vrot.slane %v1616, %v1644
    %v1646 = vmul.f32 %v1645, %v539
    %v1647 = vadd.f32 %v1641, %v1646
    %v1648 = vlaneseq
    %v1649 = vshrl.u32 %v1648, 7
    %v1650 = vsub.s32 5, %v1649
    %v1651 = vrot.slane %v1616, %v1650
    %v1652 = vmul.f32 %v1651, %v547
    %v1653 = vadd.f32 %v1647, %v1652
    %v1654 = vlaneseq
    %v1655 = vshrl.u32 %v1654, 7
    %v1656 = vsub.s32 6, %v1655
    %v1657 = vrot.slane %v1616, %v1656
    %v1658 = vmul.f32 %v1657, %v555
    %v1659 = vadd.f32 %v1653, %v1658
    %v1660 = vlaneseq
    %v1661 = vshrl.u32 %v1660, 7
    %v1662 = vsub.s32 7, %v1661
    %v1663 = vrot.slane %v1616, %v1662
    %v1664 = vmul.f32 %v1663, %v563
    %v1665 = vadd.f32 %v1659, %v1664
    %v1666 = vlaneseq
    %v1667 = vshrl.u32 %v1666, 7
    %v1668 = vsub.s32 0, %v1667
    %v1669 = vrot.slane %v1617, %v1668
    %v1670 = vmul.f32 %v1669, %v571
    %v1671 = vadd.f32 %v1665, %v1670
    %v1672 = vlaneseq
    %v1673 = vshrl.u32 %v1672, 7
    %v1674 = vsub.s32 1, %v1673
    %v1675 = vrot.slane %v1617, %v1674
    %v1676 = vmul.f32 %v1675, %v579
    %v1677 = vadd.f32 %v1671, %v1676
    %v1678 = vlaneseq
    %v1679 = vshrl.u32 %v1678, 7
    %v1680 = vsub.s32 2, %v1679
    %v1681 = vrot.slane %v1617, %v1680
    %v1682 = vmul.f32 %v1681, %v587
    %v1683 = vadd.f32 %v1677, %v1682
    %v1684 = vlaneseq
    %v1685 = vshrl.u32 %v1684, 7
    %v1686 = vsub.s32 3, %v1685
    %v1687 = vrot.slane %v1617, %v1686
    %v1688 = vmul.f32 %v1687, %v595
    %v1689 = vadd.f32 %v1683, %v1688
    %v1690 = vlaneseq
    %v1691 = vshrl.u32 %v1690, 7
    %v1692 = vsub.s32 4, %v1691
    %v1693 = vrot.slane %v1617, %v1692
    %v1694 = vmul.f32 %v1693, %v603
    %v1695 = vadd.f32 %v1689, %v1694
    %v1696 = vlaneseq
    %v1697 = vshrl.u32 %v1696, 7
    %v1698 = vsub.s32 5, %v1697
    %v1699 = vrot.slane %v1617, %v1698
    %v1700 = vmul.f32 %v1699, %v611
    %v1701 = vadd.f32 %v1695, %v1700
    %v1702 = vlaneseq
    %v1703 = vshrl.u32 %v1702, 7
    %v1704 = vsub.s32 6, %v1703
    %v1705 = vrot.slane %v1617, %v1704
    %v1706 = vmul.f32 %v1705, %v619
    %v1707 = vadd.f32 %v1701, %v1706
    %v1708 = vlaneseq
    %v1709 = vshrl.u32 %v1708, 7
    %v1710 = vsub.s32 7, %v1709
    %v1711 = vrot.slane %v1617, %v1710
    %v1712 = vmul.f32 %v1711, %v627
    %v1713 = vadd.f32 %v1707, %v1712
    %v1714 = vrsqrt.pop %v364
    %v1715 = vmul.f32 %v364, %v1714
    %vm1716 = vcmp.eq.f32.partialorder %v364, inf
    %v1717 = vsel %vm1716, %v364, %v1715
    %vm1718 = vcmp.eq.f32.partialorder %v364, 0.0
    %v1719 = vand.u32 %v364, 2147483648
    %v1720 = vsel %vm1718, %v1719, %v1717
    %v1721 = vrsqrt.pop %v365
    %v1722 = vmul.f32 %v365, %v1721
    %vm1723 = vcmp.eq.f32.partialorder %v365, inf
    %v1724 = vsel %vm1723, %v365, %v1722
    %vm1725 = vcmp.eq.f32.partialorder %v365, 0.0
    %v1726 = vand.u32 %v365, 2147483648
    %v1727 = vsel %vm1725, %v1726, %v1724
    %v1728 = vmul.f32 %v1720, 1.6666666
    %v1729 = vmul.f32 %v1727, 1.6666666
    %v1730 = vsub.f32 1.0, %v1728
    %v1731 = vsub.f32 1.0, %v1729
    %v1732 = vmax.f32 %v1730, 0.0
    %v1733 = vmax.f32 %v1731, 0.0
    %vm1734 = vcmp.eq.s32.totalorder %v480, 10
    %vm1735 = vcmp.eq.s32.totalorder %v481, 10
    %v1736 = vsel %vm1734, %v1732, 0.0
    %v1737 = vsel %vm1735, %v1733, 0.0
    %v1738 = vlaneseq
    %v1739 = vshrl.u32 %v1738, 7
    %v1740 = vsub.s32 0, %v1739
    %v1741 = vrot.slane %v1736, %v1740
    %v1742 = vmul.f32 %v1741, %v507
    %v1743 = vadd.f32 %v1742, 0.0
    %v1744 = vlaneseq
    %v1745 = vshrl.u32 %v1744, 7
    %v1746 = vsub.s32 1, %v1745
    %v1747 = vrot.slane %v1736, %v1746
    %v1748 = vmul.f32 %v1747, %v515
    %v1749 = vadd.f32 %v1743, %v1748
    %v1750 = vlaneseq
    %v1751 = vshrl.u32 %v1750, 7
    %v1752 = vsub.s32 2, %v1751
    %v1753 = vrot.slane %v1736, %v1752
    %v1754 = vmul.f32 %v1753, %v523
    %v1755 = vadd.f32 %v1749, %v1754
    %v1756 = vlaneseq
    %v1757 = vshrl.u32 %v1756, 7
    %v1758 = vsub.s32 3, %v1757
    %v1759 = vrot.slane %v1736, %v1758
    %v1760 = vmul.f32 %v1759, %v531
    %v1761 = vadd.f32 %v1755, %v1760
    %v1762 = vlaneseq
    %v1763 = vshrl.u32 %v1762, 7
    %v1764 = vsub.s32 4, %v1763
    %v1765 = vrot.slane %v1736, %v1764
    %v1766 = vmul.f32 %v1765, %v539
    %v1767 = vadd.f32 %v1761, %v1766
    %v1768 = vlaneseq
    %v1769 = vshrl.u32 %v1768, 7
    %v1770 = vsub.s32 5, %v1769
    %v1771 = vrot.slane %v1736, %v1770
    %v1772 = vmul.f32 %v1771, %v547
    %v1773 = vadd.f32 %v1767, %v1772
    %v1774 = vlaneseq
    %v1775 = vshrl.u32 %v1774, 7
    %v1776 = vsub.s32 6, %v1775
    %v1777 = vrot.slane %v1736, %v1776
    %v1778 = vmul.f32 %v1777, %v555
    %v1779 = vadd.f32 %v1773, %v1778
    %v1780 = vlaneseq
    %v1781 = vshrl.u32 %v1780, 7
    %v1782 = vsub.s32 7, %v1781
    %v1783 = vrot.slane %v1736, %v1782
    %v1784 = vmul.f32 %v1783, %v563
    %v1785 = vadd.f32 %v1779, %v1784
    %v1786 = vlaneseq
    %v1787 = vshrl.u32 %v1786, 7
    %v1788 = vsub.s32 0, %v1787
    %v1789 = vrot.slane %v1737, %v1788
    %v1790 = vmul.f32 %v1789, %v571
    %v1791 = vadd.f32 %v1785, %v1790
    %v1792 = vlaneseq
    %v1793 = vshrl.u32 %v1792, 7
    %v1794 = vsub.s32 1, %v1793
    %v1795 = vrot.slane %v1737, %v1794
    %v1796 = vmul.f32 %v1795, %v579
    %v1797 = vadd.f32 %v1791, %v1796
    %v1798 = vlaneseq
    %v1799 = vshrl.u32 %v1798, 7
    %v1800 = vsub.s32 2, %v1799
    %v1801 = vrot.slane %v1737, %v1800
    %v1802 = vmul.f32 %v1801, %v587
    %v1803 = vadd.f32 %v1797, %v1802
    %v1804 = vlaneseq
    %v1805 = vshrl.u32 %v1804, 7
    %v1806 = vsub.s32 3, %v1805
    %v1807 = vrot.slane %v1737, %v1806
    %v1808 = vmul.f32 %v1807, %v595
    %v1809 = vadd.f32 %v1803, %v1808
    %v1810 = vlaneseq
    %v1811 = vshrl.u32 %v1810, 7
    %v1812 = vsub.s32 4, %v1811
    %v1813 = vrot.slane %v1737, %v1812
    %v1814 = vmul.f32 %v1813, %v603
    %v1815 = vadd.f32 %v1809, %v1814
    %v1816 = vlaneseq
    %v1817 = vshrl.u32 %v1816, 7
    %v1818 = vsub.s32 5, %v1817
    %v1819 = vrot.slane %v1737, %v1818
    %v1820 = vmul.f32 %v1819, %v611
    %v1821 = vadd.f32 %v1815, %v1820
    %v1822 = vlaneseq
    %v1823 = vshrl.u32 %v1822, 7
    %v1824 = vsub.s32 6, %v1823
    %v1825 = vrot.slane %v1737, %v1824
    %v1826 = vmul.f32 %v1825, %v619
    %v1827 = vadd.f32 %v1821, %v1826
    %v1828 = vlaneseq
    %v1829 = vshrl.u32 %v1828, 7
    %v1830 = vsub.s32 7, %v1829
    %v1831 = vrot.slane %v1737, %v1830
    %v1832 = vmul.f32 %v1831, %v627
    %v1833 = vadd.f32 %v1827, %v1832
    %v1834 = vrsqrt.pop %v392
    %v1835 = vmul.f32 %v392, %v1834
    %vm1836 = vcmp.eq.f32.partialorder %v392, inf
    %v1837 = vsel %vm1836, %v392, %v1835
    %vm1838 = vcmp.eq.f32.partialorder %v392, 0.0
    %v1839 = vand.u32 %v392, 2147483648
    %v1840 = vsel %vm1838, %v1839, %v1837
    %v1841 = vrsqrt.pop %v393
    %v1842 = vmul.f32 %v393, %v1841
    %vm1843 = vcmp.eq.f32.partialorder %v393, inf
    %v1844 = vsel %vm1843, %v393, %v1842
    %vm1845 = vcmp.eq.f32.partialorder %v393, 0.0
    %v1846 = vand.u32 %v393, 2147483648
    %v1847 = vsel %vm1845, %v1846, %v1844
    %v1848 = vmul.f32 %v1840, 1.6666666
    %v1849 = vmul.f32 %v1847, 1.6666666
    %v1850 = vsub.f32 1.0, %v1848
    %v1851 = vsub.f32 1.0, %v1849
    %v1852 = vmax.f32 %v1850, 0.0
    %v1853 = vmax.f32 %v1851, 0.0
    %vm1854 = vcmp.eq.s32.totalorder %v480, 11
    %vm1855 = vcmp.eq.s32.totalorder %v481, 11
    %v1856 = vsel %vm1854, %v1852, 0.0
    %v1857 = vsel %vm1855, %v1853, 0.0
    %v1858 = vlaneseq
    %v1859 = vshrl.u32 %v1858, 7
    %v1860 = vsub.s32 0, %v1859
    %v1861 = vrot.slane %v1856, %v1860
    %v1862 = vmul.f32 %v1861, %v507
    %v1863 = vadd.f32 %v1862, 0.0
    %v1864 = vlaneseq
    %v1865 = vshrl.u32 %v1864, 7
    %v1866 = vsub.s32 1, %v1865
    %v1867 = vrot.slane %v1856, %v1866
    %v1868 = vmul.f32 %v1867, %v515
    %v1869 = vadd.f32 %v1863, %v1868
    %v1870 = vlaneseq
    %v1871 = vshrl.u32 %v1870, 7
    %v1872 = vsub.s32 2, %v1871
    %v1873 = vrot.slane %v1856, %v1872
    %v1874 = vmul.f32 %v1873, %v523
    %v1875 = vadd.f32 %v1869, %v1874
    %v1876 = vlaneseq
    %v1877 = vshrl.u32 %v1876, 7
    %v1878 = vsub.s32 3, %v1877
    %v1879 = vrot.slane %v1856, %v1878
    %v1880 = vmul.f32 %v1879, %v531
    %v1881 = vadd.f32 %v1875, %v1880
    %v1882 = vlaneseq
    %v1883 = vshrl.u32 %v1882, 7
    %v1884 = vsub.s32 4, %v1883
    %v1885 = vrot.slane %v1856, %v1884
    %v1886 = vmul.f32 %v1885, %v539
    %v1887 = vadd.f32 %v1881, %v1886
    %v1888 = vlaneseq
    %v1889 = vshrl.u32 %v1888, 7
    %v1890 = vsub.s32 5, %v1889
    %v1891 = vrot.slane %v1856, %v1890
    %v1892 = vmul.f32 %v1891, %v547
    %v1893 = vadd.f32 %v1887, %v1892
    %v1894 = vlaneseq
    %v1895 = vshrl.u32 %v1894, 7
    %v1896 = vsub.s32 6, %v1895
    %v1897 = vrot.slane %v1856, %v1896
    %v1898 = vmul.f32 %v1897, %v555
    %v1899 = vadd.f32 %v1893, %v1898
    %v1900 = vlaneseq
    %v1901 = vshrl.u32 %v1900, 7
    %v1902 = vsub.s32 7, %v1901
    %v1903 = vrot.slane %v1856, %v1902
    %v1904 = vmul.f32 %v1903, %v563
    %v1905 = vadd.f32 %v1899, %v1904
    %v1906 = vlaneseq
    %v1907 = vshrl.u32 %v1906, 7
    %v1908 = vsub.s32 0, %v1907
    %v1909 = vrot.slane %v1857, %v1908
    %v1910 = vmul.f32 %v1909, %v571
    %v1911 = vadd.f32 %v1905, %v1910
    %v1912 = vlaneseq
    %v1913 = vshrl.u32 %v1912, 7
    %v1914 = vsub.s32 1, %v1913
    %v1915 = vrot.slane %v1857, %v1914
    %v1916 = vmul.f32 %v1915, %v579
    %v1917 = vadd.f32 %v1911, %v1916
    %v1918 = vlaneseq
    %v1919 = vshrl.u32 %v1918, 7
    %v1920 = vsub.s32 2, %v1919
    %v1921 = vrot.slane %v1857, %v1920
    %v1922 = vmul.f32 %v1921, %v587
    %v1923 = vadd.f32 %v1917, %v1922
    %v1924 = vlaneseq
    %v1925 = vshrl.u32 %v1924, 7
    %v1926 = vsub.s32 3, %v1925
    %v1927 = vrot.slane %v1857, %v1926
    %v1928 = vmul.f32 %v1927, %v595
    %v1929 = vadd.f32 %v1923, %v1928
    %v1930 = vlaneseq
    %v1931 = vshrl.u32 %v1930, 7
    %v1932 = vsub.s32 4, %v1931
    %v1933 = vrot.slane %v1857, %v1932
    %v1934 = vmul.f32 %v1933, %v603
    %v1935 = vadd.f32 %v1929, %v1934
    %v1936 = vlaneseq
    %v1937 = vshrl.u32 %v1936, 7
    %v1938 = vsub.s32 5, %v1937
    %v1939 = vrot.slane %v1857, %v1938
    %v1940 = vmul.f32 %v1939, %v611
    %v1941 = vadd.f32 %v1935, %v1940
    %v1942 = vlaneseq
    %v1943 = vshrl.u32 %v1942, 7
    %v1944 = vsub.s32 6, %v1943
    %v1945 = vrot.slane %v1857, %v1944
    %v1946 = vmul.f32 %v1945, %v619
    %v1947 = vadd.f32 %v1941, %v1946
    %v1948 = vlaneseq
    %v1949 = vshrl.u32 %v1948, 7
    %v1950 = vsub.s32 7, %v1949
    %v1951 = vrot.slane %v1857, %v1950
    %v1952 = vmul.f32 %v1951, %v627
    %v1953 = vadd.f32 %v1947, %v1952
    %v1954 = vrsqrt.pop %v420
    %v1955 = vmul.f32 %v420, %v1954
    %vm1956 = vcmp.eq.f32.partialorder %v420, inf
    %v1957 = vsel %vm1956, %v420, %v1955
    %vm1958 = vcmp.eq.f32.partialorder %v420, 0.0
    %v1959 = vand.u32 %v420, 2147483648
    %v1960 = vsel %vm1958, %v1959, %v1957
    %v1961 = vrsqrt.pop %v421
    %v1962 = vmul.f32 %v421, %v1961
    %vm1963 = vcmp.eq.f32.partialorder %v421, inf
    %v1964 = vsel %vm1963, %v421, %v1962
    %vm1965 = vcmp.eq.f32.partialorder %v421, 0.0
    %v1966 = vand.u32 %v421, 2147483648
    %v1967 = vsel %vm1965, %v1966, %v1964
    %v1968 = vmul.f32 %v1960, 1.6666666
    %v1969 = vmul.f32 %v1967, 1.6666666
    %v1970 = vsub.f32 1.0, %v1968
    %v1971 = vsub.f32 1.0, %v1969
    %v1972 = vmax.f32 %v1970, 0.0
    %v1973 = vmax.f32 %v1971, 0.0
    %vm1974 = vcmp.eq.s32.totalorder %v480, 12
    %vm1975 = vcmp.eq.s32.totalorder %v481, 12
    %v1976 = vsel %vm1974, %v1972, 0.0
    %v1977 = vsel %vm1975, %v1973, 0.0
    %v1978 = vlaneseq
    %v1979 = vshrl.u32 %v1978, 7
    %v1980 = vsub.s32 0, %v1979
    %v1981 = vrot.slane %v1976, %v1980
    %v1982 = vmul.f32 %v1981, %v507
    %v1983 = vadd.f32 %v1982, 0.0
    %v1984 = vlaneseq
    %v1985 = vshrl.u32 %v1984, 7
    %v1986 = vsub.s32 1, %v1985
    %v1987 = vrot.slane %v1976, %v1986
    %v1988 = vmul.f32 %v1987, %v515
    %v1989 = vadd.f32 %v1983, %v1988
    %v1990 = vlaneseq
    %v1991 = vshrl.u32 %v1990, 7
    %v1992 = vsub.s32 2, %v1991
    %v1993 = vrot.slane %v1976, %v1992
    %v1994 = vmul.f32 %v1993, %v523
    %v1995 = vadd.f32 %v1989, %v1994
    %v1996 = vlaneseq
    %v1997 = vshrl.u32 %v1996, 7
    %v1998 = vsub.s32 3, %v1997
    %v1999 = vrot.slane %v1976, %v1998
    %v2000 = vmul.f32 %v1999, %v531
    %v2001 = vadd.f32 %v1995, %v2000
    %v2002 = vlaneseq
    %v2003 = vshrl.u32 %v2002, 7
    %v2004 = vsub.s32 4, %v2003
    %v2005 = vrot.slane %v1976, %v2004
    %v2006 = vmul.f32 %v2005, %v539
    %v2007 = vadd.f32 %v2001, %v2006
    %v2008 = vlaneseq
    %v2009 = vshrl.u32 %v2008, 7
    %v2010 = vsub.s32 5, %v2009
    %v2011 = vrot.slane %v1976, %v2010
    %v2012 = vmul.f32 %v2011, %v547
    %v2013 = vadd.f32 %v2007, %v2012
    %v2014 = vlaneseq
    %v2015 = vshrl.u32 %v2014, 7
    %v2016 = vsub.s32 6, %v2015
    %v2017 = vrot.slane %v1976, %v2016
    %v2018 = vmul.f32 %v2017, %v555
    %v2019 = vadd.f32 %v2013, %v2018
    %v2020 = vlaneseq
    %v2021 = vshrl.u32 %v2020, 7
    %v2022 = vsub.s32 7, %v2021
    %v2023 = vrot.slane %v1976, %v2022
    %v2024 = vmul.f32 %v2023, %v563
    %v2025 = vadd.f32 %v2019, %v2024
    %v2026 = vlaneseq
    %v2027 = vshrl.u32 %v2026, 7
    %v2028 = vsub.s32 0, %v2027
    %v2029 = vrot.slane %v1977, %v2028
    %v2030 = vmul.f32 %v2029, %v571
    %v2031 = vadd.f32 %v2025, %v2030
    %v2032 = vlaneseq
    %v2033 = vshrl.u32 %v2032, 7
    %v2034 = vsub.s32 1, %v2033
    %v2035 = vrot.slane %v1977, %v2034
    %v2036 = vmul.f32 %v2035, %v579
    %v2037 = vadd.f32 %v2031, %v2036
    %v2038 = vlaneseq
    %v2039 = vshrl.u32 %v2038, 7
    %v2040 = vsub.s32 2, %v2039
    %v2041 = vrot.slane %v1977, %v2040
    %v2042 = vmul.f32 %v2041, %v587
    %v2043 = vadd.f32 %v2037, %v2042
    %v2044 = vlaneseq
    %v2045 = vshrl.u32 %v2044, 7
    %v2046 = vsub.s32 3, %v2045
    %v2047 = vrot.slane %v1977, %v2046
    %v2048 = vmul.f32 %v2047, %v595
    %v2049 = vadd.f32 %v2043, %v2048
    %v2050 = vlaneseq
    %v2051 = vshrl.u32 %v2050, 7
    %v2052 = vsub.s32 4, %v2051
    %v2053 = vrot.slane %v1977, %v2052
    %v2054 = vmul.f32 %v2053, %v603
    %v2055 = vadd.f32 %v2049, %v2054
    %v2056 = vlaneseq
    %v2057 = vshrl.u32 %v2056, 7
    %v2058 = vsub.s32 5, %v2057
    %v2059 = vrot.slane %v1977, %v2058
    %v2060 = vmul.f32 %v2059, %v611
    %v2061 = vadd.f32 %v2055, %v2060
    %v2062 = vlaneseq
    %v2063 = vshrl.u32 %v2062, 7
    %v2064 = vsub.s32 6, %v2063
    %v2065 = vrot.slane %v1977, %v2064
    %v2066 = vmul.f32 %v2065, %v619
    %v2067 = vadd.f32 %v2061, %v2066
    %v2068 = vlaneseq
    %v2069 = vshrl.u32 %v2068, 7
    %v2070 = vsub.s32 7, %v2069
    %v2071 = vrot.slane %v1977, %v2070
    %v2072 = vmul.f32 %v2071, %v627
    %v2073 = vadd.f32 %v2067, %v2072
    %v2074 = vrsqrt.pop %v448
    %v2075 = vmul.f32 %v448, %v2074
    %vm2076 = vcmp.eq.f32.partialorder %v448, inf
    %v2077 = vsel %vm2076, %v448, %v2075
    %vm2078 = vcmp.eq.f32.partialorder %v448, 0.0
    %v2079 = vand.u32 %v448, 2147483648
    %v2080 = vsel %vm2078, %v2079, %v2077
    %v2081 = vrsqrt.pop %v449
    %v2082 = vmul.f32 %v449, %v2081
    %vm2083 = vcmp.eq.f32.partialorder %v449, inf
    %v2084 = vsel %vm2083, %v449, %v2082
    %vm2085 = vcmp.eq.f32.partialorder %v449, 0.0
    %v2086 = vand.u32 %v449, 2147483648
    %v2087 = vsel %vm2085, %v2086, %v2084
    %v2088 = vmul.f32 %v2080, 1.6666666
    %v2089 = vmul.f32 %v2087, 1.6666666
    %v2090 = vsub.f32 1.0, %v2088
    %v2091 = vsub.f32 1.0, %v2089
    %v2092 = vmax.f32 %v2090, 0.0
    %v2093 = vmax.f32 %v2091, 0.0
    %vm2094 = vcmp.eq.s32.totalorder %v480, 13
    %vm2095 = vcmp.eq.s32.totalorder %v481, 13
    %v2096 = vsel %vm2094, %v2092, 0.0
    %v2097 = vsel %vm2095, %v2093, 0.0
    %v2098 = vlaneseq
    %v2099 = vshrl.u32 %v2098, 7
    %v2100 = vsub.s32 0, %v2099
    %v2101 = vrot.slane %v2096, %v2100
    %v2102 = vmul.f32 %v2101, %v507
    %v2103 = vadd.f32 %v2102, 0.0
    %v2104 = vlaneseq
    %v2105 = vshrl.u32 %v2104, 7
    %v2106 = vsub.s32 1, %v2105
    %v2107 = vrot.slane %v2096, %v2106
    %v2108 = vmul.f32 %v2107, %v515
    %v2109 = vadd.f32 %v2103, %v2108
    %v2110 = vlaneseq
    %v2111 = vshrl.u32 %v2110, 7
    %v2112 = vsub.s32 2, %v2111
    %v2113 = vrot.slane %v2096, %v2112
    %v2114 = vmul.f32 %v2113, %v523
    %v2115 = vadd.f32 %v2109, %v2114
    %v2116 = vlaneseq
    %v2117 = vshrl.u32 %v2116, 7
    %v2118 = vsub.s32 3, %v2117
    %v2119 = vrot.slane %v2096, %v2118
    %v2120 = vmul.f32 %v2119, %v531
    %v2121 = vadd.f32 %v2115, %v2120
    %v2122 = vlaneseq
    %v2123 = vshrl.u32 %v2122, 7
    %v2124 = vsub.s32 4, %v2123
    %v2125 = vrot.slane %v2096, %v2124
    %v2126 = vmul.f32 %v2125, %v539
    %v2127 = vadd.f32 %v2121, %v2126
    %v2128 = vlaneseq
    %v2129 = vshrl.u32 %v2128, 7
    %v2130 = vsub.s32 5, %v2129
    %v2131 = vrot.slane %v2096, %v2130
    %v2132 = vmul.f32 %v2131, %v547
    %v2133 = vadd.f32 %v2127, %v2132
    %v2134 = vlaneseq
    %v2135 = vshrl.u32 %v2134, 7
    %v2136 = vsub.s32 6, %v2135
    %v2137 = vrot.slane %v2096, %v2136
    %v2138 = vmul.f32 %v2137, %v555
    %v2139 = vadd.f32 %v2133, %v2138
    %v2140 = vlaneseq
    %v2141 = vshrl.u32 %v2140, 7
    %v2142 = vsub.s32 7, %v2141
    %v2143 = vrot.slane %v2096, %v2142
    %v2144 = vmul.f32 %v2143, %v563
    %v2145 = vadd.f32 %v2139, %v2144
    %v2146 = vlaneseq
    %v2147 = vshrl.u32 %v2146, 7
    %v2148 = vsub.s32 0, %v2147
    %v2149 = vrot.slane %v2097, %v2148
    %v2150 = vmul.f32 %v2149, %v571
    %v2151 = vadd.f32 %v2145, %v2150
    %v2152 = vlaneseq
    %v2153 = vshrl.u32 %v2152, 7
    %v2154 = vsub.s32 1, %v2153
    %v2155 = vrot.slane %v2097, %v2154
    %v2156 = vmul.f32 %v2155, %v579
    %v2157 = vadd.f32 %v2151, %v2156
    %v2158 = vlaneseq
    %v2159 = vshrl.u32 %v2158, 7
    %v2160 = vsub.s32 2, %v2159
    %v2161 = vrot.slane %v2097, %v2160
    %v2162 = vmul.f32 %v2161, %v587
    %v2163 = vadd.f32 %v2157, %v2162
    %v2164 = vlaneseq
    %v2165 = vshrl.u32 %v2164, 7
    %v2166 = vsub.s32 3, %v2165
    %v2167 = vrot.slane %v2097, %v2166
    %v2168 = vmul.f32 %v2167, %v595
    %v2169 = vadd.f32 %v2163, %v2168
    %v2170 = vlaneseq
    %v2171 = vshrl.u32 %v2170, 7
    %v2172 = vsub.s32 4, %v2171
    %v2173 = vrot.slane %v2097, %v2172
    %v2174 = vmul.f32 %v2173, %v603
    %v2175 = vadd.f32 %v2169, %v2174
    %v2176 = vlaneseq
    %v2177 = vshrl.u32 %v2176, 7
    %v2178 = vsub.s32 5, %v2177
    %v2179 = vrot.slane %v2097, %v2178
    %v2180 = vmul.f32 %v2179, %v611
    %v2181 = vadd.f32 %v2175, %v2180
    %v2182 = vlaneseq
    %v2183 = vshrl.u32 %v2182, 7
    %v2184 = vsub.s32 6, %v2183
    %v2185 = vrot.slane %v2097, %v2184
    %v2186 = vmul.f32 %v2185, %v619
    %v2187 = vadd.f32 %v2181, %v2186
    %v2188 = vlaneseq
    %v2189 = vshrl.u32 %v2188, 7
    %v2190 = vsub.s32 7, %v2189
    %v2191 = vrot.slane %v2097, %v2190
    %v2192 = vmul.f32 %v2191, %v627
    %v2193 = vadd.f32 %v2187, %v2192
    %v2194 = vrsqrt.pop %v476
    %v2195 = vmul.f32 %v476, %v2194
    %vm2196 = vcmp.eq.f32.partialorder %v476, inf
    %v2197 = vsel %vm2196, %v476, %v2195
    %vm2198 = vcmp.eq.f32.partialorder %v476, 0.0
    %v2199 = vand.u32 %v476, 2147483648
    %v2200 = vsel %vm2198, %v2199, %v2197
    %v2201 = vrsqrt.pop %v477
    %v2202 = vmul.f32 %v477, %v2201
    %vm2203 = vcmp.eq.f32.partialorder %v477, inf
    %v2204 = vsel %vm2203, %v477, %v2202
    %vm2205 = vcmp.eq.f32.partialorder %v477, 0.0
    %v2206 = vand.u32 %v477, 2147483648
    %v2207 = vsel %vm2205, %v2206, %v2204
    %v2208 = vmul.f32 %v2200, 1.6666666
    %v2209 = vmul.f32 %v2207, 1.6666666
    %v2210 = vsub.f32 1.0, %v2208
    %v2211 = vsub.f32 1.0, %v2209
    %v2212 = vmax.f32 %v2210, 0.0
    %v2213 = vmax.f32 %v2211, 0.0
    %vm2214 = vcmp.eq.s32.totalorder %v480, 14
    %vm2215 = vcmp.eq.s32.totalorder %v481, 14
    %v2216 = vsel %vm2214, %v2212, 0.0
    %v2217 = vsel %vm2215, %v2213, 0.0
    %v2218 = vlaneseq
    %v2219 = vshrl.u32 %v2218, 7
    %v2220 = vsub.s32 0, %v2219
    %v2221 = vrot.slane %v2216, %v2220
    %v2222 = vmul.f32 %v2221, %v507
    %v2223 = vadd.f32 %v2222, 0.0
    %v2224 = vlaneseq
    %v2225 = vshrl.u32 %v2224, 7
    %v2226 = vsub.s32 1, %v2225
    %v2227 = vrot.slane %v2216, %v2226
    %v2228 = vmul.f32 %v2227, %v515
    %v2229 = vadd.f32 %v2223, %v2228
    %v2230 = vlaneseq
    %v2231 = vshrl.u32 %v2230, 7
    %v2232 = vsub.s32 2, %v2231
    %v2233 = vrot.slane %v2216, %v2232
    %v2234 = vmul.f32 %v2233, %v523
    %v2235 = vadd.f32 %v2229, %v2234
    %v2236 = vlaneseq
    %v2237 = vshrl.u32 %v2236, 7
    %v2238 = vsub.s32 3, %v2237
    %v2239 = vrot.slane %v2216, %v2238
    %v2240 = vmul.f32 %v2239, %v531
    %v2241 = vadd.f32 %v2235, %v2240
    %v2242 = vlaneseq
    %v2243 = vshrl.u32 %v2242, 7
    %v2244 = vsub.s32 4, %v2243
    %v2245 = vrot.slane %v2216, %v2244
    %v2246 = vmul.f32 %v2245, %v539
    %v2247 = vadd.f32 %v2241, %v2246
    %v2248 = vlaneseq
    %v2249 = vshrl.u32 %v2248, 7
    %v2250 = vsub.s32 5, %v2249
    %v2251 = vrot.slane %v2216, %v2250
    %v2252 = vmul.f32 %v2251, %v547
    %v2253 = vadd.f32 %v2247, %v2252
    %v2254 = vlaneseq
    %v2255 = vshrl.u32 %v2254, 7
    %v2256 = vsub.s32 6, %v2255
    %v2257 = vrot.slane %v2216, %v2256
    %v2258 = vmul.f32 %v2257, %v555
    %v2259 = vadd.f32 %v2253, %v2258
    %v2260 = vlaneseq
    %v2261 = vshrl.u32 %v2260, 7
    %v2262 = vsub.s32 7, %v2261
    %v2263 = vrot.slane %v2216, %v2262
    %v2264 = vmul.f32 %v2263, %v563
    %v2265 = vadd.f32 %v2259, %v2264
    %v2266 = vlaneseq
    %v2267 = vshrl.u32 %v2266, 7
    %v2268 = vsub.s32 0, %v2267
    %v2269 = vrot.slane %v2217, %v2268
    %v2270 = vmul.f32 %v2269, %v571
    %v2271 = vadd.f32 %v2265, %v2270
    %v2272 = vlaneseq
    %v2273 = vshrl.u32 %v2272, 7
    %v2274 = vsub.s32 1, %v2273
    %v2275 = vrot.slane %v2217, %v2274
    %v2276 = vmul.f32 %v2275, %v579
    %v2277 = vadd.f32 %v2271, %v2276
    %v2278 = vlaneseq
    %v2279 = vshrl.u32 %v2278, 7
    %v2280 = vsub.s32 2, %v2279
    %v2281 = vrot.slane %v2217, %v2280
    %v2282 = vmul.f32 %v2281, %v587
    %v2283 = vadd.f32 %v2277, %v2282
    %v2284 = vlaneseq
    %v2285 = vshrl.u32 %v2284, 7
    %v2286 = vsub.s32 3, %v2285
    %v2287 = vrot.slane %v2217, %v2286
    %v2288 = vmul.f32 %v2287, %v595
    %v2289 = vadd.f32 %v2283, %v2288
    %v2290 = vlaneseq
    %v2291 = vshrl.u32 %v2290, 7
    %v2292 = vsub.s32 4, %v2291
    %v2293 = vrot.slane %v2217, %v2292
    %v2294 = vmul.f32 %v2293, %v603
    %v2295 = vadd.f32 %v2289, %v2294
    %v2296 = vlaneseq
    %v2297 = vshrl.u32 %v2296, 7
    %v2298 = vsub.s32 5, %v2297
    %v2299 = vrot.slane %v2217, %v2298
    %v2300 = vmul.f32 %v2299, %v611
    %v2301 = vadd.f32 %v2295, %v2300
    %v2302 = vlaneseq
    %v2303 = vshrl.u32 %v2302, 7
    %v2304 = vsub.s32 6, %v2303
    %v2305 = vrot.slane %v2217, %v2304
    %v2306 = vmul.f32 %v2305, %v619
    %v2307 = vadd.f32 %v2301, %v2306
    %v2308 = vlaneseq
    %v2309 = vshrl.u32 %v2308, 7
    %v2310 = vsub.s32 7, %v2309
    %v2311 = vrot.slane %v2217, %v2310
    %v2312 = vmul.f32 %v2311, %v627
    %v2313 = vadd.f32 %v2307, %v2312
    %v2314 = vpack.c.bf16 %v753, %v633
    %v2315 = vpack.c.bf16 %v993, %v873
    %v2316 = vpack.c.bf16 %v1233, %v1113
    %v2317 = vpack.c.bf16 %v1473, %v1353
    %v2318 = vpack.c.bf16 %v1713, %v1593
    %v2319 = vpack.c.bf16 %v1953, %v1833
    %v2320 = vpack.c.bf16 %v2193, %v2073
    %v2321 = vpack.c.bf16 %v2313, %v2313
    %v2322 = vld [vmem:[%s3] sm:$0xf]
    %v2323 = vld [vmem:[%s3 + $0x4] sm:$0xf]
    %v2326 = vunpack.c.l.b16 %v2322
    %v2327 = vunpack.c.l.b16 %v2323
    %v2328 = vpack.c.b16 %v2327, %v2326
    %vm2329 = vcmask 982016
    %v2331 = vsel %vm2329, %v2328, 0
    %vm2333 = vcmask 1043456
    %v2335 = vsel %vm2333, %v2321, 0
    %2337 = vmatprep.subr.bf16.mxu0 0
    %2338 = vmatpush1.bf16.msra.mxu0 %v2314
    %2339 = vmatprep.subr.bf16.mxu0 0
    %2340 = vmatpush1.bf16.msra.mxu0 %v2315
    %2341 = vmatprep.subr.bf16.mxu0 0
    %2342 = vmatpush1.bf16.msra.mxu0 %v2316
    %2343 = vmatprep.subr.bf16.mxu0 0
    %2344 = vmatpush1.bf16.msra.mxu0 %v2317
    %2345 = vmatprep.subr.bf16.mxu0 0
    %2346 = vmatpush1.bf16.msra.mxu0 %v2318
    %2347 = vmatprep.subr.bf16.mxu0 0
    %2348 = vmatpush1.bf16.msra.mxu0 %v2319
    %2349 = vmatprep.subr.bf16.mxu0 0
    %2350 = vmatpush1.bf16.msra.mxu0 %v2320
    %2351 = vmatprep.subr.bf16.mxu0 0
    %2352 = vmatpush1.bf16.msra.mxu0 %v2335
    %2353 = vmatprep.subr.bf16.mxu0 0
    %2354 = vmatpush1.bf16.msra.mxu0 0
    %2355 = vmatprep.subr.bf16.mxu0 0
    %2356 = vmatpush1.bf16.msra.mxu0 0
    %2357 = vmatprep.subr.bf16.mxu0 0
    %2358 = vmatpush1.bf16.msra.mxu0 0
    %2359 = vmatprep.subr.bf16.mxu0 0
    %2360 = vmatpush1.bf16.msra.mxu0 0
    %2361 = vmatprep.subr.bf16.mxu0 0
    %2362 = vmatpush1.bf16.msra.mxu0 0
    %2363 = vmatprep.subr.bf16.mxu0 0
    %2364 = vmatpush1.bf16.msra.mxu0 0
    %2365 = vmatprep.subr.bf16.mxu0 0
    %2366 = vmatpush1.bf16.msra.mxu0 0
    %2367 = vmatprep.subr.bf16.mxu0 0
    %2368 = vmatpush1.bf16.msra.mxu0 0
    %2369 = vmatprep.mubr.bf16.mxu0 0
    %2370 = vmatmul.mubr.bf16.gmra.mrb[0].mxu0 %v2331
    %v2371 = vpop.f32.mrb[0].mxu0
    %v2372 = vadd.f32 0.0, %v2371
    %v2373 = vpop.f32.mrb[0].mxu0
    %v2374 = vpop.f32.mrb[0].mxu0
    %v2375 = vadd.f32 0.0, %v2374
    %v2376 = vpop.f32.mrb[0].mxu0
    %2377 = vdwg.mxu0
    %2378 = vst [vmem:[#allocation9] sm:$0xff] %v2372
    %2379 = vst [vmem:[#allocation9 + $0x8] sm:$0xff] %v2375
    // Predicated region
    $region30: #{tpu_custom_call.1} parent=1 // pred_check
      _
    $region31: #{tpu_custom_call.1} parent=1 // pred_check_branch
      %2381 = sbr.rel (0) target = $region33
    $region32: #{tpu_custom_call.1} parent=1 // pred_region
      %s2383 = ssub.s32 256, 256
      %2384 = vsyncadd [#allocation4], %s2383
      %s2385 = sshll.u32 [#allocation9], 4
      %s2386 = int_to_ptr.vmem [resolvable:$true] %s2385
      %2391 = dma.vmem_to_hbm [thread:$0]  %s2386, 256, %s4, [#allocation4], 128, 128, 8
    $region33: #{tpu_custom_call.1} parent=1 // pred_fallthru
      _
    // Predicated region
    $region34: #{tpu_custom_call.1} parent=1 // pred_check
      _
    $region35: #{tpu_custom_call.1} parent=1 // pred_check_branch
      %2393 = sbr.rel (0) target = $region37
    $region36: #{tpu_custom_call.1} parent=1 // pred_region
      %2394 = dma.done [#allocation4], 256
    $region37: #{tpu_custom_call.1} parent=1 // pred_fallthru
      _
    %2395 = vsyncpa [#allocation3], 1
    %2396 = vsyncpa [#allocation7], 1
    %2397 = vsyncpa [#allocation4], 1
    %2398 = vsyncpa [#allocation5], 1

</llo_original>
